<compile_context>
chip_gen: v7x
topology: tpu7x:2x2x1
jax: 0.10.0
libtpu: 0.0.40
codegen_flags: <defaults>
</compile_context>

<pallas_src>
import functools

import jax
import jax.numpy as jnp
from jax.experimental import pallas as pl
from jax.experimental.pallas import tpu as pltpu

IN = 784        # input / reconstruction features
H = 400         # hidden width (fc1 / fc3 output)
Z = 20          # latent width
OUT_P = 896     # recon features padded to a multiple of 128 (784 -> 896)

# Offsets of bias segments inside the packed (1, 2048) bias operand.
# Every segment start is 128-lane aligned.
B1_OFF = 0                  # fc1 bias,           length 400
B3_OFF = 512                # fc3 bias,           length 400
B2_OFF = 1024               # fc21||fc22 bias,    length 40
B4_OFF = 1152               # fc4 bias (padded),  length 896
B_ALL_LEN = 2048


def _vae_kernel(x_ref, eps_ref, w1_ref, w2x_ref, w3_ref, w4_ref, b_ref,
                recon_ref, mlv_ref):
    x = x_ref[...].astype(jnp.bfloat16)                               # (TM, 784)

    b1 = b_ref[:, B1_OFF:B1_OFF + H]                                  # (1, 400)
    b2 = b_ref[:, B2_OFF:B2_OFF + 2 * Z]                              # (1, 40)
    b3 = b_ref[:, B3_OFF:B3_OFF + H]                                  # (1, 400)
    b4 = b_ref[:, B4_OFF:B4_OFF + OUT_P]                              # (1, 896)

    # encode: h1 = relu(x @ W1 + b1)
    h1 = jnp.dot(x, w1_ref[...], preferred_element_type=jnp.float32) + b1
    h1 = jnp.maximum(h1, 0.0).astype(jnp.bfloat16)                    # (TM, 400)

    # fused mu / logvar projection (fc21 || fc22)
    mlv = jnp.dot(h1, w2x_ref[...], preferred_element_type=jnp.float32) + b2
    mu = mlv[:, :Z]                                                   # (TM, 20)
    logvar = mlv[:, Z:]                                               # (TM, 20)

    # reparametrize: z = eps * exp(0.5 * logvar) + mu
    std = jnp.exp(0.5 * logvar)
    z = (eps_ref[...] * std + mu).astype(jnp.bfloat16)                # (TM, 20)

    # decode: recon = sigmoid(relu(z @ W3 + b3) @ W4 + b4)
    h3 = jnp.dot(z, w3_ref[...], preferred_element_type=jnp.float32) + b3
    h3 = jnp.maximum(h3, 0.0).astype(jnp.bfloat16)                    # (TM, 400)
    logits = jnp.dot(h3, w4_ref[...], preferred_element_type=jnp.float32) + b4
    # sigmoid: EUP exp + approximate EUP reciprocal (no VPU divide); f32 math
    # for v5e portability, bf16 only at the store (halves recon HBM writeback).
    recon = pl.reciprocal(1.0 + jnp.exp(-logits), approx=True)
    recon_ref[...] = recon.astype(recon_ref.dtype)                    # bf16 store
    mlv_ref[...] = mlv                                                # f32 (KL quality)


def _round_up(n, m):
    return ((n + m - 1) // m) * m


@functools.partial(jax.jit, static_argnames=("tile_m",))
def vae_forward(x, eps, packed, *, tile_m=512):
    """x: (B, 784) f32 or bf16, eps: (B, 20) f32, packed: output of pack_params.

    If the upstream producer can emit x in bfloat16, pass it directly (the
    kernel casts internally); do NOT add a wrapper-side astype.
    """
    B = x.shape[0]
    # Tiling: at least 2 grid steps so the "parallel" batch axis is split
    # across both v7x TensorCores, and tm is derived from B so batch padding
    # is minimal (tight tiles rather than padding B up to a multiple of tile_m).
    n_tiles = max(2, -(-B // tile_m))          # ceil(B / tile_m), floored at 2
    tm = _round_up(-(-B // n_tiles), 8)        # rows per tile, 8-aligned
    b_pad = n_tiles * tm
    if b_pad != B:
        x = jnp.pad(x, ((0, b_pad - B), (0, 0)))
        eps = jnp.pad(eps, ((0, b_pad - B), (0, 0)))

    # VMEM footprint at tm=512: ~1.4 MB bf16 weights (x2 buffers) + ~3.2 MB x
    # tiles + ~1.8 MB bf16 recon tiles + small mlv/eps  => well under the 16 MiB
    # v5e default scoped limit, so no vmem_limit / Buffered(1) override needed.
    recon_p, mlv = pl.pallas_call(
        _vae_kernel,
        out_shape=(
            jax.ShapeDtypeStruct((b_pad, OUT_P), jnp.bfloat16),   # bf16 recon
            jax.ShapeDtypeStruct((b_pad, 2 * Z), jnp.float32),    # f32 mu||logvar
        ),
        grid=(n_tiles,),
        in_specs=[
            pl.BlockSpec((tm, IN), lambda i: (i, 0)),         # x, row-tiled
            pl.BlockSpec((tm, Z), lambda i: (i, 0)),          # eps, row-tiled
            pl.BlockSpec((IN, H), lambda i: (0, 0)),          # w1 (VMEM-resident)
            pl.BlockSpec((H, 2 * Z), lambda i: (0, 0)),       # w21 || w22
            pl.BlockSpec((Z, H), lambda i: (0, 0)),           # w3
            pl.BlockSpec((H, OUT_P), lambda i: (0, 0)),       # w4 (lane-padded)
            pl.BlockSpec((1, B_ALL_LEN), lambda i: (0, 0)),   # packed biases
        ],
        out_specs=(
            pl.BlockSpec((tm, OUT_P), lambda i: (i, 0)),      # recon (padded, bf16)
            pl.BlockSpec((tm, 2 * Z), lambda i: (i, 0)),      # mu || logvar (f32)
        ),
        compiler_params=pltpu.CompilerParams(
            dimension_semantics=("parallel",)),
    )(x, eps, packed["w1"], packed["w2x"], packed["w3"], packed["w4p"],
      packed["b_all"])

    # Un-pad on bf16 data (half the bytes of the previous f32 slice copy).
    # Consumers that can handle the padded (b_pad, 896) layout should use
    # recon_p directly and slice/mask lazily instead.
    recon = recon_p[:B, :IN]
    mu = mlv[:B, :Z]
    logvar = mlv[:B, Z:]
    return recon, mu, logvar


def _init_linear(key, fan_in, fan_out):
    """Deterministic init; weight stored as (in, out) = PyTorch weight.T."""
    kw, kb = jax.random.split(key)
    bound = 1.0 / (fan_in ** 0.5)
    w = jax.random.uniform(kw, (fan_in, fan_out), jnp.float32, -bound, bound)
    b = jax.random.uniform(kb, (fan_out,), jnp.float32, -bound, bound)
    return w, b


def make_params(key):
    keys = jax.random.split(key, 5)
    w1, b1 = _init_linear(keys[0], IN, H)
    w21, b21 = _init_linear(keys[1], H, Z)
    w22, b22 = _init_linear(keys[2], H, Z)
    w3, b3 = _init_linear(keys[3], Z, H)
    w4, b4 = _init_linear(keys[4], H, IN)
    return dict(w1=w1, b1=b1, w21=w21, b21=b21, w22=w22, b22=b22,
                w3=w3, b3=b3, w4=w4, b4=b4)


def pack_params(p):
    """Pack f32 params into the kernel's bf16 / fused / lane-padded operands."""
    w1 = p["w1"].astype(jnp.bfloat16)
    w2x = jnp.concatenate([p["w21"], p["w22"]], axis=1).astype(jnp.bfloat16)
    w3 = p["w3"].astype(jnp.bfloat16)
    w4p = (jnp.zeros((H, OUT_P), jnp.float32)
           .at[:, :IN].set(p["w4"]).astype(jnp.bfloat16))

    b_all = jnp.zeros((1, B_ALL_LEN), jnp.float32)
    b_all = b_all.at[0, B1_OFF:B1_OFF + H].set(p["b1"])
    b_all = b_all.at[0, B3_OFF:B3_OFF + H].set(p["b3"])
    b_all = b_all.at[0, B2_OFF:B2_OFF + Z].set(p["b21"])
    b_all = b_all.at[0, B2_OFF + Z:B2_OFF + 2 * Z].set(p["b22"])
    b_all = b_all.at[0, B4_OFF:B4_OFF + IN].set(p["b4"])
    return dict(w1=w1, w2x=w2x, w3=w3, w4p=w4p, b_all=b_all)


def vae_reference(x, eps, packed):
    """Pure-JAX reference using the same bf16-rounded weights as the kernel."""
    w1 = packed["w1"].astype(jnp.float32)
    w2x = packed["w2x"].astype(jnp.float32)
    w3 = packed["w3"].astype(jnp.float32)
    w4 = packed["w4p"].astype(jnp.float32)[:, :IN]
    b = packed["b_all"][0]
    b1 = b[B1_OFF:B1_OFF + H]
    b2 = b[B2_OFF:B2_OFF + 2 * Z]
    b3 = b[B3_OFF:B3_OFF + H]
    b4 = b[B4_OFF:B4_OFF + IN]

    h1 = jnp.maximum(x @ w1 + b1, 0.0)
    mlv = h1 @ w2x + b2
    mu, logvar = mlv[:, :Z], mlv[:, Z:]
    z = eps * jnp.exp(0.5 * logvar) + mu
    h3 = jnp.maximum(z @ w3 + b3, 0.0)
    recon = jax.nn.sigmoid(h3 @ w4 + b4)
    return recon, mu, logvar


if __name__ == "__main__":
    key = jax.random.PRNGKey(0)
    k_params, k_x, k_eps = jax.random.split(key, 3)

    # B=192 now maps to two tight 96-row tiles (no batch padding) and a 2-step
    # grid, so v7x megacore engages and no rows are wasted.
    B = 192
    params = make_params(k_params)
    packed = pack_params(params)
    x = jax.random.uniform(k_x, (B, IN), jnp.float32)     # MNIST-like flattened input
    eps = jax.random.normal(k_eps, (B, Z), jnp.float32)   # reparametrization noise
    # TODO(synk): eps is host-generated (torch used in-place CUDA RNG inside forward).

    recon, mu, logvar = vae_forward(x, eps, packed)
    jax.block_until_ready((recon, mu, logvar))

    # correctness check vs pure-JAX reference (bf16 weights + bf16 recon store
    # -> looser tolerance)
    r_ref, m_ref, lv_ref = vae_reference(x, eps, packed)
    assert recon.shape == (B, IN) and recon.dtype == jnp.bfloat16
    assert mu.shape == (B, Z) and logvar.shape == (B, Z)
    assert jnp.allclose(recon.astype(jnp.float32), r_ref, atol=3e-2, rtol=3e-2), \
        float(jnp.max(jnp.abs(recon.astype(jnp.float32) - r_ref)))
    assert jnp.allclose(mu, m_ref, atol=3e-2, rtol=3e-2), \
        float(jnp.max(jnp.abs(mu - m_ref)))
    assert jnp.allclose(logvar, lv_ref, atol=3e-2, rtol=3e-2), \
        float(jnp.max(jnp.abs(logvar - lv_ref)))

    print("KERNEL_OK")
</pallas_src>

<mosaic_0001>
module attributes {stable_mosaic.version = 11 : i64} {
  func.func @_vae_kernel(%arg0: i32, %arg1: memref<96x784xf32, #tpu.memory_space<vmem>>, %arg2: memref<96x20xf32, #tpu.memory_space<vmem>>, %arg3: memref<784x400xbf16, #tpu.memory_space<vmem>>, %arg4: memref<400x40xbf16, #tpu.memory_space<vmem>>, %arg5: memref<20x400xbf16, #tpu.memory_space<vmem>>, %arg6: memref<400x896xbf16, #tpu.memory_space<vmem>>, %arg7: memref<1x2048xf32, #tpu.memory_space<vmem>>, %arg8: memref<96x896xbf16, #tpu.memory_space<vmem>>, %arg9: memref<96x40xf32, #tpu.memory_space<vmem>>) attributes {dimension_semantics = [#tpu.dimension_semantics<parallel>], iteration_bounds = array<i64: 2>, scalar_prefetch = 0 : i64, scratch_operands = 0 : i64, tpu.core_type = #tpu.core_type<tc>, window_params = [{transform_indices = @transform_0, window_bounds = array<i64: 96, 784>}, {transform_indices = @transform_1, window_bounds = array<i64: 96, 20>}, {pipeline_mode = #tpu.pipeline_mode<synchronous>, transform_indices = @transform_2, window_bounds = array<i64: 784, 400>}, {pipeline_mode = #tpu.pipeline_mode<synchronous>, transform_indices = @transform_3, window_bounds = array<i64: 400, 40>}, {pipeline_mode = #tpu.pipeline_mode<synchronous>, transform_indices = @transform_4, window_bounds = array<i64: 20, 400>}, {pipeline_mode = #tpu.pipeline_mode<synchronous>, transform_indices = @transform_5, window_bounds = array<i64: 400, 896>}, {pipeline_mode = #tpu.pipeline_mode<synchronous>, transform_indices = @transform_6, window_bounds = array<i64: 1, 2048>}, {transform_indices = @transform_7, window_bounds = array<i64: 96, 896>}, {transform_indices = @transform_8, window_bounds = array<i64: 96, 40>}]} {
    %c0 = arith.constant 0 : index
    %c0_0 = arith.constant 0 : index
    %0 = vector.load %arg1[%c0, %c0_0] : memref<96x784xf32, #tpu.memory_space<vmem>>, vector<96x784xf32>
    %1 = arith.truncf %0 : vector<96x784xf32> to vector<96x784xbf16>
    %c0_1 = arith.constant 0 : index
    %c0_2 = arith.constant 0 : index
    %2 = vector.load %arg7[%c0_1, %c0_2] : memref<1x2048xf32, #tpu.memory_space<vmem>>, vector<1x400xf32>
    %c0_3 = arith.constant 0 : index
    %c1024 = arith.constant 1024 : index
    %3 = vector.load %arg7[%c0_3, %c1024] : memref<1x2048xf32, #tpu.memory_space<vmem>>, vector<1x40xf32>
    %c0_4 = arith.constant 0 : index
    %c512 = arith.constant 512 : index
    %4 = vector.load %arg7[%c0_4, %c512] : memref<1x2048xf32, #tpu.memory_space<vmem>>, vector<1x400xf32>
    %c0_5 = arith.constant 0 : index
    %c1152 = arith.constant 1152 : index
    %5 = vector.load %arg7[%c0_5, %c1152] : memref<1x2048xf32, #tpu.memory_space<vmem>>, vector<1x896xf32>
    %c0_6 = arith.constant 0 : index
    %c0_7 = arith.constant 0 : index
    %6 = vector.load %arg3[%c0_6, %c0_7] : memref<784x400xbf16, #tpu.memory_space<vmem>>, vector<784x400xbf16>
    %cst = arith.constant dense<0.000000e+00> : vector<96x400xf32>
    %7 = tpu.matmul %1, %6, %cst {dimension_numbers = #tpu.dot_dimension_numbers<[1], [0], [0], [1], [0, 0, 1, 1], [], []>} : vector<96x784xbf16>, vector<784x400xbf16>, vector<96x400xf32> -> vector<96x400xf32>
    %8 = vector.broadcast %2 : vector<1x400xf32> to vector<96x400xf32>
    %9 = arith.addf %7, %8 : vector<96x400xf32>
    %cst_8 = arith.constant 0.000000e+00 : f32
    %10 = vector.broadcast %cst_8 : f32 to vector<96x400xf32>
    %11 = arith.maximumf %9, %10 : vector<96x400xf32>
    %12 = arith.truncf %11 : vector<96x400xf32> to vector<96x400xbf16>
    %c0_9 = arith.constant 0 : index
    %c0_10 = arith.constant 0 : index
    %13 = vector.load %arg4[%c0_9, %c0_10] : memref<400x40xbf16, #tpu.memory_space<vmem>>, vector<400x40xbf16>
    %cst_11 = arith.constant dense<0.000000e+00> : vector<96x40xf32>
    %14 = tpu.matmul %12, %13, %cst_11 {dimension_numbers = #tpu.dot_dimension_numbers<[1], [0], [0], [1], [0, 0, 1, 1], [], []>} : vector<96x400xbf16>, vector<400x40xbf16>, vector<96x40xf32> -> vector<96x40xf32>
    %15 = vector.broadcast %3 : vector<1x40xf32> to vector<96x40xf32>
    %16 = arith.addf %14, %15 : vector<96x40xf32>
    %17 = vector.extract_strided_slice %16 {offsets = [0, 0], sizes = [96, 20], strides = [1, 1]} : vector<96x40xf32> to vector<96x20xf32>
    %18 = vector.extract_strided_slice %16 {offsets = [0, 20], sizes = [96, 20], strides = [1, 1]} : vector<96x40xf32> to vector<96x20xf32>
    %cst_12 = arith.constant 5.000000e-01 : f32
    %19 = vector.broadcast %cst_12 : f32 to vector<96x20xf32>
    %20 = arith.mulf %19, %18 : vector<96x20xf32>
    %21 = math.exp %20 : vector<96x20xf32>
    %c0_13 = arith.constant 0 : index
    %c0_14 = arith.constant 0 : index
    %22 = vector.load %arg2[%c0_13, %c0_14] : memref<96x20xf32, #tpu.memory_space<vmem>>, vector<96x20xf32>
    %23 = arith.mulf %22, %21 : vector<96x20xf32>
    %24 = arith.addf %23, %17 : vector<96x20xf32>
    %25 = arith.truncf %24 : vector<96x20xf32> to vector<96x20xbf16>
    %c0_15 = arith.constant 0 : index
    %c0_16 = arith.constant 0 : index
    %26 = vector.load %arg5[%c0_15, %c0_16] : memref<20x400xbf16, #tpu.memory_space<vmem>>, vector<20x400xbf16>
    %cst_17 = arith.constant dense<0.000000e+00> : vector<96x400xf32>
    %27 = tpu.matmul %25, %26, %cst_17 {dimension_numbers = #tpu.dot_dimension_numbers<[1], [0], [0], [1], [0, 0, 1, 1], [], []>} : vector<96x20xbf16>, vector<20x400xbf16>, vector<96x400xf32> -> vector<96x400xf32>
    %28 = vector.broadcast %4 : vector<1x400xf32> to vector<96x400xf32>
    %29 = arith.addf %27, %28 : vector<96x400xf32>
    %cst_18 = arith.constant 0.000000e+00 : f32
    %30 = vector.broadcast %cst_18 : f32 to vector<96x400xf32>
    %31 = arith.maximumf %29, %30 : vector<96x400xf32>
    %32 = arith.truncf %31 : vector<96x400xf32> to vector<96x400xbf16>
    %c0_19 = arith.constant 0 : index
    %c0_20 = arith.constant 0 : index
    %33 = vector.load %arg6[%c0_19, %c0_20] : memref<400x896xbf16, #tpu.memory_space<vmem>>, vector<400x896xbf16>
    %cst_21 = arith.constant dense<0.000000e+00> : vector<96x896xf32>
    %34 = tpu.matmul %32, %33, %cst_21 {dimension_numbers = #tpu.dot_dimension_numbers<[1], [0], [0], [1], [0, 0, 1, 1], [], []>} : vector<96x400xbf16>, vector<400x896xbf16>, vector<96x896xf32> -> vector<96x896xf32>
    %35 = vector.broadcast %5 : vector<1x896xf32> to vector<96x896xf32>
    %36 = arith.addf %34, %35 : vector<96x896xf32>
    %cst_22 = arith.constant 0.000000e+00 : f32
    %37 = vector.broadcast %cst_22 : f32 to vector<96x896xf32>
    %38 = arith.subf %37, %36 : vector<96x896xf32>
    %39 = math.exp %38 : vector<96x896xf32>
    %cst_23 = arith.constant 1.000000e+00 : f32
    %40 = vector.broadcast %cst_23 : f32 to vector<96x896xf32>
    %41 = arith.addf %40, %39 : vector<96x896xf32>
    %42 = tpu.reciprocal %41 {approx = true} : vector<96x896xf32> -> vector<96x896xf32>
    %43 = arith.truncf %42 : vector<96x896xf32> to vector<96x896xbf16>
    %c0_24 = arith.constant 0 : index
    %c0_25 = arith.constant 0 : index
    %44 = vector.load %arg8[%c0_24, %c0_25] : memref<96x896xbf16, #tpu.memory_space<vmem>>, vector<96x896xbf16>
    tpu.vector_store %arg8[%c0_24, %c0_25], %43 {strides = array<i32>} : memref<96x896xbf16, #tpu.memory_space<vmem>>, vector<96x896xbf16>,
    %c0_26 = arith.constant 0 : index
    %c0_27 = arith.constant 0 : index
    %45 = vector.load %arg9[%c0_26, %c0_27] : memref<96x40xf32, #tpu.memory_space<vmem>>, vector<96x40xf32>
    tpu.vector_store %arg9[%c0_26, %c0_27], %16 {strides = array<i32>} : memref<96x40xf32, #tpu.memory_space<vmem>>, vector<96x40xf32>,
    return
  }
  func.func @transform_0(%arg0: i32) -> (i32, i32) {
    %c0_i32 = arith.constant 0 : i32
    %c0_i32_0 = arith.constant 0 : i32
    return %arg0, %c0_i32 : i32, i32
  }
  func.func @transform_1(%arg0: i32) -> (i32, i32) {
    %c0_i32 = arith.constant 0 : i32
    %c0_i32_0 = arith.constant 0 : i32
    return %arg0, %c0_i32 : i32, i32
  }
  func.func @transform_2(%arg0: i32) -> (i32, i32) {
    %c0_i32 = arith.constant 0 : i32
    %c0_i32_0 = arith.constant 0 : i32
    %c0_i32_1 = arith.constant 0 : i32
    return %c0_i32, %c0_i32_0 : i32, i32
  }
  func.func @transform_3(%arg0: i32) -> (i32, i32) {
    %c0_i32 = arith.constant 0 : i32
    %c0_i32_0 = arith.constant 0 : i32
    %c0_i32_1 = arith.constant 0 : i32
    return %c0_i32, %c0_i32_0 : i32, i32
  }
  func.func @transform_4(%arg0: i32) -> (i32, i32) {
    %c0_i32 = arith.constant 0 : i32
    %c0_i32_0 = arith.constant 0 : i32
    %c0_i32_1 = arith.constant 0 : i32
    return %c0_i32, %c0_i32_0 : i32, i32
  }
  func.func @transform_5(%arg0: i32) -> (i32, i32) {
    %c0_i32 = arith.constant 0 : i32
    %c0_i32_0 = arith.constant 0 : i32
    %c0_i32_1 = arith.constant 0 : i32
    return %c0_i32, %c0_i32_0 : i32, i32
  }
  func.func @transform_6(%arg0: i32) -> (i32, i32) {
    %c0_i32 = arith.constant 0 : i32
    %c0_i32_0 = arith.constant 0 : i32
    %c0_i32_1 = arith.constant 0 : i32
    return %c0_i32, %c0_i32_0 : i32, i32
  }
  func.func @transform_7(%arg0: i32) -> (i32, i32) {
    %c0_i32 = arith.constant 0 : i32
    %c0_i32_0 = arith.constant 0 : i32
    return %arg0, %c0_i32 : i32, i32
  }
  func.func @transform_8(%arg0: i32) -> (i32, i32) {
    %c0_i32 = arith.constant 0 : i32
    %c0_i32_0 = arith.constant 0 : i32
    return %arg0, %c0_i32 : i32, i32
  }
}

</mosaic_0001>

<llo_original>
// kernel: vae_forward.1
$region0: #{vae_forward.1}
  #allocation0 [shape = 'u32[]', space=smem, size = 0x4, offset = 0x4, fixed_abs, tag = 'smem constant byte address 0x4 - core index']
  #allocation1 [shape = 'u32[144,128]{1,0:T(1,128)}', space=vmem, size = 0x12000, scoped, tag = 'internal scratch']
  %s0 = inlined_call_operand.vmem [shape: f32[192,784], index: 0, kind: input, shape index: {}]
  %s1 = inlined_call_operand.vmem [shape: f32[192,20], index: 1, kind: input, shape index: {}]
  %s2 = inlined_call_operand.vmem [shape: bf16[784,400], index: 2, kind: input, shape index: {}]
  %s3 = inlined_call_operand.vmem [shape: bf16[400,40], index: 3, kind: input, shape index: {}]
  %s4 = inlined_call_operand.vmem [shape: bf16[20,400], index: 4, kind: input, shape index: {}]
  %s5 = inlined_call_operand.vmem [shape: bf16[400,896], index: 5, kind: input, shape index: {}]
  %s6 = inlined_call_operand.vmem [shape: f32[1,2048], index: 6, kind: input, shape index: {}]
  %s7 = inlined_call_operand.hbm [shape: bf16[192,896], index: 7, kind: output, shape index: {0}]
  %s8 = inlined_call_operand.vmem [shape: f32[192,40], index: 8, kind: output, shape index: {1}]
  %9 = xla_tuple %s7, %s8
  %s10 = sld [smem:[#allocation0]]
  $region69: #{vae_forward.1} parent=0
    _
  %s12 = ssub.s32 1, %s10
  %s13 = scalar_select 0, %s12, %s10
  $region1: #{vae_forward.1} parent=0
    #allocation2 [shape = 'u8[344064]{0}', space=vmem, size = 0x54000, scoped, tag = 'output window, operand 0']
    #allocation3 [shape = 's32[2]{0}', space=sflag, size = 0x8, scoped, tag = 'scoped memory for vae_forward.1']
    %14 = vsyncpa [#allocation3], 0
    %s15 = scalar_lea.sflag [#allocation3], 1
    %16 = vsyncpa %s15, 0
    loop: start=0, step=1, limit=4
    $region2: #{vae_forward.1} parent=1 // loop_pre_header
      _
    $region3: #{vae_forward.1} parent=1 // loop_header
      %s18 = sphi 0, %s22
      %p19 = scmp.ge.s32.totalorder %s18, 4
      %s28 = sphi 0, %s30
      %s31 = sphi 0, %s28
      %s32 = sphi 0, %s31
      %s48 = sphi 0, %s32
      %s54 = sphi 0, %s56
      %s57 = sphi 0, %s54
      %s58 = sphi 0, %s57
      %s74 = sphi 0, %s58
      %s78 = sphi 0, %s78
      %s80 = sphi 0, %s78
      %s81 = sphi 0, %s80
      %s95 = sphi 0, %s81
      %s99 = sphi 0, %s99
      %s101 = sphi 0, %s99
      %s102 = sphi 0, %s101
      %s116 = sphi 0, %s102
      %s120 = sphi 0, %s120
      %s122 = sphi 0, %s120
      %s123 = sphi 0, %s122
      %s137 = sphi 0, %s123
      %s141 = sphi 0, %s141
      %s143 = sphi 0, %s141
      %s144 = sphi 0, %s143
      %s158 = sphi 0, %s144
      %s162 = sphi 0, %s162
      %s164 = sphi 0, %s162
      %s165 = sphi 0, %s164
      %s179 = sphi 0, %s165
      %s185 = sphi 0, %s187
      %s188 = sphi 0, %s185
      %s189 = sphi 0, %s188
      %s205 = sphi 0, %s189
      %s211 = sphi 0, %s213
      %s214 = sphi 0, %s211
      %s215 = sphi 0, %s214
      %s231 = sphi 0, %s215
    $region4: #{vae_forward.1} parent=1 // loop_header_branch
      %21 = sbr.rel (%p19) target = $region8
    $region5: #{vae_forward.1} parent=1 // loop_body
      %s23 = ssub.s32 %s18, 1
      %s24 = ssub.s32 %s18, 2
      %s25 = sadd.s32 %s18, 1
      %s26 = ssub.s32 %s18, %s25
      %p27 = scmp.eq.s32.totalorder %s26, 0
      %s29 = sadd.s32 %s28, 1
      %s30 = scalar_select %p27, %s28, %s29
      %p33 = pneg %p27
      %p34 = scmp.eq.s32.totalorder %s18, 1
      %p35 = por %p33, %p34
      %p36 = scmp.ne.s32.totalorder %s28, %s31
      %p37 = scmp.eq.s32.totalorder %s18, 0
      %p38 = por %p36, %p37
      %p39 = scmp.ne.s32.totalorder %s28, %s31
      %p40 = scmp.eq.s32.totalorder %s23, 1
      %p41 = por %p39, %p40
      %p42 = scmp.ne.s32.totalorder %s31, %s32
      %p43 = scmp.eq.s32.totalorder %s23, 0
      %p44 = por %p42, %p43
      %p45 = scmp.ne.s32.totalorder %s31, %s32
      %p46 = scmp.eq.s32.totalorder %s24, 1
      %p47 = por %p45, %p46
      %p49 = scmp.ne.s32.totalorder %s32, %s48
      %p50 = scmp.eq.s32.totalorder %s24, 0
      %p51 = por %p49, %p50
      %s52 = ssub.s32 %s18, %s25
      %p53 = scmp.eq.s32.totalorder %s52, 0
      %s55 = sadd.s32 %s54, 1
      %s56 = scalar_select %p53, %s54, %s55
      %p59 = pneg %p53
      %p60 = scmp.eq.s32.totalorder %s18, 1
      %p61 = por %p59, %p60
      %p62 = scmp.ne.s32.totalorder %s54, %s57
      %p63 = scmp.eq.s32.totalorder %s18, 0
      %p64 = por %p62, %p63
      %p65 = scmp.ne.s32.totalorder %s54, %s57
      %p66 = scmp.eq.s32.totalorder %s23, 1
      %p67 = por %p65, %p66
      %p68 = scmp.ne.s32.totalorder %s57, %s58
      %p69 = scmp.eq.s32.totalorder %s23, 0
      %p70 = por %p68, %p69
      %p71 = scmp.ne.s32.totalorder %s57, %s58
      %p72 = scmp.eq.s32.totalorder %s24, 1
      %p73 = por %p71, %p72
      %p75 = scmp.ne.s32.totalorder %s58, %s74
      %p76 = scmp.eq.s32.totalorder %s24, 0
      %p77 = por %p75, %p76
      %s79 = sadd.s32 %s78, 1
      %p82 = scmp.eq.s32.totalorder %s18, 1
      %p83 = scmp.ne.s32.totalorder %s78, %s80
      %p84 = scmp.eq.s32.totalorder %s18, 0
      %p85 = por %p83, %p84
      %p86 = scmp.ne.s32.totalorder %s78, %s80
      %p87 = scmp.eq.s32.totalorder %s23, 1
      %p88 = por %p86, %p87
      %p89 = scmp.ne.s32.totalorder %s80, %s81
      %p90 = scmp.eq.s32.totalorder %s23, 0
      %p91 = por %p89, %p90
      %p92 = scmp.ne.s32.totalorder %s80, %s81
      %p93 = scmp.eq.s32.totalorder %s24, 1
      %p94 = por %p92, %p93
      %p96 = scmp.ne.s32.totalorder %s81, %s95
      %p97 = scmp.eq.s32.totalorder %s24, 0
      %p98 = por %p96, %p97
      %s100 = sadd.s32 %s99, 1
      %p103 = scmp.eq.s32.totalorder %s18, 1
      %p104 = scmp.ne.s32.totalorder %s99, %s101
      %p105 = scmp.eq.s32.totalorder %s18, 0
      %p106 = por %p104, %p105
      %p107 = scmp.ne.s32.totalorder %s99, %s101
      %p108 = scmp.eq.s32.totalorder %s23, 1
      %p109 = por %p107, %p108
      %p110 = scmp.ne.s32.totalorder %s101, %s102
      %p111 = scmp.eq.s32.totalorder %s23, 0
      %p112 = por %p110, %p111
      %p113 = scmp.ne.s32.totalorder %s101, %s102
      %p114 = scmp.eq.s32.totalorder %s24, 1
      %p115 = por %p113, %p114
      %p117 = scmp.ne.s32.totalorder %s102, %s116
      %p118 = scmp.eq.s32.totalorder %s24, 0
      %p119 = por %p117, %p118
      %s121 = sadd.s32 %s120, 1
      %p124 = scmp.eq.s32.totalorder %s18, 1
      %p125 = scmp.ne.s32.totalorder %s120, %s122
      %p126 = scmp.eq.s32.totalorder %s18, 0
      %p127 = por %p125, %p126
      %p128 = scmp.ne.s32.totalorder %s120, %s122
      %p129 = scmp.eq.s32.totalorder %s23, 1
      %p130 = por %p128, %p129
      %p131 = scmp.ne.s32.totalorder %s122, %s123
      %p132 = scmp.eq.s32.totalorder %s23, 0
      %p133 = por %p131, %p132
      %p134 = scmp.ne.s32.totalorder %s122, %s123
      %p135 = scmp.eq.s32.totalorder %s24, 1
      %p136 = por %p134, %p135
      %p138 = scmp.ne.s32.totalorder %s123, %s137
      %p139 = scmp.eq.s32.totalorder %s24, 0
      %p140 = por %p138, %p139
      %s142 = sadd.s32 %s141, 1
      %p145 = scmp.eq.s32.totalorder %s18, 1
      %p146 = scmp.ne.s32.totalorder %s141, %s143
      %p147 = scmp.eq.s32.totalorder %s18, 0
      %p148 = por %p146, %p147
      %p149 = scmp.ne.s32.totalorder %s141, %s143
      %p150 = scmp.eq.s32.totalorder %s23, 1
      %p151 = por %p149, %p150
      %p152 = scmp.ne.s32.totalorder %s143, %s144
      %p153 = scmp.eq.s32.totalorder %s23, 0
      %p154 = por %p152, %p153
      %p155 = scmp.ne.s32.totalorder %s143, %s144
      %p156 = scmp.eq.s32.totalorder %s24, 1
      %p157 = por %p155, %p156
      %p159 = scmp.ne.s32.totalorder %s144, %s158
      %p160 = scmp.eq.s32.totalorder %s24, 0
      %p161 = por %p159, %p160
      %s163 = sadd.s32 %s162, 1
      %p166 = scmp.eq.s32.totalorder %s18, 1
      %p167 = scmp.ne.s32.totalorder %s162, %s164
      %p168 = scmp.eq.s32.totalorder %s18, 0
      %p169 = por %p167, %p168
      %p170 = scmp.ne.s32.totalorder %s162, %s164
      %p171 = scmp.eq.s32.totalorder %s23, 1
      %p172 = por %p170, %p171
      %p173 = scmp.ne.s32.totalorder %s164, %s165
      %p174 = scmp.eq.s32.totalorder %s23, 0
      %p175 = por %p173, %p174
      %p176 = scmp.ne.s32.totalorder %s164, %s165
      %p177 = scmp.eq.s32.totalorder %s24, 1
      %p178 = por %p176, %p177
      %p180 = scmp.ne.s32.totalorder %s165, %s179
      %p181 = scmp.eq.s32.totalorder %s24, 0
      %p182 = por %p180, %p181
      %s183 = ssub.s32 %s18, %s25
      %p184 = scmp.eq.s32.totalorder %s183, 0
      %s186 = sadd.s32 %s185, 1
      %s187 = scalar_select %p184, %s185, %s186
      %p190 = pneg %p184
      %p191 = scmp.eq.s32.totalorder %s18, 1
      %p192 = por %p190, %p191
      %p193 = scmp.ne.s32.totalorder %s185, %s188
      %p194 = scmp.eq.s32.totalorder %s18, 0
      %p195 = por %p193, %p194
      %p196 = scmp.ne.s32.totalorder %s185, %s188
      %p197 = scmp.eq.s32.totalorder %s23, 1
      %p198 = por %p196, %p197
      %p199 = scmp.ne.s32.totalorder %s188, %s189
      %p200 = scmp.eq.s32.totalorder %s23, 0
      %p201 = por %p199, %p200
      %p202 = scmp.ne.s32.totalorder %s188, %s189
      %p203 = scmp.eq.s32.totalorder %s24, 1
      %p204 = por %p202, %p203
      %p206 = scmp.ne.s32.totalorder %s189, %s205
      %p207 = scmp.eq.s32.totalorder %s24, 0
      %p208 = por %p206, %p207
      %s209 = ssub.s32 %s18, %s25
      %p210 = scmp.eq.s32.totalorder %s209, 0
      %s212 = sadd.s32 %s211, 1
      %s213 = scalar_select %p210, %s211, %s212
      %p216 = pneg %p210
      %p217 = scmp.eq.s32.totalorder %s18, 1
      %p218 = por %p216, %p217
      %p219 = scmp.ne.s32.totalorder %s211, %s214
      %p220 = scmp.eq.s32.totalorder %s18, 0
      %p221 = por %p219, %p220
      %p222 = scmp.ne.s32.totalorder %s211, %s214
      %p223 = scmp.eq.s32.totalorder %s23, 1
      %p224 = por %p222, %p223
      %p225 = scmp.ne.s32.totalorder %s214, %s215
      %p226 = scmp.eq.s32.totalorder %s23, 0
      %p227 = por %p225, %p226
      %p228 = scmp.ne.s32.totalorder %s214, %s215
      %p229 = scmp.eq.s32.totalorder %s24, 1
      %p230 = por %p228, %p229
      %p232 = scmp.ne.s32.totalorder %s215, %s231
      %p233 = scmp.eq.s32.totalorder %s24, 0
      %p234 = por %p232, %p233
      %p235 = scmp.le.s32.totalorder 1, %s18
      %p236 = scmp.lt.s32.totalorder %s18, 3
      %p237 = pnand %p235, %p236
      %p238 = pneg %p237
      // Predicated region
      $region9: #{vae_forward.1} parent=5 // pred_check
        _
      $region10: #{vae_forward.1} parent=5 // pred_check_branch
        %240 = sbr.rel (%p237) target = $region12
      $region11: #{vae_forward.1} parent=5 // pred_region
        %s241 = ssub.s32 %s18, 1
        // Predicated region
        $region13: #{vae_forward.1} parent=11 // pred_check
          %p242 = pneg %p91
        $region14: #{vae_forward.1} parent=11 // pred_check_branch
          %244 = sbr.rel (%p242) target = $region16
        $region15: #{vae_forward.1} parent=11 // pred_region
          _
        $region16: #{vae_forward.1} parent=11 // pred_fallthru
          _
        // Predicated region
        $region17: #{vae_forward.1} parent=11 // pred_check
          %p245 = pneg %p112
        $region18: #{vae_forward.1} parent=11 // pred_check_branch
          %247 = sbr.rel (%p245) target = $region20
        $region19: #{vae_forward.1} parent=11 // pred_region
          _
        $region20: #{vae_forward.1} parent=11 // pred_fallthru
          _
        // Predicated region
        $region21: #{vae_forward.1} parent=11 // pred_check
          %p248 = pneg %p133
        $region22: #{vae_forward.1} parent=11 // pred_check_branch
          %250 = sbr.rel (%p248) target = $region24
        $region23: #{vae_forward.1} parent=11 // pred_region
          _
        $region24: #{vae_forward.1} parent=11 // pred_fallthru
          _
        // Predicated region
        $region25: #{vae_forward.1} parent=11 // pred_check
          %p251 = pneg %p154
        $region26: #{vae_forward.1} parent=11 // pred_check_branch
          %253 = sbr.rel (%p251) target = $region28
        $region27: #{vae_forward.1} parent=11 // pred_region
          _
        $region28: #{vae_forward.1} parent=11 // pred_fallthru
          _
        // Predicated region
        $region29: #{vae_forward.1} parent=11 // pred_check
          %p254 = pneg %p175
        $region30: #{vae_forward.1} parent=11 // pred_check_branch
          %256 = sbr.rel (%p254) target = $region32
        $region31: #{vae_forward.1} parent=11 // pred_region
          _
        $region32: #{vae_forward.1} parent=11 // pred_fallthru
          _
      $region12: #{vae_forward.1} parent=5 // pred_fallthru
        _
      %p257 = scmp.lt.s32.totalorder %s18, 2
      // Predicated region
      $region33: #{vae_forward.1} parent=5 // pred_check
        %p258 = pneg %p257
      $region34: #{vae_forward.1} parent=5 // pred_check_branch
        %260 = sbr.rel (%p258) target = $region36
      $region35: #{vae_forward.1} parent=5 // pred_region
        // Predicated region
        $region37: #{vae_forward.1} parent=35 // pred_check
          %p261 = pneg %p38
        $region38: #{vae_forward.1} parent=35 // pred_check_branch
          %263 = sbr.rel (%p261) target = $region40
        $region39: #{vae_forward.1} parent=35 // pred_region
          %s264 = smul.u32 12, %s18
          %p265 = scmp.lt.s32.totalorder %s264, 23
          %s266 = scalar_select %p265, %s264, 23
          %s267 = smul.addr %s266, 7
          %s268 = smul.addr %s267, 8
          %s269 = scalar_lea.vmem %s0, %s268
          %s270 = smul.u32 12, %s18
        $region40: #{vae_forward.1} parent=35 // pred_fallthru
          _
        // Predicated region
        $region41: #{vae_forward.1} parent=35 // pred_check
          %p271 = pneg %p64
        $region42: #{vae_forward.1} parent=35 // pred_check_branch
          %273 = sbr.rel (%p271) target = $region44
        $region43: #{vae_forward.1} parent=35 // pred_region
          %s274 = smul.u32 12, %s18
          %p275 = scmp.lt.s32.totalorder %s274, 23
          %s276 = scalar_select %p275, %s274, 23
          %s277 = smul.addr %s276, 8
          %s278 = scalar_lea.vmem %s1, %s277
          %s279 = smul.u32 12, %s18
        $region44: #{vae_forward.1} parent=35 // pred_fallthru
          _
      $region36: #{vae_forward.1} parent=5 // pred_fallthru
        _
      %p280 = scmp.le.s32.totalorder 1, %s18
      %p281 = scmp.lt.s32.totalorder %s18, 3
      %p282 = pnand %p280, %p281
      %p283 = pneg %p282
      // Predicated region
      $region45: #{vae_forward.1} parent=5 // pred_check
        _
      $region46: #{vae_forward.1} parent=5 // pred_check_branch
        %285 = sbr.rel (%p282) target = $region48
      $region47: #{vae_forward.1} parent=5 // pred_region
        %s286 = ssub.s32 %s18, 1
        %s287 = smul.u32 12, %s23
        %p288 = scmp.lt.s32.totalorder %s287, 23
        %s289 = scalar_select %p288, %s287, 23
        %s290 = smul.addr %s289, 7
        %s291 = smul.addr %s290, 8
        %s292 = scalar_lea.vmem %s0, %s291
        %p293 = pneg %p44
        %p294 = pneg %p41
        %s295 = smul.u32 12, %s23
        %p296 = scmp.lt.s32.totalorder %s295, 23
        %s297 = scalar_select %p296, %s295, 23
        %s298 = smul.addr %s297, 8
        %s299 = scalar_lea.vmem %s1, %s298
        %p300 = pneg %p70
        %p301 = pneg %p67
        %p302 = pneg %p91
        %p303 = pneg %p88
        %p304 = pneg %p112
        %p305 = pneg %p109
        %p306 = pneg %p133
        %p307 = pneg %p130
        %p308 = pneg %p154
        %p309 = pneg %p151
        %p310 = pneg %p175
        %p311 = pneg %p172
        %p312 = pneg %p201
        %p313 = pneg %p198
        %s314 = sand.u32 %s188, 1
        %s315 = scalar_lea.sflag [#allocation3], %s314
        %s316 = sand.u32 %s188, 1
        %s317 = smul.addr %s316, 336
        %s318 = scalar_lea.vmem [#allocation2], %s317
        %p319 = pneg %p227
        %p320 = pneg %p224
        %s321 = smul.u32 12, %s23
        %p322 = scmp.lt.s32.totalorder %s321, 23
        %s323 = scalar_select %p322, %s321, 23
        %s324 = smul.addr %s323, 8
        %s325 = scalar_lea.vmem %s8, %s324
        %s326 = smul.u32 12, %s23
        %p327 = scmp.lt.s32.totalorder %s326, 23
        %s328 = scalar_select %p327, %s326, 23
        %s329 = smul.addr %s328, 7
        %s330 = smul.addr %s329, 8
        %s331 = scalar_lea.vmem %s0, %s330
        %s332 = smul.u32 12, %s23
        %s333 = smul.u32 12, %s23
        %p334 = scmp.lt.s32.totalorder %s333, 23
        %s335 = scalar_select %p334, %s333, 23
        %s336 = smul.addr %s335, 8
        %s337 = scalar_lea.vmem %s1, %s336
        %s338 = smul.u32 12, %s23
        %s339 = smul.u32 12, %s23
        %s340 = smul.u32 12, %s23
        %p341 = scmp.lt.s32.totalorder %s340, 23
        %s342 = scalar_select %p341, %s340, 23
        %s343 = smul.addr %s342, 8
        %s344 = scalar_lea.vmem %s8, %s343
        %s345 = smul.u32 12, %s23
        %v347 = vld [vmem:[%s331] sm:$0xff]
        %v348 = vld [vmem:[%s331 + $0x8] sm:$0xff]
        %v349 = vld [vmem:[%s331 + $0x10] sm:$0xff]
        %v350 = vld [vmem:[%s331 + $0x18] sm:$0xff]
        %v351 = vld [vmem:[%s331 + $0x20] sm:$0xff]
        %v352 = vld [vmem:[%s331 + $0x28] sm:$0xff]
        %v353 = vld [vmem:[%s331 + $0x30] sm:$0xff]
        %v354 = vld [vmem:[%s331 + $0x38] sm:$0xff]
        %v355 = vld [vmem:[%s331 + $0x40] sm:$0xff]
        %v356 = vld [vmem:[%s331 + $0x48] sm:$0xff]
        %v357 = vld [vmem:[%s331 + $0x50] sm:$0xff]
        %v358 = vld [vmem:[%s331 + $0x58] sm:$0xff]
        %v359 = vld [vmem:[%s331 + $0x60] sm:$0xff]
        %v360 = vld [vmem:[%s331 + $0x68] sm:$0xff]
        %v361 = vld [vmem:[%s331 + $0x70] sm:$0xff]
        %v362 = vld [vmem:[%s331 + $0x78] sm:$0xff]
        %v363 = vld [vmem:[%s331 + $0x80] sm:$0xff]
        %v364 = vld [vmem:[%s331 + $0x88] sm:$0xff]
        %v365 = vld [vmem:[%s331 + $0x90] sm:$0xff]
        %v366 = vld [vmem:[%s331 + $0x98] sm:$0xff]
        %v367 = vld [vmem:[%s331 + $0xa0] sm:$0xff]
        %v368 = vld [vmem:[%s331 + $0xa8] sm:$0xff]
        %v369 = vld [vmem:[%s331 + $0xb0] sm:$0xff]
        %v370 = vld [vmem:[%s331 + $0xb8] sm:$0xff]
        %v371 = vld [vmem:[%s331 + $0xc0] sm:$0xff]
        %v372 = vld [vmem:[%s331 + $0xc8] sm:$0xff]
        %v373 = vld [vmem:[%s331 + $0xd0] sm:$0xff]
        %v374 = vld [vmem:[%s331 + $0xd8] sm:$0xff]
        %v375 = vld [vmem:[%s331 + $0xe0] sm:$0xff]
        %v376 = vld [vmem:[%s331 + $0xe8] sm:$0xff]
        %v377 = vld [vmem:[%s331 + $0xf0] sm:$0xff]
        %v378 = vld [vmem:[%s331 + $0xf8] sm:$0xff]
        %v379 = vld [vmem:[%s331 + $0x100] sm:$0xff]
        %v380 = vld [vmem:[%s331 + $0x108] sm:$0xff]
        %v381 = vld [vmem:[%s331 + $0x110] sm:$0xff]
        %v382 = vld [vmem:[%s331 + $0x118] sm:$0xff]
        %v383 = vld [vmem:[%s331 + $0x120] sm:$0xff]
        %v384 = vld [vmem:[%s331 + $0x128] sm:$0xff]
        %v385 = vld [vmem:[%s331 + $0x130] sm:$0xff]
        %v386 = vld [vmem:[%s331 + $0x138] sm:$0xff]
        %v387 = vld [vmem:[%s331 + $0x140] sm:$0xff]
        %v388 = vld [vmem:[%s331 + $0x148] sm:$0xff]
        %v389 = vld [vmem:[%s331 + $0x150] sm:$0xff]
        %v390 = vld [vmem:[%s331 + $0x158] sm:$0xff]
        %v391 = vld [vmem:[%s331 + $0x160] sm:$0xff]
        %v392 = vld [vmem:[%s331 + $0x168] sm:$0xff]
        %v393 = vld [vmem:[%s331 + $0x170] sm:$0xff]
        %v394 = vld [vmem:[%s331 + $0x178] sm:$0xff]
        %v395 = vld [vmem:[%s331 + $0x180] sm:$0xff]
        %v396 = vld [vmem:[%s331 + $0x188] sm:$0xff]
        %v397 = vld [vmem:[%s331 + $0x190] sm:$0xff]
        %v398 = vld [vmem:[%s331 + $0x198] sm:$0xff]
        %v399 = vld [vmem:[%s331 + $0x1a0] sm:$0xff]
        %v400 = vld [vmem:[%s331 + $0x1a8] sm:$0xff]
        %v401 = vld [vmem:[%s331 + $0x1b0] sm:$0xff]
        %v402 = vld [vmem:[%s331 + $0x1b8] sm:$0xff]
        %v403 = vld [vmem:[%s331 + $0x1c0] sm:$0xff]
        %v404 = vld [vmem:[%s331 + $0x1c8] sm:$0xff]
        %v405 = vld [vmem:[%s331 + $0x1d0] sm:$0xff]
        %v406 = vld [vmem:[%s331 + $0x1d8] sm:$0xff]
        %v407 = vld [vmem:[%s331 + $0x1e0] sm:$0xff]
        %v408 = vld [vmem:[%s331 + $0x1e8] sm:$0xff]
        %v409 = vld [vmem:[%s331 + $0x1f0] sm:$0xff]
        %v410 = vld [vmem:[%s331 + $0x1f8] sm:$0xff]
        %v411 = vld [vmem:[%s331 + $0x200] sm:$0xff]
        %v412 = vld [vmem:[%s331 + $0x208] sm:$0xff]
        %v413 = vld [vmem:[%s331 + $0x210] sm:$0xff]
        %v414 = vld [vmem:[%s331 + $0x218] sm:$0xff]
        %v415 = vld [vmem:[%s331 + $0x220] sm:$0xff]
        %v416 = vld [vmem:[%s331 + $0x228] sm:$0xff]
        %v417 = vld [vmem:[%s331 + $0x230] sm:$0xff]
        %v418 = vld [vmem:[%s331 + $0x238] sm:$0xff]
        %v419 = vld [vmem:[%s331 + $0x240] sm:$0xff]
        %v420 = vld [vmem:[%s331 + $0x248] sm:$0xff]
        %v421 = vld [vmem:[%s331 + $0x250] sm:$0xff]
        %v422 = vld [vmem:[%s331 + $0x258] sm:$0xff]
        %v423 = vld [vmem:[%s331 + $0x260] sm:$0xff]
        %v424 = vld [vmem:[%s331 + $0x268] sm:$0xff]
        %v425 = vld [vmem:[%s331 + $0x270] sm:$0xff]
        %v426 = vld [vmem:[%s331 + $0x278] sm:$0xff]
        %v427 = vld [vmem:[%s331 + $0x280] sm:$0xff]
        %v428 = vld [vmem:[%s331 + $0x288] sm:$0xff]
        %v429 = vld [vmem:[%s331 + $0x290] sm:$0xff]
        %v430 = vld [vmem:[%s331 + $0x298] sm:$0xff]
        %v431 = vpack.c.bf16 %v354, %v347
        %v432 = vpack.c.bf16 %v355, %v348
        %v433 = vpack.c.bf16 %v356, %v349
        %v434 = vpack.c.bf16 %v357, %v350
        %v435 = vpack.c.bf16 %v358, %v351
        %v436 = vpack.c.bf16 %v359, %v352
        %v437 = vpack.c.bf16 %v360, %v353
        %v438 = vpack.c.bf16 %v368, %v361
        %v439 = vpack.c.bf16 %v369, %v362
        %v440 = vpack.c.bf16 %v370, %v363
        %v441 = vpack.c.bf16 %v371, %v364
        %v442 = vpack.c.bf16 %v372, %v365
        %v443 = vpack.c.bf16 %v373, %v366
        %v444 = vpack.c.bf16 %v374, %v367
        %v445 = vpack.c.bf16 %v382, %v375
        %v446 = vpack.c.bf16 %v383, %v376
        %v447 = vpack.c.bf16 %v384, %v377
        %v448 = vpack.c.bf16 %v385, %v378
        %v449 = vpack.c.bf16 %v386, %v379
        %v450 = vpack.c.bf16 %v387, %v380
        %v451 = vpack.c.bf16 %v388, %v381
        %v452 = vpack.c.bf16 %v396, %v389
        %v453 = vpack.c.bf16 %v397, %v390
        %v454 = vpack.c.bf16 %v398, %v391
        %v455 = vpack.c.bf16 %v399, %v392
        %v456 = vpack.c.bf16 %v400, %v393
        %v457 = vpack.c.bf16 %v401, %v394
        %v458 = vpack.c.bf16 %v402, %v395
        %v459 = vpack.c.bf16 %v410, %v403
        %v460 = vpack.c.bf16 %v411, %v404
        %v461 = vpack.c.bf16 %v412, %v405
        %v462 = vpack.c.bf16 %v413, %v406
        %v463 = vpack.c.bf16 %v414, %v407
        %v464 = vpack.c.bf16 %v415, %v408
        %v465 = vpack.c.bf16 %v416, %v409
        %v466 = vpack.c.bf16 %v424, %v417
        %v467 = vpack.c.bf16 %v425, %v418
        %v468 = vpack.c.bf16 %v426, %v419
        %v469 = vpack.c.bf16 %v427, %v420
        %v470 = vpack.c.bf16 %v428, %v421
        %v471 = vpack.c.bf16 %v429, %v422
        %v472 = vpack.c.bf16 %v430, %v423
        %v473 = vld [vmem:[%s6] sm:$0xf]
        %v474 = vld [vmem:[%s6 + $0x8] sm:$0x1]
        %v475 = vld [vmem:[%s6 + $0x4] sm:$0xf]
        %v476 = vld [vmem:[%s6 + $0x9] sm:$0xff]
        %v477 = vld [vmem:[%s2] sm:$0xff]
        %v478 = vld [vmem:[%s2 + $0x8] sm:$0xff]
        %v479 = vld [vmem:[%s2 + $0x10] sm:$0xff]
        %v480 = vld [vmem:[%s2 + $0x18] sm:$0xff]
        %v481 = vld [vmem:[%s2 + $0x20] sm:$0xff]
        %v482 = vld [vmem:[%s2 + $0x28] sm:$0xff]
        %v483 = vld [vmem:[%s2 + $0x30] sm:$0xff]
        %v484 = vld [vmem:[%s2 + $0x38] sm:$0xff]
        %v485 = vld [vmem:[%s2 + $0x40] sm:$0xff]
        %v486 = vld [vmem:[%s2 + $0x48] sm:$0xff]
        %v487 = vld [vmem:[%s2 + $0x50] sm:$0xff]
        %v488 = vld [vmem:[%s2 + $0x58] sm:$0xff]
        %v489 = vld [vmem:[%s2 + $0x60] sm:$0xff]
        %v490 = vld [vmem:[%s2 + $0x68] sm:$0xff]
        %v491 = vld [vmem:[%s2 + $0x70] sm:$0xff]
        %v492 = vld [vmem:[%s2 + $0x78] sm:$0xff]
        %v493 = vld [vmem:[%s2 + $0x80] sm:$0xff]
        %v494 = vld [vmem:[%s2 + $0x88] sm:$0xff]
        %v495 = vld [vmem:[%s2 + $0x90] sm:$0xff]
        %v496 = vld [vmem:[%s2 + $0x98] sm:$0xff]
        %v497 = vld [vmem:[%s2 + $0xa0] sm:$0xff]
        %v498 = vld [vmem:[%s2 + $0xa8] sm:$0xff]
        %v499 = vld [vmem:[%s2 + $0xb0] sm:$0xff]
        %v500 = vld [vmem:[%s2 + $0xb8] sm:$0xff]
        %v501 = vld [vmem:[%s2 + $0xc0] sm:$0xff]
        %v502 = vld [vmem:[%s2 + $0xc8] sm:$0xff]
        %v503 = vld [vmem:[%s2 + $0xd0] sm:$0xff]
        %v504 = vld [vmem:[%s2 + $0xd8] sm:$0xff]
        %v505 = vld [vmem:[%s2 + $0xe0] sm:$0xff]
        %v506 = vld [vmem:[%s2 + $0xe8] sm:$0xff]
        %v507 = vld [vmem:[%s2 + $0xf0] sm:$0xff]
        %v508 = vld [vmem:[%s2 + $0xf8] sm:$0xff]
        %v509 = vld [vmem:[%s2 + $0x100] sm:$0xff]
        %v510 = vld [vmem:[%s2 + $0x108] sm:$0xff]
        %v511 = vld [vmem:[%s2 + $0x110] sm:$0xff]
        %v512 = vld [vmem:[%s2 + $0x118] sm:$0xff]
        %v513 = vld [vmem:[%s2 + $0x120] sm:$0xff]
        %v514 = vld [vmem:[%s2 + $0x128] sm:$0xff]
        %v515 = vld [vmem:[%s2 + $0x130] sm:$0xff]
        %v516 = vld [vmem:[%s2 + $0x138] sm:$0xff]
        %v517 = vld [vmem:[%s2 + $0x140] sm:$0xff]
        %v518 = vld [vmem:[%s2 + $0x148] sm:$0xff]
        %v519 = vld [vmem:[%s2 + $0x150] sm:$0xff]
        %v520 = vld [vmem:[%s2 + $0x158] sm:$0xff]
        %v521 = vld [vmem:[%s2 + $0x160] sm:$0xff]
        %v522 = vld [vmem:[%s2 + $0x168] sm:$0xff]
        %v523 = vld [vmem:[%s2 + $0x170] sm:$0xff]
        %v524 = vld [vmem:[%s2 + $0x178] sm:$0xff]
        %v525 = vld [vmem:[%s2 + $0x180] sm:$0xff]
        %v526 = vld [vmem:[%s2 + $0x188] sm:$0xff]
        %v527 = vld [vmem:[%s2 + $0x190] sm:$0xff]
        %v528 = vld [vmem:[%s2 + $0x198] sm:$0xff]
        %v529 = vld [vmem:[%s2 + $0x1a0] sm:$0xff]
        %v530 = vld [vmem:[%s2 + $0x1a8] sm:$0xff]
        %v531 = vld [vmem:[%s2 + $0x1b0] sm:$0xff]
        %v532 = vld [vmem:[%s2 + $0x1b8] sm:$0xff]
        %v533 = vld [vmem:[%s2 + $0x1c0] sm:$0xff]
        %v534 = vld [vmem:[%s2 + $0x1c8] sm:$0xff]
        %v535 = vld [vmem:[%s2 + $0x1d0] sm:$0xff]
        %v536 = vld [vmem:[%s2 + $0x1d8] sm:$0xff]
        %v537 = vld [vmem:[%s2 + $0x1e0] sm:$0xff]
        %v538 = vld [vmem:[%s2 + $0x1e8] sm:$0xff]
        %v539 = vld [vmem:[%s2 + $0x1f0] sm:$0xff]
        %v540 = vld [vmem:[%s2 + $0x1f8] sm:$0xff]
        %v541 = vld [vmem:[%s2 + $0x200] sm:$0xff]
        %v542 = vld [vmem:[%s2 + $0x208] sm:$0xff]
        %v543 = vld [vmem:[%s2 + $0x210] sm:$0xff]
        %v544 = vld [vmem:[%s2 + $0x218] sm:$0xff]
        %v545 = vld [vmem:[%s2 + $0x220] sm:$0xff]
        %v546 = vld [vmem:[%s2 + $0x228] sm:$0xff]
        %v547 = vld [vmem:[%s2 + $0x230] sm:$0xff]
        %v548 = vld [vmem:[%s2 + $0x238] sm:$0xff]
        %v549 = vld [vmem:[%s2 + $0x240] sm:$0xff]
        %v550 = vld [vmem:[%s2 + $0x248] sm:$0xff]
        %v551 = vld [vmem:[%s2 + $0x250] sm:$0xff]
        %v552 = vld [vmem:[%s2 + $0x258] sm:$0xff]
        %v553 = vld [vmem:[%s2 + $0x260] sm:$0xff]
        %v554 = vld [vmem:[%s2 + $0x268] sm:$0xff]
        %v555 = vld [vmem:[%s2 + $0x270] sm:$0xff]
        %v556 = vld [vmem:[%s2 + $0x278] sm:$0xff]
        %v557 = vld [vmem:[%s2 + $0x280] sm:$0xff]
        %v558 = vld [vmem:[%s2 + $0x288] sm:$0xff]
        %v559 = vld [vmem:[%s2 + $0x290] sm:$0xff]
        %v560 = vld [vmem:[%s2 + $0x298] sm:$0xff]
        %v561 = vld [vmem:[%s2 + $0x2a0] sm:$0xff]
        %v562 = vld [vmem:[%s2 + $0x2a8] sm:$0xff]
        %v563 = vld [vmem:[%s2 + $0x2b0] sm:$0xff]
        %v564 = vld [vmem:[%s2 + $0x2b8] sm:$0xff]
        %v565 = vld [vmem:[%s2 + $0x2c0] sm:$0xff]
        %v566 = vld [vmem:[%s2 + $0x2c8] sm:$0xff]
        %v567 = vld [vmem:[%s2 + $0x2d0] sm:$0xff]
        %v568 = vld [vmem:[%s2 + $0x2d8] sm:$0xff]
        %v569 = vld [vmem:[%s2 + $0x2e0] sm:$0xff]
        %v570 = vld [vmem:[%s2 + $0x2e8] sm:$0xff]
        %v571 = vld [vmem:[%s2 + $0x2f0] sm:$0xff]
        %v572 = vld [vmem:[%s2 + $0x2f8] sm:$0xff]
        %v573 = vld [vmem:[%s2 + $0x300] sm:$0xff]
        %v574 = vld [vmem:[%s2 + $0x308] sm:$0xff]
        %v575 = vld [vmem:[%s2 + $0x310] sm:$0xff]
        %v576 = vld [vmem:[%s2 + $0x318] sm:$0xff]
        %v577 = vld [vmem:[%s2 + $0x320] sm:$0xff]
        %v578 = vld [vmem:[%s2 + $0x328] sm:$0xff]
        %v579 = vld [vmem:[%s2 + $0x330] sm:$0xff]
        %v580 = vld [vmem:[%s2 + $0x338] sm:$0xff]
        %v581 = vld [vmem:[%s2 + $0x340] sm:$0xff]
        %v582 = vld [vmem:[%s2 + $0x348] sm:$0xff]
        %v583 = vld [vmem:[%s2 + $0x350] sm:$0xff]
        %v584 = vld [vmem:[%s2 + $0x358] sm:$0xff]
        %v585 = vld [vmem:[%s2 + $0x360] sm:$0xff]
        %v586 = vld [vmem:[%s2 + $0x368] sm:$0xff]
        %v587 = vld [vmem:[%s2 + $0x370] sm:$0xff]
        %v588 = vld [vmem:[%s2 + $0x378] sm:$0xff]
        %v589 = vld [vmem:[%s2 + $0x380] sm:$0xff]
        %v590 = vld [vmem:[%s2 + $0x388] sm:$0xff]
        %v591 = vld [vmem:[%s2 + $0x390] sm:$0xff]
        %v592 = vld [vmem:[%s2 + $0x398] sm:$0xff]
        %v593 = vld [vmem:[%s2 + $0x3a0] sm:$0xff]
        %v594 = vld [vmem:[%s2 + $0x3a8] sm:$0xff]
        %v595 = vld [vmem:[%s2 + $0x3b0] sm:$0xff]
        %v596 = vld [vmem:[%s2 + $0x3b8] sm:$0xff]
        %v597 = vld [vmem:[%s2 + $0x3c0] sm:$0xff]
        %v598 = vld [vmem:[%s2 + $0x3c8] sm:$0xff]
        %v599 = vld [vmem:[%s2 + $0x3d0] sm:$0xff]
        %v600 = vld [vmem:[%s2 + $0x3d8] sm:$0xff]
        %v601 = vld [vmem:[%s2 + $0x3e0] sm:$0xff]
        %v602 = vld [vmem:[%s2 + $0x3e8] sm:$0xff]
        %v603 = vld [vmem:[%s2 + $0x3f0] sm:$0xff]
        %v604 = vld [vmem:[%s2 + $0x3f8] sm:$0xff]
        %v605 = vld [vmem:[%s2 + $0x400] sm:$0xff]
        %v606 = vld [vmem:[%s2 + $0x408] sm:$0xff]
        %v607 = vld [vmem:[%s2 + $0x410] sm:$0xff]
        %v608 = vld [vmem:[%s2 + $0x418] sm:$0xff]
        %v609 = vld [vmem:[%s2 + $0x420] sm:$0xff]
        %v610 = vld [vmem:[%s2 + $0x428] sm:$0xff]
        %v611 = vld [vmem:[%s2 + $0x430] sm:$0xff]
        %v612 = vld [vmem:[%s2 + $0x438] sm:$0xff]
        %v613 = vld [vmem:[%s2 + $0x440] sm:$0xff]
        %v614 = vld [vmem:[%s2 + $0x448] sm:$0xff]
        %v615 = vld [vmem:[%s2 + $0x450] sm:$0xff]
        %v616 = vld [vmem:[%s2 + $0x458] sm:$0xff]
        %v617 = vld [vmem:[%s2 + $0x460] sm:$0xff]
        %v618 = vld [vmem:[%s2 + $0x468] sm:$0xff]
        %v619 = vld [vmem:[%s2 + $0x470] sm:$0xff]
        %v620 = vld [vmem:[%s2 + $0x478] sm:$0xff]
        %v621 = vld [vmem:[%s2 + $0x480] sm:$0xff]
        %v622 = vld [vmem:[%s2 + $0x488] sm:$0xff]
        %v623 = vld [vmem:[%s2 + $0x490] sm:$0xff]
        %v624 = vld [vmem:[%s2 + $0x498] sm:$0xff]
        %v625 = vld [vmem:[%s2 + $0x4a0] sm:$0xff]
        %v626 = vld [vmem:[%s2 + $0x4a8] sm:$0xff]
        %v627 = vld [vmem:[%s2 + $0x4b0] sm:$0xff]
        %v628 = vld [vmem:[%s2 + $0x4b8] sm:$0xff]
        %v629 = vld [vmem:[%s2 + $0x4c0] sm:$0xff]
        %v630 = vld [vmem:[%s2 + $0x4c8] sm:$0xff]
        %v631 = vld [vmem:[%s2 + $0x4d0] sm:$0xff]
        %v632 = vld [vmem:[%s2 + $0x4d8] sm:$0xff]
        %v633 = vld [vmem:[%s2 + $0x4e0] sm:$0xff]
        %v634 = vld [vmem:[%s2 + $0x4e8] sm:$0xff]
        %v635 = vld [vmem:[%s2 + $0x4f0] sm:$0xff]
        %v636 = vld [vmem:[%s2 + $0x4f8] sm:$0xff]
        %v637 = vld [vmem:[%s2 + $0x500] sm:$0xff]
        %v638 = vld [vmem:[%s2 + $0x508] sm:$0xff]
        %v639 = vld [vmem:[%s2 + $0x510] sm:$0xff]
        %v640 = vld [vmem:[%s2 + $0x518] sm:$0xff]
        %v641 = vld [vmem:[%s2 + $0x520] sm:$0xff]
        %v642 = vld [vmem:[%s2 + $0x528] sm:$0xff]
        %v643 = vld [vmem:[%s2 + $0x530] sm:$0xff]
        %v644 = vld [vmem:[%s2 + $0x538] sm:$0xff]
        %v645 = vld [vmem:[%s2 + $0x540] sm:$0xff]
        %v646 = vld [vmem:[%s2 + $0x548] sm:$0xff]
        %v647 = vld [vmem:[%s2 + $0x550] sm:$0xff]
        %v648 = vld [vmem:[%s2 + $0x558] sm:$0xff]
        %v649 = vld [vmem:[%s2 + $0x560] sm:$0xff]
        %v650 = vld [vmem:[%s2 + $0x568] sm:$0xff]
        %v651 = vld [vmem:[%s2 + $0x570] sm:$0xff]
        %v652 = vld [vmem:[%s2 + $0x578] sm:$0xff]
        %v653 = vld [vmem:[%s2 + $0x580] sm:$0xff]
        %v654 = vld [vmem:[%s2 + $0x588] sm:$0xff]
        %v655 = vld [vmem:[%s2 + $0x590] sm:$0xff]
        %v656 = vld [vmem:[%s2 + $0x598] sm:$0xff]
        %v657 = vld [vmem:[%s2 + $0x5a0] sm:$0xff]
        %v658 = vld [vmem:[%s2 + $0x5a8] sm:$0xff]
        %v659 = vld [vmem:[%s2 + $0x5b0] sm:$0xff]
        %v660 = vld [vmem:[%s2 + $0x5b8] sm:$0xff]
        %v661 = vld [vmem:[%s2 + $0x5c0] sm:$0xff]
        %v662 = vld [vmem:[%s2 + $0x5c8] sm:$0xff]
        %v663 = vld [vmem:[%s2 + $0x5d0] sm:$0xff]
        %v664 = vld [vmem:[%s2 + $0x5d8] sm:$0xff]
        %v665 = vld [vmem:[%s2 + $0x5e0] sm:$0xff]
        %v666 = vld [vmem:[%s2 + $0x5e8] sm:$0xff]
        %v667 = vld [vmem:[%s2 + $0x5f0] sm:$0xff]
        %v668 = vld [vmem:[%s2 + $0x5f8] sm:$0xff]
        %v669 = vld [vmem:[%s2 + $0x600] sm:$0xff]
        %v670 = vld [vmem:[%s2 + $0x608] sm:$0xff]
        %v671 = vld [vmem:[%s2 + $0x610] sm:$0xff]
        %v672 = vld [vmem:[%s2 + $0x618] sm:$0xff]
        %v674 = vlaneseq
        %v675 = vshrl.u32 %v674, 7
        %v676 = vsub.s32 0, %v675
        %v677 = vrot.slane %v473, %v676
        %v678 = vlaneseq
        %v679 = vshrl.u32 %v678, 7
        %v680 = vsub.s32 1, %v679
        %v681 = vrot.slane %v473, %v680
        %v682 = vlaneseq
        %v683 = vshrl.u32 %v682, 7
        %v684 = vsub.s32 2, %v683
        %v685 = vrot.slane %v473, %v684
        %v686 = vlaneseq
        %v687 = vshrl.u32 %v686, 7
        %v688 = vsub.s32 3, %v687
        %v689 = vrot.slane %v473, %v688
        %v890 = vunpack.c.l.b16 %v477
        %v891 = vunpack.c.h.b16 %v477
        %v892 = vunpack.c.l.b16 %v478
        %v893 = vunpack.c.h.b16 %v478
        %v894 = vunpack.c.l.b16 %v479
        %v895 = vunpack.c.h.b16 %v479
        %v896 = vunpack.c.l.b16 %v480
        %v897 = vunpack.c.h.b16 %v480
        %v898 = vunpack.c.l.b16 %v481
        %v899 = vunpack.c.h.b16 %v481
        %v900 = vunpack.c.l.b16 %v482
        %v901 = vunpack.c.h.b16 %v482
        %v902 = vunpack.c.l.b16 %v483
        %v903 = vunpack.c.h.b16 %v483
        %v904 = vunpack.c.l.b16 %v484
        %v905 = vunpack.c.h.b16 %v484
        %v906 = vunpack.c.l.b16 %v485
        %v907 = vunpack.c.h.b16 %v485
        %v908 = vunpack.c.l.b16 %v486
        %v909 = vunpack.c.h.b16 %v486
        %v910 = vunpack.c.l.b16 %v487
        %v911 = vunpack.c.h.b16 %v487
        %v912 = vunpack.c.l.b16 %v488
        %v913 = vunpack.c.h.b16 %v488
        %v914 = vunpack.c.l.b16 %v489
        %v915 = vunpack.c.h.b16 %v489
        %v916 = vunpack.c.l.b16 %v490
        %v917 = vunpack.c.h.b16 %v490
        %v918 = vunpack.c.l.b16 %v491
        %v919 = vunpack.c.h.b16 %v491
        %v920 = vunpack.c.l.b16 %v492
        %v921 = vunpack.c.h.b16 %v492
        %v922 = vunpack.c.l.b16 %v493
        %v923 = vunpack.c.h.b16 %v493
        %v924 = vunpack.c.l.b16 %v494
        %v925 = vunpack.c.h.b16 %v494
        %v926 = vunpack.c.l.b16 %v495
        %v927 = vunpack.c.h.b16 %v495
        %v928 = vunpack.c.l.b16 %v496
        %v929 = vunpack.c.h.b16 %v496
        %v930 = vunpack.c.l.b16 %v497
        %v931 = vunpack.c.h.b16 %v497
        %v932 = vunpack.c.l.b16 %v498
        %v933 = vunpack.c.h.b16 %v498
        %v934 = vunpack.c.l.b16 %v499
        %v935 = vunpack.c.h.b16 %v499
        %v936 = vunpack.c.l.b16 %v500
        %v937 = vunpack.c.h.b16 %v500
        %v938 = vunpack.c.l.b16 %v501
        %v939 = vunpack.c.h.b16 %v501
        %v940 = vunpack.c.l.b16 %v502
        %v941 = vunpack.c.h.b16 %v502
        %v942 = vunpack.c.l.b16 %v503
        %v943 = vunpack.c.h.b16 %v503
        %v944 = vunpack.c.l.b16 %v504
        %v945 = vunpack.c.h.b16 %v504
        %v946 = vunpack.c.l.b16 %v505
        %v947 = vunpack.c.h.b16 %v505
        %v948 = vunpack.c.l.b16 %v506
        %v949 = vunpack.c.h.b16 %v506
        %v950 = vunpack.c.l.b16 %v507
        %v951 = vunpack.c.h.b16 %v507
        %v952 = vunpack.c.l.b16 %v508
        %v953 = vunpack.c.h.b16 %v508
        %v954 = vunpack.c.l.b16 %v509
        %v955 = vunpack.c.h.b16 %v509
        %v956 = vunpack.c.l.b16 %v510
        %v957 = vunpack.c.h.b16 %v510
        %v958 = vunpack.c.l.b16 %v511
        %v959 = vunpack.c.h.b16 %v511
        %v960 = vunpack.c.l.b16 %v512
        %v961 = vunpack.c.h.b16 %v512
        %v962 = vunpack.c.l.b16 %v513
        %v963 = vunpack.c.h.b16 %v513
        %v964 = vunpack.c.l.b16 %v514
        %v965 = vunpack.c.h.b16 %v514
        %v966 = vunpack.c.l.b16 %v515
        %v967 = vunpack.c.h.b16 %v515
        %v968 = vunpack.c.l.b16 %v516
        %v969 = vunpack.c.h.b16 %v516
        %v970 = vunpack.c.l.b16 %v517
        %v971 = vunpack.c.h.b16 %v517
        %v972 = vunpack.c.l.b16 %v518
        %v973 = vunpack.c.h.b16 %v518
        %v974 = vunpack.c.l.b16 %v519
        %v975 = vunpack.c.h.b16 %v519
        %v976 = vunpack.c.l.b16 %v520
        %v977 = vunpack.c.h.b16 %v520
        %v978 = vunpack.c.l.b16 %v521
        %v979 = vunpack.c.h.b16 %v521
        %v980 = vunpack.c.l.b16 %v522
        %v981 = vunpack.c.h.b16 %v522
        %v982 = vunpack.c.l.b16 %v523
        %v983 = vunpack.c.h.b16 %v523
        %v984 = vunpack.c.l.b16 %v524
        %v985 = vunpack.c.h.b16 %v524
        %v986 = vunpack.c.l.b16 %v525
        %v987 = vunpack.c.h.b16 %v525
        %v988 = vunpack.c.l.b16 %v526
        %v989 = vunpack.c.h.b16 %v526
        %v990 = vunpack.c.l.b16 %v527
        %v991 = vunpack.c.h.b16 %v527
        %v992 = vunpack.c.l.b16 %v528
        %v993 = vunpack.c.h.b16 %v528
        %v994 = vunpack.c.l.b16 %v529
        %v995 = vunpack.c.h.b16 %v529
        %v996 = vunpack.c.l.b16 %v530
        %v997 = vunpack.c.h.b16 %v530
        %v998 = vunpack.c.l.b16 %v531
        %v999 = vunpack.c.h.b16 %v531
        %v1000 = vunpack.c.l.b16 %v532
        %v1001 = vunpack.c.h.b16 %v532
        %v1002 = vunpack.c.l.b16 %v533
        %v1003 = vunpack.c.h.b16 %v533
        %v1004 = vunpack.c.l.b16 %v534
        %v1005 = vunpack.c.h.b16 %v534
        %v1006 = vunpack.c.l.b16 %v535
        %v1007 = vunpack.c.h.b16 %v535
        %v1008 = vunpack.c.l.b16 %v536
        %v1009 = vunpack.c.h.b16 %v536
        %v1010 = vunpack.c.l.b16 %v537
        %v1011 = vunpack.c.h.b16 %v537
        %v1012 = vunpack.c.l.b16 %v538
        %v1013 = vunpack.c.h.b16 %v538
        %v1014 = vunpack.c.l.b16 %v539
        %v1015 = vunpack.c.h.b16 %v539
        %v1016 = vunpack.c.l.b16 %v540
        %v1017 = vunpack.c.h.b16 %v540
        %v1018 = vunpack.c.l.b16 %v541
        %v1019 = vunpack.c.h.b16 %v541
        %v1020 = vunpack.c.l.b16 %v542
        %v1021 = vunpack.c.h.b16 %v542
        %v1022 = vunpack.c.l.b16 %v543
        %v1023 = vunpack.c.h.b16 %v543
        %v1024 = vunpack.c.l.b16 %v544
        %v1025 = vunpack.c.h.b16 %v544
        %v1026 = vunpack.c.l.b16 %v545
        %v1027 = vunpack.c.h.b16 %v545
        %v1028 = vunpack.c.l.b16 %v546
        %v1029 = vunpack.c.h.b16 %v546
        %v1030 = vunpack.c.l.b16 %v547
        %v1031 = vunpack.c.h.b16 %v547
        %v1032 = vunpack.c.l.b16 %v548
        %v1033 = vunpack.c.h.b16 %v548
        %v1034 = vunpack.c.l.b16 %v549
        %v1035 = vunpack.c.h.b16 %v549
        %v1036 = vunpack.c.l.b16 %v550
        %v1037 = vunpack.c.h.b16 %v550
        %v1038 = vunpack.c.l.b16 %v551
        %v1039 = vunpack.c.h.b16 %v551
        %v1040 = vunpack.c.l.b16 %v552
        %v1041 = vunpack.c.h.b16 %v552
        %v1042 = vunpack.c.l.b16 %v553
        %v1043 = vunpack.c.h.b16 %v553
        %v1044 = vunpack.c.l.b16 %v554
        %v1045 = vunpack.c.h.b16 %v554
        %v1046 = vunpack.c.l.b16 %v555
        %v1047 = vunpack.c.h.b16 %v555
        %v1048 = vunpack.c.l.b16 %v556
        %v1049 = vunpack.c.h.b16 %v556
        %v1050 = vunpack.c.l.b16 %v557
        %v1051 = vunpack.c.h.b16 %v557
        %v1052 = vunpack.c.l.b16 %v558
        %v1053 = vunpack.c.h.b16 %v558
        %v1054 = vunpack.c.l.b16 %v559
        %v1055 = vunpack.c.h.b16 %v559
        %v1056 = vunpack.c.l.b16 %v560
        %v1057 = vunpack.c.h.b16 %v560
        %v1058 = vunpack.c.l.b16 %v561
        %v1059 = vunpack.c.h.b16 %v561
        %v1060 = vunpack.c.l.b16 %v562
        %v1061 = vunpack.c.h.b16 %v562
        %v1062 = vunpack.c.l.b16 %v563
        %v1063 = vunpack.c.h.b16 %v563
        %v1064 = vunpack.c.l.b16 %v564
        %v1065 = vunpack.c.h.b16 %v564
        %v1066 = vunpack.c.l.b16 %v565
        %v1067 = vunpack.c.h.b16 %v565
        %v1068 = vunpack.c.l.b16 %v566
        %v1069 = vunpack.c.h.b16 %v566
        %v1070 = vunpack.c.l.b16 %v567
        %v1071 = vunpack.c.h.b16 %v567
        %v1072 = vunpack.c.l.b16 %v568
        %v1073 = vunpack.c.h.b16 %v568
        %v1074 = vunpack.c.l.b16 %v569
        %v1075 = vunpack.c.h.b16 %v569
        %v1076 = vunpack.c.l.b16 %v570
        %v1077 = vunpack.c.h.b16 %v570
        %v1078 = vunpack.c.l.b16 %v571
        %v1079 = vunpack.c.h.b16 %v571
        %v1080 = vunpack.c.l.b16 %v572
        %v1081 = vunpack.c.h.b16 %v572
        %v1082 = vunpack.c.l.b16 %v573
        %v1083 = vunpack.c.h.b16 %v573
        %v1084 = vunpack.c.l.b16 %v574
        %v1085 = vunpack.c.h.b16 %v574
        %v1086 = vunpack.c.l.b16 %v575
        %v1087 = vunpack.c.h.b16 %v575
        %v1088 = vunpack.c.l.b16 %v576
        %v1089 = vunpack.c.h.b16 %v576
        %v1090 = vunpack.c.l.b16 %v577
        %v1091 = vunpack.c.h.b16 %v577
        %v1092 = vunpack.c.l.b16 %v578
        %v1093 = vunpack.c.h.b16 %v578
        %v1094 = vunpack.c.l.b16 %v579
        %v1095 = vunpack.c.h.b16 %v579
        %v1096 = vunpack.c.l.b16 %v580
        %v1097 = vunpack.c.h.b16 %v580
        %v1098 = vunpack.c.l.b16 %v581
        %v1099 = vunpack.c.h.b16 %v581
        %v1100 = vunpack.c.l.b16 %v582
        %v1101 = vunpack.c.h.b16 %v582
        %v1102 = vunpack.c.l.b16 %v583
        %v1103 = vunpack.c.h.b16 %v583
        %v1104 = vunpack.c.l.b16 %v584
        %v1105 = vunpack.c.h.b16 %v584
        %v1106 = vunpack.c.l.b16 %v585
        %v1107 = vunpack.c.h.b16 %v585
        %v1108 = vunpack.c.l.b16 %v586
        %v1109 = vunpack.c.h.b16 %v586
        %v1110 = vunpack.c.l.b16 %v587
        %v1111 = vunpack.c.h.b16 %v587
        %v1112 = vunpack.c.l.b16 %v588
        %v1113 = vunpack.c.h.b16 %v588
        %v1114 = vunpack.c.l.b16 %v589
        %v1115 = vunpack.c.h.b16 %v589
        %v1116 = vunpack.c.l.b16 %v590
        %v1117 = vunpack.c.h.b16 %v590
        %v1118 = vunpack.c.l.b16 %v591
        %v1119 = vunpack.c.h.b16 %v591
        %v1120 = vunpack.c.l.b16 %v592
        %v1121 = vunpack.c.h.b16 %v592
        %v1122 = vunpack.c.l.b16 %v593
        %v1123 = vunpack.c.h.b16 %v593
        %v1124 = vunpack.c.l.b16 %v594
        %v1125 = vunpack.c.h.b16 %v594
        %v1126 = vunpack.c.l.b16 %v595
        %v1127 = vunpack.c.h.b16 %v595
        %v1128 = vunpack.c.l.b16 %v596
        %v1129 = vunpack.c.h.b16 %v596
        %v1130 = vunpack.c.l.b16 %v597
        %v1131 = vunpack.c.h.b16 %v597
        %v1132 = vunpack.c.l.b16 %v598
        %v1133 = vunpack.c.h.b16 %v598
        %v1134 = vunpack.c.l.b16 %v599
        %v1135 = vunpack.c.h.b16 %v599
        %v1136 = vunpack.c.l.b16 %v600
        %v1137 = vunpack.c.h.b16 %v600
        %v1138 = vunpack.c.l.b16 %v601
        %v1139 = vunpack.c.h.b16 %v601
        %v1140 = vunpack.c.l.b16 %v602
        %v1141 = vunpack.c.h.b16 %v602
        %v1142 = vunpack.c.l.b16 %v603
        %v1143 = vunpack.c.h.b16 %v603
        %v1144 = vunpack.c.l.b16 %v604
        %v1145 = vunpack.c.h.b16 %v604
        %v1146 = vunpack.c.l.b16 %v605
        %v1147 = vunpack.c.h.b16 %v605
        %v1148 = vunpack.c.l.b16 %v606
        %v1149 = vunpack.c.h.b16 %v606
        %v1150 = vunpack.c.l.b16 %v607
        %v1151 = vunpack.c.h.b16 %v607
        %v1152 = vunpack.c.l.b16 %v608
        %v1153 = vunpack.c.h.b16 %v608
        %v1154 = vunpack.c.l.b16 %v609
        %v1155 = vunpack.c.h.b16 %v609
        %v1156 = vunpack.c.l.b16 %v610
        %v1157 = vunpack.c.h.b16 %v610
        %v1158 = vunpack.c.l.b16 %v611
        %v1159 = vunpack.c.h.b16 %v611
        %v1160 = vunpack.c.l.b16 %v612
        %v1161 = vunpack.c.h.b16 %v612
        %v1162 = vunpack.c.l.b16 %v613
        %v1163 = vunpack.c.h.b16 %v613
        %v1164 = vunpack.c.l.b16 %v614
        %v1165 = vunpack.c.h.b16 %v614
        %v1166 = vunpack.c.l.b16 %v615
        %v1167 = vunpack.c.h.b16 %v615
        %v1168 = vunpack.c.l.b16 %v616
        %v1169 = vunpack.c.h.b16 %v616
        %v1170 = vunpack.c.l.b16 %v617
        %v1171 = vunpack.c.h.b16 %v617
        %v1172 = vunpack.c.l.b16 %v618
        %v1173 = vunpack.c.h.b16 %v618
        %v1174 = vunpack.c.l.b16 %v619
        %v1175 = vunpack.c.h.b16 %v619
        %v1176 = vunpack.c.l.b16 %v620
        %v1177 = vunpack.c.h.b16 %v620
        %v1178 = vunpack.c.l.b16 %v621
        %v1179 = vunpack.c.h.b16 %v621
        %v1180 = vunpack.c.l.b16 %v622
        %v1181 = vunpack.c.h.b16 %v622
        %v1182 = vunpack.c.l.b16 %v623
        %v1183 = vunpack.c.h.b16 %v623
        %v1184 = vunpack.c.l.b16 %v624
        %v1185 = vunpack.c.h.b16 %v624
        %v1186 = vunpack.c.l.b16 %v625
        %v1187 = vunpack.c.h.b16 %v625
        %v1188 = vunpack.c.l.b16 %v626
        %v1189 = vunpack.c.h.b16 %v626
        %v1190 = vunpack.c.l.b16 %v627
        %v1191 = vunpack.c.h.b16 %v627
        %v1192 = vunpack.c.l.b16 %v628
        %v1193 = vunpack.c.h.b16 %v628
        %v1194 = vunpack.c.l.b16 %v629
        %v1195 = vunpack.c.h.b16 %v629
        %v1196 = vunpack.c.l.b16 %v630
        %v1197 = vunpack.c.h.b16 %v630
        %v1198 = vunpack.c.l.b16 %v631
        %v1199 = vunpack.c.h.b16 %v631
        %v1200 = vunpack.c.l.b16 %v632
        %v1201 = vunpack.c.h.b16 %v632
        %v1202 = vunpack.c.l.b16 %v633
        %v1203 = vunpack.c.h.b16 %v633
        %v1204 = vunpack.c.l.b16 %v634
        %v1205 = vunpack.c.h.b16 %v634
        %v1206 = vunpack.c.l.b16 %v635
        %v1207 = vunpack.c.h.b16 %v635
        %v1208 = vunpack.c.l.b16 %v636
        %v1209 = vunpack.c.h.b16 %v636
        %v1210 = vunpack.c.l.b16 %v637
        %v1211 = vunpack.c.h.b16 %v637
        %v1212 = vunpack.c.l.b16 %v638
        %v1213 = vunpack.c.h.b16 %v638
        %v1214 = vunpack.c.l.b16 %v639
        %v1215 = vunpack.c.h.b16 %v639
        %v1216 = vunpack.c.l.b16 %v640
        %v1217 = vunpack.c.h.b16 %v640
        %v1218 = vunpack.c.l.b16 %v641
        %v1219 = vunpack.c.h.b16 %v641
        %v1220 = vunpack.c.l.b16 %v642
        %v1221 = vunpack.c.h.b16 %v642
        %v1222 = vunpack.c.l.b16 %v643
        %v1223 = vunpack.c.h.b16 %v643
        %v1224 = vunpack.c.l.b16 %v644
        %v1225 = vunpack.c.h.b16 %v644
        %v1226 = vunpack.c.l.b16 %v645
        %v1227 = vunpack.c.h.b16 %v645
        %v1228 = vunpack.c.l.b16 %v646
        %v1229 = vunpack.c.h.b16 %v646
        %v1230 = vunpack.c.l.b16 %v647
        %v1231 = vunpack.c.h.b16 %v647
        %v1232 = vunpack.c.l.b16 %v648
        %v1233 = vunpack.c.h.b16 %v648
        %v1234 = vunpack.c.l.b16 %v649
        %v1235 = vunpack.c.h.b16 %v649
        %v1236 = vunpack.c.l.b16 %v650
        %v1237 = vunpack.c.h.b16 %v650
        %v1238 = vunpack.c.l.b16 %v651
        %v1239 = vunpack.c.h.b16 %v651
        %v1240 = vunpack.c.l.b16 %v652
        %v1241 = vunpack.c.h.b16 %v652
        %v1242 = vunpack.c.l.b16 %v653
        %v1243 = vunpack.c.h.b16 %v653
        %v1244 = vunpack.c.l.b16 %v654
        %v1245 = vunpack.c.h.b16 %v654
        %v1246 = vunpack.c.l.b16 %v655
        %v1247 = vunpack.c.h.b16 %v655
        %v1248 = vunpack.c.l.b16 %v656
        %v1249 = vunpack.c.h.b16 %v656
        %v1250 = vunpack.c.l.b16 %v657
        %v1251 = vunpack.c.h.b16 %v657
        %v1252 = vunpack.c.l.b16 %v658
        %v1253 = vunpack.c.h.b16 %v658
        %v1254 = vunpack.c.l.b16 %v659
        %v1255 = vunpack.c.h.b16 %v659
        %v1256 = vunpack.c.l.b16 %v660
        %v1257 = vunpack.c.h.b16 %v660
        %v1258 = vunpack.c.l.b16 %v661
        %v1259 = vunpack.c.h.b16 %v661
        %v1260 = vunpack.c.l.b16 %v662
        %v1261 = vunpack.c.h.b16 %v662
        %v1262 = vunpack.c.l.b16 %v663
        %v1263 = vunpack.c.h.b16 %v663
        %v1264 = vunpack.c.l.b16 %v664
        %v1265 = vunpack.c.h.b16 %v664
        %v1266 = vunpack.c.l.b16 %v665
        %v1267 = vunpack.c.h.b16 %v665
        %v1268 = vunpack.c.l.b16 %v666
        %v1269 = vunpack.c.h.b16 %v666
        %v1270 = vunpack.c.l.b16 %v667
        %v1271 = vunpack.c.h.b16 %v667
        %v1272 = vunpack.c.l.b16 %v668
        %v1273 = vunpack.c.h.b16 %v668
        %v1274 = vunpack.c.l.b16 %v669
        %v1275 = vunpack.c.h.b16 %v669
        %v1276 = vunpack.c.l.b16 %v670
        %v1277 = vunpack.c.h.b16 %v670
        %v1278 = vunpack.c.l.b16 %v671
        %v1279 = vunpack.c.h.b16 %v671
        %v1280 = vunpack.c.l.b16 %v672
        %v1281 = vunpack.c.h.b16 %v672
        %v1282 = vpack.c.b16 %v894, %v890
        %v1283 = vpack.c.b16 %v895, %v891
        %v1284 = vpack.c.b16 %v896, %v892
        %v1285 = vpack.c.b16 %v897, %v893
        %v1286 = vpack.c.b16 %v902, %v898
        %v1287 = vpack.c.b16 %v903, %v899
        %v1288 = vpack.c.b16 %v904, %v900
        %v1289 = vpack.c.b16 %v905, %v901
        %v1290 = vpack.c.b16 %v910, %v906
        %v1291 = vpack.c.b16 %v911, %v907
        %v1292 = vpack.c.b16 %v912, %v908
        %v1293 = vpack.c.b16 %v913, %v909
        %v1294 = vpack.c.b16 %v918, %v914
        %v1295 = vpack.c.b16 %v919, %v915
        %v1296 = vpack.c.b16 %v920, %v916
        %v1297 = vpack.c.b16 %v921, %v917
        %v1298 = vpack.c.b16 %v926, %v922
        %v1299 = vpack.c.b16 %v927, %v923
        %v1300 = vpack.c.b16 %v928, %v924
        %v1301 = vpack.c.b16 %v929, %v925
        %v1302 = vpack.c.b16 %v934, %v930
        %v1303 = vpack.c.b16 %v935, %v931
        %v1304 = vpack.c.b16 %v936, %v932
        %v1305 = vpack.c.b16 %v937, %v933
        %v1306 = vpack.c.b16 %v942, %v938
        %v1307 = vpack.c.b16 %v943, %v939
        %v1308 = vpack.c.b16 %v944, %v940
        %v1309 = vpack.c.b16 %v945, %v941
        %v1310 = vpack.c.b16 %v950, %v946
        %v1311 = vpack.c.b16 %v951, %v947
        %v1312 = vpack.c.b16 %v952, %v948
        %v1313 = vpack.c.b16 %v953, %v949
        %v1314 = vpack.c.b16 %v958, %v954
        %v1315 = vpack.c.b16 %v959, %v955
        %v1316 = vpack.c.b16 %v960, %v956
        %v1317 = vpack.c.b16 %v961, %v957
        %v1318 = vpack.c.b16 %v966, %v962
        %v1319 = vpack.c.b16 %v967, %v963
        %v1320 = vpack.c.b16 %v968, %v964
        %v1321 = vpack.c.b16 %v969, %v965
        %v1322 = vpack.c.b16 %v974, %v970
        %v1323 = vpack.c.b16 %v975, %v971
        %v1324 = vpack.c.b16 %v976, %v972
        %v1325 = vpack.c.b16 %v977, %v973
        %v1326 = vpack.c.b16 %v982, %v978
        %v1327 = vpack.c.b16 %v983, %v979
        %v1328 = vpack.c.b16 %v984, %v980
        %v1329 = vpack.c.b16 %v985, %v981
        %v1330 = vpack.c.b16 %v990, %v986
        %v1331 = vpack.c.b16 %v991, %v987
        %v1332 = vpack.c.b16 %v992, %v988
        %v1333 = vpack.c.b16 %v993, %v989
        %v1334 = vpack.c.b16 %v998, %v994
        %v1335 = vpack.c.b16 %v999, %v995
        %v1336 = vpack.c.b16 %v1000, %v996
        %v1337 = vpack.c.b16 %v1001, %v997
        %v1338 = vpack.c.b16 %v1006, %v1002
        %v1339 = vpack.c.b16 %v1007, %v1003
        %v1340 = vpack.c.b16 %v1008, %v1004
        %v1341 = vpack.c.b16 %v1009, %v1005
        %v1342 = vpack.c.b16 %v1014, %v1010
        %v1343 = vpack.c.b16 %v1015, %v1011
        %v1344 = vpack.c.b16 %v1016, %v1012
        %v1345 = vpack.c.b16 %v1017, %v1013
        %v1346 = vpack.c.b16 %v1022, %v1018
        %v1347 = vpack.c.b16 %v1023, %v1019
        %v1348 = vpack.c.b16 %v1024, %v1020
        %v1349 = vpack.c.b16 %v1025, %v1021
        %v1350 = vpack.c.b16 %v1030, %v1026
        %v1351 = vpack.c.b16 %v1031, %v1027
        %v1352 = vpack.c.b16 %v1032, %v1028
        %v1353 = vpack.c.b16 %v1033, %v1029
        %v1354 = vpack.c.b16 %v1038, %v1034
        %v1355 = vpack.c.b16 %v1039, %v1035
        %v1356 = vpack.c.b16 %v1040, %v1036
        %v1357 = vpack.c.b16 %v1041, %v1037
        %v1358 = vpack.c.b16 %v1046, %v1042
        %v1359 = vpack.c.b16 %v1047, %v1043
        %v1360 = vpack.c.b16 %v1048, %v1044
        %v1361 = vpack.c.b16 %v1049, %v1045
        %v1362 = vpack.c.b16 %v1054, %v1050
        %v1363 = vpack.c.b16 %v1055, %v1051
        %v1364 = vpack.c.b16 %v1056, %v1052
        %v1365 = vpack.c.b16 %v1057, %v1053
        %v1366 = vpack.c.b16 %v1062, %v1058
        %v1367 = vpack.c.b16 %v1063, %v1059
        %v1368 = vpack.c.b16 %v1064, %v1060
        %v1369 = vpack.c.b16 %v1065, %v1061
        %v1370 = vpack.c.b16 %v1070, %v1066
        %v1371 = vpack.c.b16 %v1071, %v1067
        %v1372 = vpack.c.b16 %v1072, %v1068
        %v1373 = vpack.c.b16 %v1073, %v1069
        %v1374 = vpack.c.b16 %v1078, %v1074
        %v1375 = vpack.c.b16 %v1079, %v1075
        %v1376 = vpack.c.b16 %v1080, %v1076
        %v1377 = vpack.c.b16 %v1081, %v1077
        %v1378 = vpack.c.b16 %v1086, %v1082
        %v1379 = vpack.c.b16 %v1087, %v1083
        %v1380 = vpack.c.b16 %v1088, %v1084
        %v1381 = vpack.c.b16 %v1089, %v1085
        %v1382 = vpack.c.b16 %v1094, %v1090
        %v1383 = vpack.c.b16 %v1095, %v1091
        %v1384 = vpack.c.b16 %v1096, %v1092
        %v1385 = vpack.c.b16 %v1097, %v1093
        %v1386 = vpack.c.b16 %v1102, %v1098
        %v1387 = vpack.c.b16 %v1103, %v1099
        %v1388 = vpack.c.b16 %v1104, %v1100
        %v1389 = vpack.c.b16 %v1105, %v1101
        %v1390 = vpack.c.b16 %v1110, %v1106
        %v1391 = vpack.c.b16 %v1111, %v1107
        %v1392 = vpack.c.b16 %v1112, %v1108
        %v1393 = vpack.c.b16 %v1113, %v1109
        %v1394 = vpack.c.b16 %v1118, %v1114
        %v1395 = vpack.c.b16 %v1119, %v1115
        %v1396 = vpack.c.b16 %v1120, %v1116
        %v1397 = vpack.c.b16 %v1121, %v1117
        %v1398 = vpack.c.b16 %v1126, %v1122
        %v1399 = vpack.c.b16 %v1127, %v1123
        %v1400 = vpack.c.b16 %v1128, %v1124
        %v1401 = vpack.c.b16 %v1129, %v1125
        %v1402 = vpack.c.b16 %v1134, %v1130
        %v1403 = vpack.c.b16 %v1135, %v1131
        %v1404 = vpack.c.b16 %v1136, %v1132
        %v1405 = vpack.c.b16 %v1137, %v1133
        %v1406 = vpack.c.b16 %v1142, %v1138
        %v1407 = vpack.c.b16 %v1143, %v1139
        %v1408 = vpack.c.b16 %v1144, %v1140
        %v1409 = vpack.c.b16 %v1145, %v1141
        %v1410 = vpack.c.b16 %v1150, %v1146
        %v1411 = vpack.c.b16 %v1151, %v1147
        %v1412 = vpack.c.b16 %v1152, %v1148
        %v1413 = vpack.c.b16 %v1153, %v1149
        %v1414 = vpack.c.b16 %v1158, %v1154
        %v1415 = vpack.c.b16 %v1159, %v1155
        %v1416 = vpack.c.b16 %v1160, %v1156
        %v1417 = vpack.c.b16 %v1161, %v1157
        %v1418 = vpack.c.b16 %v1166, %v1162
        %v1419 = vpack.c.b16 %v1167, %v1163
        %v1420 = vpack.c.b16 %v1168, %v1164
        %v1421 = vpack.c.b16 %v1169, %v1165
        %v1422 = vpack.c.b16 %v1174, %v1170
        %v1423 = vpack.c.b16 %v1175, %v1171
        %v1424 = vpack.c.b16 %v1176, %v1172
        %v1425 = vpack.c.b16 %v1177, %v1173
        %v1426 = vpack.c.b16 %v1182, %v1178
        %v1427 = vpack.c.b16 %v1183, %v1179
        %v1428 = vpack.c.b16 %v1184, %v1180
        %v1429 = vpack.c.b16 %v1185, %v1181
        %v1430 = vpack.c.b16 %v1190, %v1186
        %v1431 = vpack.c.b16 %v1191, %v1187
        %v1432 = vpack.c.b16 %v1192, %v1188
        %v1433 = vpack.c.b16 %v1193, %v1189
        %v1434 = vpack.c.b16 %v1198, %v1194
        %v1435 = vpack.c.b16 %v1199, %v1195
        %v1436 = vpack.c.b16 %v1200, %v1196
        %v1437 = vpack.c.b16 %v1201, %v1197
        %v1438 = vpack.c.b16 %v1206, %v1202
        %v1439 = vpack.c.b16 %v1207, %v1203
        %v1440 = vpack.c.b16 %v1208, %v1204
        %v1441 = vpack.c.b16 %v1209, %v1205
        %v1442 = vpack.c.b16 %v1214, %v1210
        %v1443 = vpack.c.b16 %v1215, %v1211
        %v1444 = vpack.c.b16 %v1216, %v1212
        %v1445 = vpack.c.b16 %v1217, %v1213
        %v1446 = vpack.c.b16 %v1222, %v1218
        %v1447 = vpack.c.b16 %v1223, %v1219
        %v1448 = vpack.c.b16 %v1224, %v1220
        %v1449 = vpack.c.b16 %v1225, %v1221
        %v1450 = vpack.c.b16 %v1230, %v1226
        %v1451 = vpack.c.b16 %v1231, %v1227
        %v1452 = vpack.c.b16 %v1232, %v1228
        %v1453 = vpack.c.b16 %v1233, %v1229
        %v1454 = vpack.c.b16 %v1238, %v1234
        %v1455 = vpack.c.b16 %v1239, %v1235
        %v1456 = vpack.c.b16 %v1240, %v1236
        %v1457 = vpack.c.b16 %v1241, %v1237
        %v1458 = vpack.c.b16 %v1246, %v1242
        %v1459 = vpack.c.b16 %v1247, %v1243
        %v1460 = vpack.c.b16 %v1248, %v1244
        %v1461 = vpack.c.b16 %v1249, %v1245
        %v1462 = vpack.c.b16 %v1254, %v1250
        %v1463 = vpack.c.b16 %v1255, %v1251
        %v1464 = vpack.c.b16 %v1256, %v1252
        %v1465 = vpack.c.b16 %v1257, %v1253
        %v1466 = vpack.c.b16 %v1262, %v1258
        %v1467 = vpack.c.b16 %v1263, %v1259
        %v1468 = vpack.c.b16 %v1264, %v1260
        %v1469 = vpack.c.b16 %v1265, %v1261
        %v1470 = vpack.c.b16 %v1270, %v1266
        %v1471 = vpack.c.b16 %v1271, %v1267
        %v1472 = vpack.c.b16 %v1272, %v1268
        %v1473 = vpack.c.b16 %v1273, %v1269
        %v1474 = vpack.c.b16 %v1278, %v1274
        %v1475 = vpack.c.b16 %v1279, %v1275
        %v1476 = vpack.c.b16 %v1280, %v1276
        %v1477 = vpack.c.b16 %v1281, %v1277
        %vm1674 = vcmask 130048
        %v1676 = vsel %vm1674, %v437, 0
        %v1679 = vsel %vm1674, %v444, 0
        %v1682 = vsel %vm1674, %v451, 0
        %v1685 = vsel %vm1674, %v458, 0
        %v1688 = vsel %vm1674, %v465, 0
        %v1691 = vsel %vm1674, %v472, 0
        %1693 = vmatprep.subr.bf16.mxu0 %v1283
        %1694 = vmatpush1.bf16.msra.mxu0 %v1282
        %1695 = vmatprep.subr.bf16.mxu0 %v1287
        %1696 = vmatpush1.bf16.msra.mxu0 %v1286
        %1697 = vmatprep.subr.bf16.mxu0 %v1291
        %1698 = vmatpush1.bf16.msra.mxu0 %v1290
        %1699 = vmatprep.subr.bf16.mxu0 %v1295
        %1700 = vmatpush1.bf16.msra.mxu0 %v1294
        %1701 = vmatprep.subr.bf16.mxu0 %v1299
        %1702 = vmatpush1.bf16.msra.mxu0 %v1298
        %1703 = vmatprep.subr.bf16.mxu0 %v1303
        %1704 = vmatpush1.bf16.msra.mxu0 %v1302
        %1705 = vmatprep.subr.bf16.mxu0 %v1307
        %1706 = vmatpush1.bf16.msra.mxu0 %v1306
        %1707 = vmatprep.subr.bf16.mxu0 %v1311
        %1708 = vmatpush1.bf16.msra.mxu0 %v1310
        %1709 = vmatprep.subr.bf16.mxu0 %v1315
        %1710 = vmatpush1.bf16.msra.mxu0 %v1314
        %1711 = vmatprep.subr.bf16.mxu0 %v1319
        %1712 = vmatpush1.bf16.msra.mxu0 %v1318
        %1713 = vmatprep.subr.bf16.mxu0 %v1323
        %1714 = vmatpush1.bf16.msra.mxu0 %v1322
        %1715 = vmatprep.subr.bf16.mxu0 %v1327
        %1716 = vmatpush1.bf16.msra.mxu0 %v1326
        %1717 = vmatprep.subr.bf16.mxu0 %v1331
        %1718 = vmatpush1.bf16.msra.mxu0 %v1330
        %1719 = vmatprep.subr.bf16.mxu0 %v1335
        %1720 = vmatpush1.bf16.msra.mxu0 %v1334
        %1721 = vmatprep.subr.bf16.mxu0 %v1339
        %1722 = vmatpush1.bf16.msra.mxu0 %v1338
        %1723 = vmatprep.subr.bf16.mxu0 %v1343
        %1724 = vmatpush1.bf16.msra.mxu0 %v1342
        %1725 = vmatprep.mubr.bf16.mxu0 %v432
        %1726 = vmatmul.mubr.bf16.gmra.mrb[0].mxu0 %v431
        %v1727 = vpop.f32.mrb[0].mxu0
        %v1728 = vadd.f32 %v677, %v1727
        %v1729 = vpop.f32.mrb[0].mxu0
        %v1730 = vadd.f32 %v681, %v1729
        %v1731 = vpop.f32.mrb[0].mxu0
        %v1732 = vadd.f32 %v677, %v1731
        %v1733 = vpop.f32.mrb[0].mxu0
        %v1734 = vadd.f32 %v681, %v1733
        %1735 = vmatprep.mubr.bf16.mxu0 %v439
        %1736 = vmatmul.mubr.bf16.gmra.mrb[0].mxu0 %v438
        %v1737 = vpop.f32.mrb[0].mxu0
        %v1738 = vadd.f32 %v677, %v1737
        %v1739 = vpop.f32.mrb[0].mxu0
        %v1740 = vadd.f32 %v681, %v1739
        %v1741 = vpop.f32.mrb[0].mxu0
        %v1742 = vadd.f32 %v677, %v1741
        %v1743 = vpop.f32.mrb[0].mxu0
        %v1744 = vadd.f32 %v681, %v1743
        %1745 = vmatprep.mubr.bf16.mxu0 %v446
        %1746 = vmatmul.mubr.bf16.gmra.mrb[0].mxu0 %v445
        %v1747 = vpop.f32.mrb[0].mxu0
        %v1748 = vadd.f32 %v677, %v1747
        %v1749 = vpop.f32.mrb[0].mxu0
        %v1750 = vadd.f32 %v681, %v1749
        %v1751 = vpop.f32.mrb[0].mxu0
        %v1752 = vadd.f32 %v677, %v1751
        %v1753 = vpop.f32.mrb[0].mxu0
        %v1754 = vadd.f32 %v681, %v1753
        %1755 = vmatprep.mubr.bf16.mxu0 %v453
        %1756 = vmatmul.mubr.bf16.gmra.mrb[0].mxu0 %v452
        %v1757 = vpop.f32.mrb[0].mxu0
        %v1758 = vadd.f32 %v677, %v1757
        %v1759 = vpop.f32.mrb[0].mxu0
        %v1760 = vadd.f32 %v681, %v1759
        %v1761 = vpop.f32.mrb[0].mxu0
        %v1762 = vadd.f32 %v677, %v1761
        %v1763 = vpop.f32.mrb[0].mxu0
        %v1764 = vadd.f32 %v681, %v1763
        %1765 = vmatprep.mubr.bf16.mxu0 %v460
        %1766 = vmatmul.mubr.bf16.gmra.mrb[0].mxu0 %v459
        %v1767 = vpop.f32.mrb[0].mxu0
        %v1768 = vadd.f32 %v677, %v1767
        %v1769 = vpop.f32.mrb[0].mxu0
        %v1770 = vadd.f32 %v681, %v1769
        %v1771 = vpop.f32.mrb[0].mxu0
        %v1772 = vadd.f32 %v677, %v1771
        %v1773 = vpop.f32.mrb[0].mxu0
        %v1774 = vadd.f32 %v681, %v1773
        %1775 = vmatprep.mubr.bf16.mxu0 %v467
        %1776 = vmatmul.mubr.bf16.gmra.mrb[0].mxu0 %v466
        %v1777 = vpop.f32.mrb[0].mxu0
        %v1778 = vadd.f32 %v677, %v1777
        %v1779 = vpop.f32.mrb[0].mxu0
        %v1780 = vadd.f32 %v681, %v1779
        %v1781 = vpop.f32.mrb[0].mxu0
        %v1782 = vadd.f32 %v677, %v1781
        %v1783 = vpop.f32.mrb[0].mxu0
        %v1784 = vadd.f32 %v681, %v1783
        %1785 = vdwg.mxu0
        %1786 = vmatprep.subr.bf16.mxu0 %v1347
        %1787 = vmatpush1.bf16.msra.mxu0 %v1346
        %1788 = vmatprep.subr.bf16.mxu0 %v1351
        %1789 = vmatpush1.bf16.msra.mxu0 %v1350
        %1790 = vmatprep.subr.bf16.mxu0 %v1355
        %1791 = vmatpush1.bf16.msra.mxu0 %v1354
        %1792 = vmatprep.subr.bf16.mxu0 %v1359
        %1793 = vmatpush1.bf16.msra.mxu0 %v1358
        %1794 = vmatprep.subr.bf16.mxu0 %v1363
        %1795 = vmatpush1.bf16.msra.mxu0 %v1362
        %1796 = vmatprep.subr.bf16.mxu0 %v1367
        %1797 = vmatpush1.bf16.msra.mxu0 %v1366
        %1798 = vmatprep.subr.bf16.mxu0 %v1371
        %1799 = vmatpush1.bf16.msra.mxu0 %v1370
        %1800 = vmatprep.subr.bf16.mxu0 %v1375
        %1801 = vmatpush1.bf16.msra.mxu0 %v1374
        %1802 = vmatprep.subr.bf16.mxu0 %v1379
        %1803 = vmatpush1.bf16.msra.mxu0 %v1378
        %1804 = vmatprep.subr.bf16.mxu0 %v1383
        %1805 = vmatpush1.bf16.msra.mxu0 %v1382
        %1806 = vmatprep.subr.bf16.mxu0 %v1387
        %1807 = vmatpush1.bf16.msra.mxu0 %v1386
        %1808 = vmatprep.subr.bf16.mxu0 %v1391
        %1809 = vmatpush1.bf16.msra.mxu0 %v1390
        %1810 = vmatprep.subr.bf16.mxu0 %v1395
        %1811 = vmatpush1.bf16.msra.mxu0 %v1394
        %1812 = vmatprep.subr.bf16.mxu0 %v1399
        %1813 = vmatpush1.bf16.msra.mxu0 %v1398
        %1814 = vmatprep.subr.bf16.mxu0 %v1403
        %1815 = vmatpush1.bf16.msra.mxu0 %v1402
        %1816 = vmatprep.subr.bf16.mxu0 %v1407
        %1817 = vmatpush1.bf16.msra.mxu0 %v1406
        %1818 = vmatprep.mubr.bf16.mxu0 %v434
        %1819 = vmatmul.mubr.bf16.gmra.mrb[0].mxu0 %v433
        %v1820 = vpop.f32.mrb[0].mxu0
        %v1821 = vadd.f32 %v1728, %v1820
        %v1822 = vpop.f32.mrb[0].mxu0
        %v1823 = vadd.f32 %v1730, %v1822
        %v1824 = vpop.f32.mrb[0].mxu0
        %v1825 = vadd.f32 %v1732, %v1824
        %v1826 = vpop.f32.mrb[0].mxu0
        %v1827 = vadd.f32 %v1734, %v1826
        %1828 = vmatprep.mubr.bf16.mxu0 %v441
        %1829 = vmatmul.mubr.bf16.gmra.mrb[0].mxu0 %v440
        %v1830 = vpop.f32.mrb[0].mxu0
        %v1831 = vadd.f32 %v1738, %v1830
        %v1832 = vpop.f32.mrb[0].mxu0
        %v1833 = vadd.f32 %v1740, %v1832
        %v1834 = vpop.f32.mrb[0].mxu0
        %v1835 = vadd.f32 %v1742, %v1834
        %v1836 = vpop.f32.mrb[0].mxu0
        %v1837 = vadd.f32 %v1744, %v1836
        %1838 = vmatprep.mubr.bf16.mxu0 %v448
        %1839 = vmatmul.mubr.bf16.gmra.mrb[0].mxu0 %v447
        %v1840 = vpop.f32.mrb[0].mxu0
        %v1841 = vadd.f32 %v1748, %v1840
        %v1842 = vpop.f32.mrb[0].mxu0
        %v1843 = vadd.f32 %v1750, %v1842
        %v1844 = vpop.f32.mrb[0].mxu0
        %v1845 = vadd.f32 %v1752, %v1844
        %v1846 = vpop.f32.mrb[0].mxu0
        %v1847 = vadd.f32 %v1754, %v1846
        %1848 = vmatprep.mubr.bf16.mxu0 %v455
        %1849 = vmatmul.mubr.bf16.gmra.mrb[0].mxu0 %v454
        %v1850 = vpop.f32.mrb[0].mxu0
        %v1851 = vadd.f32 %v1758, %v1850
        %v1852 = vpop.f32.mrb[0].mxu0
        %v1853 = vadd.f32 %v1760, %v1852
        %v1854 = vpop.f32.mrb[0].mxu0
        %v1855 = vadd.f32 %v1762, %v1854
        %v1856 = vpop.f32.mrb[0].mxu0
        %v1857 = vadd.f32 %v1764, %v1856
        %1858 = vmatprep.mubr.bf16.mxu0 %v462
        %1859 = vmatmul.mubr.bf16.gmra.mrb[0].mxu0 %v461
        %v1860 = vpop.f32.mrb[0].mxu0
        %v1861 = vadd.f32 %v1768, %v1860
        %v1862 = vpop.f32.mrb[0].mxu0
        %v1863 = vadd.f32 %v1770, %v1862
        %v1864 = vpop.f32.mrb[0].mxu0
        %v1865 = vadd.f32 %v1772, %v1864
        %v1866 = vpop.f32.mrb[0].mxu0
        %v1867 = vadd.f32 %v1774, %v1866
        %1868 = vmatprep.mubr.bf16.mxu0 %v469
        %1869 = vmatmul.mubr.bf16.gmra.mrb[0].mxu0 %v468
        %v1870 = vpop.f32.mrb[0].mxu0
        %v1871 = vadd.f32 %v1778, %v1870
        %v1872 = vpop.f32.mrb[0].mxu0
        %v1873 = vadd.f32 %v1780, %v1872
        %v1874 = vpop.f32.mrb[0].mxu0
        %v1875 = vadd.f32 %v1782, %v1874
        %v1876 = vpop.f32.mrb[0].mxu0
        %v1877 = vadd.f32 %v1784, %v1876
        %1878 = vdwg.mxu0
        %1879 = vmatprep.subr.bf16.mxu0 %v1411
        %1880 = vmatpush1.bf16.msra.mxu0 %v1410
        %1881 = vmatprep.subr.bf16.mxu0 %v1415
        %1882 = vmatpush1.bf16.msra.mxu0 %v1414
        %1883 = vmatprep.subr.bf16.mxu0 %v1419
        %1884 = vmatpush1.bf16.msra.mxu0 %v1418
        %1885 = vmatprep.subr.bf16.mxu0 %v1423
        %1886 = vmatpush1.bf16.msra.mxu0 %v1422
        %1887 = vmatprep.subr.bf16.mxu0 %v1427
        %1888 = vmatpush1.bf16.msra.mxu0 %v1426
        %1889 = vmatprep.subr.bf16.mxu0 %v1431
        %1890 = vmatpush1.bf16.msra.mxu0 %v1430
        %1891 = vmatprep.subr.bf16.mxu0 %v1435
        %1892 = vmatpush1.bf16.msra.mxu0 %v1434
        %1893 = vmatprep.subr.bf16.mxu0 %v1439
        %1894 = vmatpush1.bf16.msra.mxu0 %v1438
        %1895 = vmatprep.subr.bf16.mxu0 %v1443
        %1896 = vmatpush1.bf16.msra.mxu0 %v1442
        %1897 = vmatprep.subr.bf16.mxu0 %v1447
        %1898 = vmatpush1.bf16.msra.mxu0 %v1446
        %1899 = vmatprep.subr.bf16.mxu0 %v1451
        %1900 = vmatpush1.bf16.msra.mxu0 %v1450
        %1901 = vmatprep.subr.bf16.mxu0 %v1455
        %1902 = vmatpush1.bf16.msra.mxu0 %v1454
        %1903 = vmatprep.subr.bf16.mxu0 %v1459
        %1904 = vmatpush1.bf16.msra.mxu0 %v1458
        %1905 = vmatprep.subr.bf16.mxu0 %v1463
        %1906 = vmatpush1.bf16.msra.mxu0 %v1462
        %1907 = vmatprep.subr.bf16.mxu0 %v1467
        %1908 = vmatpush1.bf16.msra.mxu0 %v1466
        %1909 = vmatprep.subr.bf16.mxu0 %v1471
        %1910 = vmatpush1.bf16.msra.mxu0 %v1470
        %1911 = vmatprep.mubr.bf16.mxu0 %v436
        %1912 = vmatmul.mubr.bf16.gmra.mrb[0].mxu0 %v435
        %v1913 = vpop.f32.mrb[0].mxu0
        %v1914 = vadd.f32 %v1821, %v1913
        %v1915 = vpop.f32.mrb[0].mxu0
        %v1916 = vadd.f32 %v1823, %v1915
        %v1917 = vpop.f32.mrb[0].mxu0
        %v1918 = vadd.f32 %v1825, %v1917
        %v1919 = vpop.f32.mrb[0].mxu0
        %v1920 = vadd.f32 %v1827, %v1919
        %1921 = vmatprep.mubr.bf16.mxu0 %v443
        %1922 = vmatmul.mubr.bf16.gmra.mrb[0].mxu0 %v442
        %v1923 = vpop.f32.mrb[0].mxu0
        %v1924 = vadd.f32 %v1831, %v1923
        %v1925 = vpop.f32.mrb[0].mxu0
        %v1926 = vadd.f32 %v1833, %v1925
        %v1927 = vpop.f32.mrb[0].mxu0
        %v1928 = vadd.f32 %v1835, %v1927
        %v1929 = vpop.f32.mrb[0].mxu0
        %v1930 = vadd.f32 %v1837, %v1929
        %1931 = vmatprep.mubr.bf16.mxu0 %v450
        %1932 = vmatmul.mubr.bf16.gmra.mrb[0].mxu0 %v449
        %v1933 = vpop.f32.mrb[0].mxu0
        %v1934 = vadd.f32 %v1841, %v1933
        %v1935 = vpop.f32.mrb[0].mxu0
        %v1936 = vadd.f32 %v1843, %v1935
        %v1937 = vpop.f32.mrb[0].mxu0
        %v1938 = vadd.f32 %v1845, %v1937
        %v1939 = vpop.f32.mrb[0].mxu0
        %v1940 = vadd.f32 %v1847, %v1939
        %1941 = vmatprep.mubr.bf16.mxu0 %v457
        %1942 = vmatmul.mubr.bf16.gmra.mrb[0].mxu0 %v456
        %v1943 = vpop.f32.mrb[0].mxu0
        %v1944 = vadd.f32 %v1851, %v1943
        %v1945 = vpop.f32.mrb[0].mxu0
        %v1946 = vadd.f32 %v1853, %v1945
        %v1947 = vpop.f32.mrb[0].mxu0
        %v1948 = vadd.f32 %v1855, %v1947
        %v1949 = vpop.f32.mrb[0].mxu0
        %v1950 = vadd.f32 %v1857, %v1949
        %1951 = vmatprep.mubr.bf16.mxu0 %v464
        %1952 = vmatmul.mubr.bf16.gmra.mrb[0].mxu0 %v463
        %v1953 = vpop.f32.mrb[0].mxu0
        %v1954 = vadd.f32 %v1861, %v1953
        %v1955 = vpop.f32.mrb[0].mxu0
        %v1956 = vadd.f32 %v1863, %v1955
        %v1957 = vpop.f32.mrb[0].mxu0
        %v1958 = vadd.f32 %v1865, %v1957
        %v1959 = vpop.f32.mrb[0].mxu0
        %v1960 = vadd.f32 %v1867, %v1959
        %1961 = vmatprep.mubr.bf16.mxu0 %v471
        %1962 = vmatmul.mubr.bf16.gmra.mrb[0].mxu0 %v470
        %v1963 = vpop.f32.mrb[0].mxu0
        %v1964 = vadd.f32 %v1871, %v1963
        %v1965 = vpop.f32.mrb[0].mxu0
        %v1966 = vadd.f32 %v1873, %v1965
        %v1967 = vpop.f32.mrb[0].mxu0
        %v1968 = vadd.f32 %v1875, %v1967
        %v1969 = vpop.f32.mrb[0].mxu0
        %v1970 = vadd.f32 %v1877, %v1969
        %1971 = vdwg.mxu0
        %1972 = vmatprep.subr.bf16.mxu0 %v1475
        %1973 = vmatpush1.bf16.msra.mxu0 %v1474
        %1974 = vmatprep.subr.bf16.mxu0 0
        %1975 = vmatpush1.bf16.msra.mxu0 0
        %1976 = vmatprep.subr.bf16.mxu0 0
        %1977 = vmatpush1.bf16.msra.mxu0 0
        %1978 = vmatprep.subr.bf16.mxu0 0
        %1979 = vmatpush1.bf16.msra.mxu0 0
        %1980 = vmatprep.subr.bf16.mxu0 0
        %1981 = vmatpush1.bf16.msra.mxu0 0
        %1982 = vmatprep.subr.bf16.mxu0 0
        %1983 = vmatpush1.bf16.msra.mxu0 0
        %1984 = vmatprep.subr.bf16.mxu0 0
        %1985 = vmatpush1.bf16.msra.mxu0 0
        %1986 = vmatprep.subr.bf16.mxu0 0
        %1987 = vmatpush1.bf16.msra.mxu0 0
        %1988 = vmatprep.subr.bf16.mxu0 0
        %1989 = vmatpush1.bf16.msra.mxu0 0
        %1990 = vmatprep.subr.bf16.mxu0 0
        %1991 = vmatpush1.bf16.msra.mxu0 0
        %1992 = vmatprep.subr.bf16.mxu0 0
        %1993 = vmatpush1.bf16.msra.mxu0 0
        %1994 = vmatprep.subr.bf16.mxu0 0
        %1995 = vmatpush1.bf16.msra.mxu0 0
        %1996 = vmatprep.subr.bf16.mxu0 0
        %1997 = vmatpush1.bf16.msra.mxu0 0
        %1998 = vmatprep.subr.bf16.mxu0 0
        %1999 = vmatpush1.bf16.msra.mxu0 0
        %2000 = vmatprep.subr.bf16.mxu0 0
        %2001 = vmatpush1.bf16.msra.mxu0 0
        %2002 = vmatprep.subr.bf16.mxu0 0
        %2003 = vmatpush1.bf16.msra.mxu0 0
        %2004 = vmatprep.mubr.bf16.mxu0 0
        %2005 = vmatmul.mubr.bf16.gmra.mrb[0].mxu0 %v1676
        %v2006 = vpop.f32.mrb[0].mxu0
        %v2007 = vadd.f32 %v1914, %v2006
        %v2008 = vpop.f32.mrb[0].mxu0
        %v2009 = vadd.f32 %v1916, %v2008
        %v2010 = vpop.f32.mrb[0].mxu0
        %v2011 = vadd.f32 %v1918, %v2010
        %v2012 = vpop.f32.mrb[0].mxu0
        %v2013 = vadd.f32 %v1920, %v2012
        %2014 = vmatprep.mubr.bf16.mxu0 0
        %2015 = vmatmul.mubr.bf16.gmra.mrb[0].mxu0 %v1679
        %v2016 = vpop.f32.mrb[0].mxu0
        %v2017 = vadd.f32 %v1924, %v2016
        %v2018 = vpop.f32.mrb[0].mxu0
        %v2019 = vadd.f32 %v1926, %v2018
        %v2020 = vpop.f32.mrb[0].mxu0
        %v2021 = vadd.f32 %v1928, %v2020
        %v2022 = vpop.f32.mrb[0].mxu0
        %v2023 = vadd.f32 %v1930, %v2022
        %2024 = vmatprep.mubr.bf16.mxu0 0
        %2025 = vmatmul.mubr.bf16.gmra.mrb[0].mxu0 %v1682
        %v2026 = vpop.f32.mrb[0].mxu0
        %v2027 = vadd.f32 %v1934, %v2026
        %v2028 = vpop.f32.mrb[0].mxu0
        %v2029 = vadd.f32 %v1936, %v2028
        %v2030 = vpop.f32.mrb[0].mxu0
        %v2031 = vadd.f32 %v1938, %v2030
        %v2032 = vpop.f32.mrb[0].mxu0
        %v2033 = vadd.f32 %v1940, %v2032
        %2034 = vmatprep.mubr.bf16.mxu0 0
        %2035 = vmatmul.mubr.bf16.gmra.mrb[0].mxu0 %v1685
        %v2036 = vpop.f32.mrb[0].mxu0
        %v2037 = vadd.f32 %v1944, %v2036
        %v2038 = vpop.f32.mrb[0].mxu0
        %v2039 = vadd.f32 %v1946, %v2038
        %v2040 = vpop.f32.mrb[0].mxu0
        %v2041 = vadd.f32 %v1948, %v2040
        %v2042 = vpop.f32.mrb[0].mxu0
        %v2043 = vadd.f32 %v1950, %v2042
        %2044 = vmatprep.mubr.bf16.mxu0 0
        %2045 = vmatmul.mubr.bf16.gmra.mrb[0].mxu0 %v1688
        %v2046 = vpop.f32.mrb[0].mxu0
        %v2047 = vadd.f32 %v1954, %v2046
        %v2048 = vpop.f32.mrb[0].mxu0
        %v2049 = vadd.f32 %v1956, %v2048
        %v2050 = vpop.f32.mrb[0].mxu0
        %v2051 = vadd.f32 %v1958, %v2050
        %v2052 = vpop.f32.mrb[0].mxu0
        %v2053 = vadd.f32 %v1960, %v2052
        %2054 = vmatprep.mubr.bf16.mxu0 0
        %2055 = vmatmul.mubr.bf16.gmra.mrb[0].mxu0 %v1691
        %v2056 = vpop.f32.mrb[0].mxu0
        %v2057 = vadd.f32 %v1964, %v2056
        %v2058 = vpop.f32.mrb[0].mxu0
        %v2059 = vadd.f32 %v1966, %v2058
        %v2060 = vpop.f32.mrb[0].mxu0
        %v2061 = vadd.f32 %v1968, %v2060
        %v2062 = vpop.f32.mrb[0].mxu0
        %v2063 = vadd.f32 %v1970, %v2062
        %2064 = vdwg.mxu0
        %2065 = vmatprep.subr.bf16.mxu0 %v1285
        %2066 = vmatpush1.bf16.msra.mxu0 %v1284
        %2067 = vmatprep.subr.bf16.mxu0 %v1289
        %2068 = vmatpush1.bf16.msra.mxu0 %v1288
        %2069 = vmatprep.subr.bf16.mxu0 %v1293
        %2070 = vmatpush1.bf16.msra.mxu0 %v1292
        %2071 = vmatprep.subr.bf16.mxu0 %v1297
        %2072 = vmatpush1.bf16.msra.mxu0 %v1296
        %2073 = vmatprep.subr.bf16.mxu0 %v1301
        %2074 = vmatpush1.bf16.msra.mxu0 %v1300
        %2075 = vmatprep.subr.bf16.mxu0 %v1305
        %2076 = vmatpush1.bf16.msra.mxu0 %v1304
        %2077 = vmatprep.subr.bf16.mxu0 %v1309
        %2078 = vmatpush1.bf16.msra.mxu0 %v1308
        %2079 = vmatprep.subr.bf16.mxu0 %v1313
        %2080 = vmatpush1.bf16.msra.mxu0 %v1312
        %2081 = vmatprep.subr.bf16.mxu0 %v1317
        %2082 = vmatpush1.bf16.msra.mxu0 %v1316
        %2083 = vmatprep.subr.bf16.mxu0 %v1321
        %2084 = vmatpush1.bf16.msra.mxu0 %v1320
        %2085 = vmatprep.subr.bf16.mxu0 %v1325
        %2086 = vmatpush1.bf16.msra.mxu0 %v1324
        %2087 = vmatprep.subr.bf16.mxu0 %v1329
        %2088 = vmatpush1.bf16.msra.mxu0 %v1328
        %2089 = vmatprep.subr.bf16.mxu0 %v1333
        %2090 = vmatpush1.bf16.msra.mxu0 %v1332
        %2091 = vmatprep.subr.bf16.mxu0 %v1337
        %2092 = vmatpush1.bf16.msra.mxu0 %v1336
        %2093 = vmatprep.subr.bf16.mxu0 %v1341
        %2094 = vmatpush1.bf16.msra.mxu0 %v1340
        %2095 = vmatprep.subr.bf16.mxu0 %v1345
        %2096 = vmatpush1.bf16.msra.mxu0 %v1344
        %2097 = vmatprep.mubr.bf16.mxu0 %v432
        %2098 = vmatmul.mubr.bf16.gmra.mrb[0].mxu0 %v431
        %v2099 = vpop.f32.mrb[0].mxu0
        %v2100 = vadd.f32 %v685, %v2099
        %v2101 = vpop.f32.mrb[0].mxu0
        %v2102 = vadd.f32 %v689, %v2101
        %v2103 = vpop.f32.mrb[0].mxu0
        %v2104 = vadd.f32 %v685, %v2103
        %v2105 = vpop.f32.mrb[0].mxu0
        %v2106 = vadd.f32 %v689, %v2105
        %2107 = vmatprep.mubr.bf16.mxu0 %v439
        %2108 = vmatmul.mubr.bf16.gmra.mrb[0].mxu0 %v438
        %v2109 = vpop.f32.mrb[0].mxu0
        %v2110 = vadd.f32 %v685, %v2109
        %v2111 = vpop.f32.mrb[0].mxu0
        %v2112 = vadd.f32 %v689, %v2111
        %v2113 = vpop.f32.mrb[0].mxu0
        %v2114 = vadd.f32 %v685, %v2113
        %v2115 = vpop.f32.mrb[0].mxu0
        %v2116 = vadd.f32 %v689, %v2115
        %2117 = vmatprep.mubr.bf16.mxu0 %v446
        %2118 = vmatmul.mubr.bf16.gmra.mrb[0].mxu0 %v445
        %v2119 = vpop.f32.mrb[0].mxu0
        %v2120 = vadd.f32 %v685, %v2119
        %v2121 = vpop.f32.mrb[0].mxu0
        %v2122 = vadd.f32 %v689, %v2121
        %v2123 = vpop.f32.mrb[0].mxu0
        %v2124 = vadd.f32 %v685, %v2123
        %v2125 = vpop.f32.mrb[0].mxu0
        %v2126 = vadd.f32 %v689, %v2125
        %2127 = vmatprep.mubr.bf16.mxu0 %v453
        %2128 = vmatmul.mubr.bf16.gmra.mrb[0].mxu0 %v452
        %v2129 = vpop.f32.mrb[0].mxu0
        %v2130 = vadd.f32 %v685, %v2129
        %v2131 = vpop.f32.mrb[0].mxu0
        %v2132 = vadd.f32 %v689, %v2131
        %v2133 = vpop.f32.mrb[0].mxu0
        %v2134 = vadd.f32 %v685, %v2133
        %v2135 = vpop.f32.mrb[0].mxu0
        %v2136 = vadd.f32 %v689, %v2135
        %2137 = vmatprep.mubr.bf16.mxu0 %v460
        %2138 = vmatmul.mubr.bf16.gmra.mrb[0].mxu0 %v459
        %v2139 = vpop.f32.mrb[0].mxu0
        %v2140 = vadd.f32 %v685, %v2139
        %v2141 = vpop.f32.mrb[0].mxu0
        %v2142 = vadd.f32 %v689, %v2141
        %v2143 = vpop.f32.mrb[0].mxu0
        %v2144 = vadd.f32 %v685, %v2143
        %v2145 = vpop.f32.mrb[0].mxu0
        %v2146 = vadd.f32 %v689, %v2145
        %2147 = vmatprep.mubr.bf16.mxu0 %v467
        %2148 = vmatmul.mubr.bf16.gmra.mrb[0].mxu0 %v466
        %v2149 = vpop.f32.mrb[0].mxu0
        %v2150 = vadd.f32 %v685, %v2149
        %v2151 = vpop.f32.mrb[0].mxu0
        %v2152 = vadd.f32 %v689, %v2151
        %v2153 = vpop.f32.mrb[0].mxu0
        %v2154 = vadd.f32 %v685, %v2153
        %v2155 = vpop.f32.mrb[0].mxu0
        %v2156 = vadd.f32 %v689, %v2155
        %2157 = vdwg.mxu0
        %2158 = vmatprep.subr.bf16.mxu0 %v1349
        %2159 = vmatpush1.bf16.msra.mxu0 %v1348
        %2160 = vmatprep.subr.bf16.mxu0 %v1353
        %2161 = vmatpush1.bf16.msra.mxu0 %v1352
        %2162 = vmatprep.subr.bf16.mxu0 %v1357
        %2163 = vmatpush1.bf16.msra.mxu0 %v1356
        %2164 = vmatprep.subr.bf16.mxu0 %v1361
        %2165 = vmatpush1.bf16.msra.mxu0 %v1360
        %2166 = vmatprep.subr.bf16.mxu0 %v1365
        %2167 = vmatpush1.bf16.msra.mxu0 %v1364
        %2168 = vmatprep.subr.bf16.mxu0 %v1369
        %2169 = vmatpush1.bf16.msra.mxu0 %v1368
        %2170 = vmatprep.subr.bf16.mxu0 %v1373
        %2171 = vmatpush1.bf16.msra.mxu0 %v1372
        %2172 = vmatprep.subr.bf16.mxu0 %v1377
        %2173 = vmatpush1.bf16.msra.mxu0 %v1376
        %2174 = vmatprep.subr.bf16.mxu0 %v1381
        %2175 = vmatpush1.bf16.msra.mxu0 %v1380
        %2176 = vmatprep.subr.bf16.mxu0 %v1385
        %2177 = vmatpush1.bf16.msra.mxu0 %v1384
        %2178 = vmatprep.subr.bf16.mxu0 %v1389
        %2179 = vmatpush1.bf16.msra.mxu0 %v1388
        %2180 = vmatprep.subr.bf16.mxu0 %v1393
        %2181 = vmatpush1.bf16.msra.mxu0 %v1392
        %2182 = vmatprep.subr.bf16.mxu0 %v1397
        %2183 = vmatpush1.bf16.msra.mxu0 %v1396
        %2184 = vmatprep.subr.bf16.mxu0 %v1401
        %2185 = vmatpush1.bf16.msra.mxu0 %v1400
        %2186 = vmatprep.subr.bf16.mxu0 %v1405
        %2187 = vmatpush1.bf16.msra.mxu0 %v1404
        %2188 = vmatprep.subr.bf16.mxu0 %v1409
        %2189 = vmatpush1.bf16.msra.mxu0 %v1408
        %2190 = vmatprep.mubr.bf16.mxu0 %v434
        %2191 = vmatmul.mubr.bf16.gmra.mrb[0].mxu0 %v433
        %v2192 = vpop.f32.mrb[0].mxu0
        %v2193 = vadd.f32 %v2100, %v2192
        %v2194 = vpop.f32.mrb[0].mxu0
        %v2195 = vadd.f32 %v2102, %v2194
        %v2196 = vpop.f32.mrb[0].mxu0
        %v2197 = vadd.f32 %v2104, %v2196
        %v2198 = vpop.f32.mrb[0].mxu0
        %v2199 = vadd.f32 %v2106, %v2198
        %2200 = vmatprep.mubr.bf16.mxu0 %v441
        %2201 = vmatmul.mubr.bf16.gmra.mrb[0].mxu0 %v440
        %v2202 = vpop.f32.mrb[0].mxu0
        %v2203 = vadd.f32 %v2110, %v2202
        %v2204 = vpop.f32.mrb[0].mxu0
        %v2205 = vadd.f32 %v2112, %v2204
        %v2206 = vpop.f32.mrb[0].mxu0
        %v2207 = vadd.f32 %v2114, %v2206
        %v2208 = vpop.f32.mrb[0].mxu0
        %v2209 = vadd.f32 %v2116, %v2208
        %2210 = vmatprep.mubr.bf16.mxu0 %v448
        %2211 = vmatmul.mubr.bf16.gmra.mrb[0].mxu0 %v447
        %v2212 = vpop.f32.mrb[0].mxu0
        %v2213 = vadd.f32 %v2120, %v2212
        %v2214 = vpop.f32.mrb[0].mxu0
        %v2215 = vadd.f32 %v2122, %v2214
        %v2216 = vpop.f32.mrb[0].mxu0
        %v2217 = vadd.f32 %v2124, %v2216
        %v2218 = vpop.f32.mrb[0].mxu0
        %v2219 = vadd.f32 %v2126, %v2218
        %2220 = vmatprep.mubr.bf16.mxu0 %v455
        %2221 = vmatmul.mubr.bf16.gmra.mrb[0].mxu0 %v454
        %v2222 = vpop.f32.mrb[0].mxu0
        %v2223 = vadd.f32 %v2130, %v2222
        %v2224 = vpop.f32.mrb[0].mxu0
        %v2225 = vadd.f32 %v2132, %v2224
        %v2226 = vpop.f32.mrb[0].mxu0
        %v2227 = vadd.f32 %v2134, %v2226
        %v2228 = vpop.f32.mrb[0].mxu0
        %v2229 = vadd.f32 %v2136, %v2228
        %2230 = vmatprep.mubr.bf16.mxu0 %v462
        %2231 = vmatmul.mubr.bf16.gmra.mrb[0].mxu0 %v461
        %v2232 = vpop.f32.mrb[0].mxu0
        %v2233 = vadd.f32 %v2140, %v2232
        %v2234 = vpop.f32.mrb[0].mxu0
        %v2235 = vadd.f32 %v2142, %v2234
        %v2236 = vpop.f32.mrb[0].mxu0
        %v2237 = vadd.f32 %v2144, %v2236
        %v2238 = vpop.f32.mrb[0].mxu0
        %v2239 = vadd.f32 %v2146, %v2238
        %2240 = vmatprep.mubr.bf16.mxu0 %v469
        %2241 = vmatmul.mubr.bf16.gmra.mrb[0].mxu0 %v468
        %v2242 = vpop.f32.mrb[0].mxu0
        %v2243 = vadd.f32 %v2150, %v2242
        %v2244 = vpop.f32.mrb[0].mxu0
        %v2245 = vadd.f32 %v2152, %v2244
        %v2246 = vpop.f32.mrb[0].mxu0
        %v2247 = vadd.f32 %v2154, %v2246
        %v2248 = vpop.f32.mrb[0].mxu0
        %v2249 = vadd.f32 %v2156, %v2248
        %2250 = vdwg.mxu0
        %2251 = vmatprep.subr.bf16.mxu0 %v1413
        %2252 = vmatpush1.bf16.msra.mxu0 %v1412
        %2253 = vmatprep.subr.bf16.mxu0 %v1417
        %2254 = vmatpush1.bf16.msra.mxu0 %v1416
        %2255 = vmatprep.subr.bf16.mxu0 %v1421
        %2256 = vmatpush1.bf16.msra.mxu0 %v1420
        %2257 = vmatprep.subr.bf16.mxu0 %v1425
        %2258 = vmatpush1.bf16.msra.mxu0 %v1424
        %2259 = vmatprep.subr.bf16.mxu0 %v1429
        %2260 = vmatpush1.bf16.msra.mxu0 %v1428
        %2261 = vmatprep.subr.bf16.mxu0 %v1433
        %2262 = vmatpush1.bf16.msra.mxu0 %v1432
        %2263 = vmatprep.subr.bf16.mxu0 %v1437
        %2264 = vmatpush1.bf16.msra.mxu0 %v1436
        %2265 = vmatprep.subr.bf16.mxu0 %v1441
        %2266 = vmatpush1.bf16.msra.mxu0 %v1440
        %2267 = vmatprep.subr.bf16.mxu0 %v1445
        %2268 = vmatpush1.bf16.msra.mxu0 %v1444
        %2269 = vmatprep.subr.bf16.mxu0 %v1449
        %2270 = vmatpush1.bf16.msra.mxu0 %v1448
        %2271 = vmatprep.subr.bf16.mxu0 %v1453
        %2272 = vmatpush1.bf16.msra.mxu0 %v1452
        %2273 = vmatprep.subr.bf16.mxu0 %v1457
        %2274 = vmatpush1.bf16.msra.mxu0 %v1456
        %2275 = vmatprep.subr.bf16.mxu0 %v1461
        %2276 = vmatpush1.bf16.msra.mxu0 %v1460
        %2277 = vmatprep.subr.bf16.mxu0 %v1465
        %2278 = vmatpush1.bf16.msra.mxu0 %v1464
        %2279 = vmatprep.subr.bf16.mxu0 %v1469
        %2280 = vmatpush1.bf16.msra.mxu0 %v1468
        %2281 = vmatprep.subr.bf16.mxu0 %v1473
        %2282 = vmatpush1.bf16.msra.mxu0 %v1472
        %2283 = vmatprep.mubr.bf16.mxu0 %v436
        %2284 = vmatmul.mubr.bf16.gmra.mrb[0].mxu0 %v435
        %v2285 = vpop.f32.mrb[0].mxu0
        %v2286 = vadd.f32 %v2193, %v2285
        %v2287 = vpop.f32.mrb[0].mxu0
        %v2288 = vadd.f32 %v2195, %v2287
        %v2289 = vpop.f32.mrb[0].mxu0
        %v2290 = vadd.f32 %v2197, %v2289
        %v2291 = vpop.f32.mrb[0].mxu0
        %v2292 = vadd.f32 %v2199, %v2291
        %2293 = vmatprep.mubr.bf16.mxu0 %v443
        %2294 = vmatmul.mubr.bf16.gmra.mrb[0].mxu0 %v442
        %v2295 = vpop.f32.mrb[0].mxu0
        %v2296 = vadd.f32 %v2203, %v2295
        %v2297 = vpop.f32.mrb[0].mxu0
        %v2298 = vadd.f32 %v2205, %v2297
        %v2299 = vpop.f32.mrb[0].mxu0
        %v2300 = vadd.f32 %v2207, %v2299
        %v2301 = vpop.f32.mrb[0].mxu0
        %v2302 = vadd.f32 %v2209, %v2301
        %2303 = vmatprep.mubr.bf16.mxu0 %v450
        %2304 = vmatmul.mubr.bf16.gmra.mrb[0].mxu0 %v449
        %v2305 = vpop.f32.mrb[0].mxu0
        %v2306 = vadd.f32 %v2213, %v2305
        %v2307 = vpop.f32.mrb[0].mxu0
        %v2308 = vadd.f32 %v2215, %v2307
        %v2309 = vpop.f32.mrb[0].mxu0
        %v2310 = vadd.f32 %v2217, %v2309
        %v2311 = vpop.f32.mrb[0].mxu0
        %v2312 = vadd.f32 %v2219, %v2311
        %2313 = vmatprep.mubr.bf16.mxu0 %v457
        %2314 = vmatmul.mubr.bf16.gmra.mrb[0].mxu0 %v456
        %v2315 = vpop.f32.mrb[0].mxu0
        %v2316 = vadd.f32 %v2223, %v2315
        %v2317 = vpop.f32.mrb[0].mxu0
        %v2318 = vadd.f32 %v2225, %v2317
        %v2319 = vpop.f32.mrb[0].mxu0
        %v2320 = vadd.f32 %v2227, %v2319
        %v2321 = vpop.f32.mrb[0].mxu0
        %v2322 = vadd.f32 %v2229, %v2321
        %2323 = vmatprep.mubr.bf16.mxu0 %v464
        %2324 = vmatmul.mubr.bf16.gmra.mrb[0].mxu0 %v463
        %v2325 = vpop.f32.mrb[0].mxu0
        %v2326 = vadd.f32 %v2233, %v2325
        %v2327 = vpop.f32.mrb[0].mxu0
        %v2328 = vadd.f32 %v2235, %v2327
        %v2329 = vpop.f32.mrb[0].mxu0
        %v2330 = vadd.f32 %v2237, %v2329
        %v2331 = vpop.f32.mrb[0].mxu0
        %v2332 = vadd.f32 %v2239, %v2331
        %2333 = vmatprep.mubr.bf16.mxu0 %v471
        %2334 = vmatmul.mubr.bf16.gmra.mrb[0].mxu0 %v470
        %v2335 = vpop.f32.mrb[0].mxu0
        %v2336 = vadd.f32 %v2243, %v2335
        %v2337 = vpop.f32.mrb[0].mxu0
        %v2338 = vadd.f32 %v2245, %v2337
        %v2339 = vpop.f32.mrb[0].mxu0
        %v2340 = vadd.f32 %v2247, %v2339
        %v2341 = vpop.f32.mrb[0].mxu0
        %v2342 = vadd.f32 %v2249, %v2341
        %2343 = vdwg.mxu0
        %2344 = vmatprep.subr.bf16.mxu0 %v1477
        %2345 = vmatpush1.bf16.msra.mxu0 %v1476
        %2346 = vmatprep.subr.bf16.mxu0 0
        %2347 = vmatpush1.bf16.msra.mxu0 0
        %2348 = vmatprep.subr.bf16.mxu0 0
        %2349 = vmatpush1.bf16.msra.mxu0 0
        %2350 = vmatprep.subr.bf16.mxu0 0
        %2351 = vmatpush1.bf16.msra.mxu0 0
        %2352 = vmatprep.subr.bf16.mxu0 0
        %2353 = vmatpush1.bf16.msra.mxu0 0
        %2354 = vmatprep.subr.bf16.mxu0 0
        %2355 = vmatpush1.bf16.msra.mxu0 0
        %2356 = vmatprep.subr.bf16.mxu0 0
        %2357 = vmatpush1.bf16.msra.mxu0 0
        %2358 = vmatprep.subr.bf16.mxu0 0
        %2359 = vmatpush1.bf16.msra.mxu0 0
        %2360 = vmatprep.subr.bf16.mxu0 0
        %2361 = vmatpush1.bf16.msra.mxu0 0
        %2362 = vmatprep.subr.bf16.mxu0 0
        %2363 = vmatpush1.bf16.msra.mxu0 0
        %2364 = vmatprep.subr.bf16.mxu0 0
        %2365 = vmatpush1.bf16.msra.mxu0 0
        %2366 = vmatprep.subr.bf16.mxu0 0
        %2367 = vmatpush1.bf16.msra.mxu0 0
        %2368 = vmatprep.subr.bf16.mxu0 0
        %2369 = vmatpush1.bf16.msra.mxu0 0
        %2370 = vmatprep.subr.bf16.mxu0 0
        %2371 = vmatpush1.bf16.msra.mxu0 0
        %2372 = vmatprep.subr.bf16.mxu0 0
        %2373 = vmatpush1.bf16.msra.mxu0 0
        %2374 = vmatprep.subr.bf16.mxu0 0
        %2375 = vmatpush1.bf16.msra.mxu0 0
        %2376 = vmatprep.mubr.bf16.mxu0 0
        %2377 = vmatmul.mubr.bf16.gmra.mrb[0].mxu0 %v1676
        %v2378 = vpop.f32.mrb[0].mxu0
        %v2379 = vadd.f32 %v2286, %v2378
        %v2380 = vpop.f32.mrb[0].mxu0
        %v2381 = vadd.f32 %v2288, %v2380
        %v2382 = vpop.f32.mrb[0].mxu0
        %v2383 = vadd.f32 %v2290, %v2382
        %v2384 = vpop.f32.mrb[0].mxu0
        %v2385 = vadd.f32 %v2292, %v2384
        %2386 = vmatprep.mubr.bf16.mxu0 0
        %2387 = vmatmul.mubr.bf16.gmra.mrb[0].mxu0 %v1679
        %v2388 = vpop.f32.mrb[0].mxu0
        %v2389 = vadd.f32 %v2296, %v2388
        %v2390 = vpop.f32.mrb[0].mxu0
        %v2391 = vadd.f32 %v2298, %v2390
        %v2392 = vpop.f32.mrb[0].mxu0
        %v2393 = vadd.f32 %v2300, %v2392
        %v2394 = vpop.f32.mrb[0].mxu0
        %v2395 = vadd.f32 %v2302, %v2394
        %2396 = vmatprep.mubr.bf16.mxu0 0
        %2397 = vmatmul.mubr.bf16.gmra.mrb[0].mxu0 %v1682
        %v2398 = vpop.f32.mrb[0].mxu0
        %v2399 = vadd.f32 %v2306, %v2398
        %v2400 = vpop.f32.mrb[0].mxu0
        %v2401 = vadd.f32 %v2308, %v2400
        %v2402 = vpop.f32.mrb[0].mxu0
        %v2403 = vadd.f32 %v2310, %v2402
        %v2404 = vpop.f32.mrb[0].mxu0
        %v2405 = vadd.f32 %v2312, %v2404
        %2406 = vmatprep.mubr.bf16.mxu0 0
        %2407 = vmatmul.mubr.bf16.gmra.mrb[0].mxu0 %v1685
        %v2408 = vpop.f32.mrb[0].mxu0
        %v2409 = vadd.f32 %v2316, %v2408
        %v2410 = vpop.f32.mrb[0].mxu0
        %v2411 = vadd.f32 %v2318, %v2410
        %v2412 = vpop.f32.mrb[0].mxu0
        %v2413 = vadd.f32 %v2320, %v2412
        %v2414 = vpop.f32.mrb[0].mxu0
        %v2415 = vadd.f32 %v2322, %v2414
        %2416 = vmatprep.mubr.bf16.mxu0 0
        %2417 = vmatmul.mubr.bf16.gmra.mrb[0].mxu0 %v1688
        %v2418 = vpop.f32.mrb[0].mxu0
        %v2419 = vadd.f32 %v2326, %v2418
        %v2420 = vpop.f32.mrb[0].mxu0
        %v2421 = vadd.f32 %v2328, %v2420
        %v2422 = vpop.f32.mrb[0].mxu0
        %v2423 = vadd.f32 %v2330, %v2422
        %v2424 = vpop.f32.mrb[0].mxu0
        %v2425 = vadd.f32 %v2332, %v2424
        %2426 = vmatprep.mubr.bf16.mxu0 0
        %2427 = vmatmul.mubr.bf16.gmra.mrb[0].mxu0 %v1691
        %v2428 = vpop.f32.mrb[0].mxu0
        %v2429 = vadd.f32 %v2336, %v2428
        %v2430 = vpop.f32.mrb[0].mxu0
        %v2431 = vadd.f32 %v2338, %v2430
        %v2432 = vpop.f32.mrb[0].mxu0
        %v2433 = vadd.f32 %v2340, %v2432
        %v2434 = vpop.f32.mrb[0].mxu0
        %v2435 = vadd.f32 %v2342, %v2434
        %2436 = vdwg.mxu0
        %v2437 = vmax.f32 %v2007, 0.0
        %v2438 = vmax.f32 %v2009, 0.0
        %v2439 = vmax.f32 %v2379, 0.0
        %v2440 = vmax.f32 %v2381, 0.0
        %v2441 = vmax.f32 %v2011, 0.0
        %v2442 = vmax.f32 %v2013, 0.0
        %v2443 = vmax.f32 %v2383, 0.0
        %v2444 = vmax.f32 %v2385, 0.0
        %v2445 = vmax.f32 %v2017, 0.0
        %v2446 = vmax.f32 %v2019, 0.0
        %v2447 = vmax.f32 %v2389, 0.0
        %v2448 = vmax.f32 %v2391, 0.0
        %v2449 = vmax.f32 %v2021, 0.0
        %v2450 = vmax.f32 %v2023, 0.0
        %v2451 = vmax.f32 %v2393, 0.0
        %v2452 = vmax.f32 %v2395, 0.0
        %v2453 = vmax.f32 %v2027, 0.0
        %v2454 = vmax.f32 %v2029, 0.0
        %v2455 = vmax.f32 %v2399, 0.0
        %v2456 = vmax.f32 %v2401, 0.0
        %v2457 = vmax.f32 %v2031, 0.0
        %v2458 = vmax.f32 %v2033, 0.0
        %v2459 = vmax.f32 %v2403, 0.0
        %v2460 = vmax.f32 %v2405, 0.0
        %v2461 = vmax.f32 %v2037, 0.0
        %v2462 = vmax.f32 %v2039, 0.0
        %v2463 = vmax.f32 %v2409, 0.0
        %v2464 = vmax.f32 %v2411, 0.0
        %v2465 = vmax.f32 %v2041, 0.0
        %v2466 = vmax.f32 %v2043, 0.0
        %v2467 = vmax.f32 %v2413, 0.0
        %v2468 = vmax.f32 %v2415, 0.0
        %v2469 = vmax.f32 %v2047, 0.0
        %v2470 = vmax.f32 %v2049, 0.0
        %v2471 = vmax.f32 %v2419, 0.0
        %v2472 = vmax.f32 %v2421, 0.0
        %v2473 = vmax.f32 %v2051, 0.0
        %v2474 = vmax.f32 %v2053, 0.0
        %v2475 = vmax.f32 %v2423, 0.0
        %v2476 = vmax.f32 %v2425, 0.0
        %v2477 = vmax.f32 %v2057, 0.0
        %v2478 = vmax.f32 %v2059, 0.0
        %v2479 = vmax.f32 %v2429, 0.0
        %v2480 = vmax.f32 %v2431, 0.0
        %v2481 = vmax.f32 %v2061, 0.0
        %v2482 = vmax.f32 %v2063, 0.0
        %v2483 = vmax.f32 %v2433, 0.0
        %v2484 = vmax.f32 %v2435, 0.0
        %v2485 = vpack.c.bf16 %v2441, %v2437
        %v2486 = vpack.c.bf16 %v2442, %v2438
        %v2487 = vpack.c.bf16 %v2443, %v2439
        %v2488 = vpack.c.bf16 %v2444, %v2440
        %v2489 = vpack.c.bf16 %v2449, %v2445
        %v2490 = vpack.c.bf16 %v2450, %v2446
        %v2491 = vpack.c.bf16 %v2451, %v2447
        %v2492 = vpack.c.bf16 %v2452, %v2448
        %v2493 = vpack.c.bf16 %v2457, %v2453
        %v2494 = vpack.c.bf16 %v2458, %v2454
        %v2495 = vpack.c.bf16 %v2459, %v2455
        %v2496 = vpack.c.bf16 %v2460, %v2456
        %v2497 = vpack.c.bf16 %v2465, %v2461
        %v2498 = vpack.c.bf16 %v2466, %v2462
        %v2499 = vpack.c.bf16 %v2467, %v2463
        %v2500 = vpack.c.bf16 %v2468, %v2464
        %v2501 = vpack.c.bf16 %v2473, %v2469
        %v2502 = vpack.c.bf16 %v2474, %v2470
        %v2503 = vpack.c.bf16 %v2475, %v2471
        %v2504 = vpack.c.bf16 %v2476, %v2472
        %v2505 = vpack.c.bf16 %v2481, %v2477
        %v2506 = vpack.c.bf16 %v2482, %v2478
        %v2507 = vpack.c.bf16 %v2483, %v2479
        %v2508 = vpack.c.bf16 %v2484, %v2480
        %v2509 = vld [vmem:[%s3] sm:$0xf]
        %v2510 = vld [vmem:[%s3 + $0x4] sm:$0xf]
        %v2511 = vld [vmem:[%s3 + $0x8] sm:$0xf]
        %v2512 = vld [vmem:[%s3 + $0xc] sm:$0xf]
        %v2513 = vld [vmem:[%s3 + $0x10] sm:$0xf]
        %v2514 = vld [vmem:[%s3 + $0x14] sm:$0xf]
        %v2515 = vld [vmem:[%s3 + $0x18] sm:$0xf]
        %v2516 = vld [vmem:[%s3 + $0x1c] sm:$0xf]
        %v2517 = vld [vmem:[%s3 + $0x20] sm:$0xf]
        %v2518 = vld [vmem:[%s3 + $0x24] sm:$0xf]
        %v2519 = vld [vmem:[%s3 + $0x28] sm:$0xf]
        %v2520 = vld [vmem:[%s3 + $0x2c] sm:$0xf]
        %v2521 = vld [vmem:[%s3 + $0x30] sm:$0xf]
        %v2522 = vld [vmem:[%s3 + $0x34] sm:$0xf]
        %v2523 = vld [vmem:[%s3 + $0x38] sm:$0xf]
        %v2524 = vld [vmem:[%s3 + $0x3c] sm:$0xf]
        %v2525 = vld [vmem:[%s3 + $0x40] sm:$0xf]
        %v2526 = vld [vmem:[%s3 + $0x44] sm:$0xf]
        %v2527 = vld [vmem:[%s3 + $0x48] sm:$0xf]
        %v2528 = vld [vmem:[%s3 + $0x4c] sm:$0xf]
        %v2529 = vld [vmem:[%s3 + $0x50] sm:$0xf]
        %v2530 = vld [vmem:[%s3 + $0x54] sm:$0xf]
        %v2531 = vld [vmem:[%s3 + $0x58] sm:$0xf]
        %v2532 = vld [vmem:[%s3 + $0x5c] sm:$0xf]
        %v2533 = vld [vmem:[%s3 + $0x60] sm:$0xf]
        %v2534 = vld [vmem:[%s3 + $0x64] sm:$0xf]
        %v2535 = vld [vmem:[%s3 + $0x68] sm:$0xf]
        %v2536 = vld [vmem:[%s3 + $0x6c] sm:$0xf]
        %v2537 = vld [vmem:[%s3 + $0x70] sm:$0xf]
        %v2538 = vld [vmem:[%s3 + $0x74] sm:$0xf]
        %v2539 = vld [vmem:[%s3 + $0x78] sm:$0xf]
        %v2540 = vld [vmem:[%s3 + $0x7c] sm:$0xf]
        %v2541 = vld [vmem:[%s3 + $0x80] sm:$0xf]
        %v2542 = vld [vmem:[%s3 + $0x84] sm:$0xf]
        %v2543 = vld [vmem:[%s3 + $0x88] sm:$0xf]
        %v2544 = vld [vmem:[%s3 + $0x8c] sm:$0xf]
        %v2545 = vld [vmem:[%s3 + $0x90] sm:$0xf]
        %v2546 = vld [vmem:[%s3 + $0x94] sm:$0xf]
        %v2547 = vld [vmem:[%s3 + $0x98] sm:$0xf]
        %v2548 = vld [vmem:[%s3 + $0x9c] sm:$0xf]
        %v2549 = vld [vmem:[%s3 + $0xa0] sm:$0xf]
        %v2550 = vld [vmem:[%s3 + $0xa4] sm:$0xf]
        %v2551 = vld [vmem:[%s3 + $0xa8] sm:$0xf]
        %v2552 = vld [vmem:[%s3 + $0xac] sm:$0xf]
        %v2553 = vld [vmem:[%s3 + $0xb0] sm:$0xf]
        %v2554 = vld [vmem:[%s3 + $0xb4] sm:$0xf]
        %v2555 = vld [vmem:[%s3 + $0xb8] sm:$0xf]
        %v2556 = vld [vmem:[%s3 + $0xbc] sm:$0xf]
        %v2557 = vld [vmem:[%s3 + $0xc0] sm:$0xf]
        %v2558 = vld [vmem:[%s3 + $0xc4] sm:$0xf]
        %v2560 = vlaneseq
        %v2561 = vshrl.u32 %v2560, 7
        %v2562 = vsub.s32 0, %v2561
        %v2563 = vrot.slane %v474, %v2562
        %v2615 = vunpack.c.l.b16 %v2509
        %v2616 = vunpack.c.l.b16 %v2510
        %v2617 = vunpack.c.l.b16 %v2511
        %v2618 = vunpack.c.l.b16 %v2512
        %v2619 = vunpack.c.l.b16 %v2513
        %v2620 = vunpack.c.l.b16 %v2514
        %v2621 = vunpack.c.l.b16 %v2515
        %v2622 = vunpack.c.l.b16 %v2516
        %v2623 = vunpack.c.l.b16 %v2517
        %v2624 = vunpack.c.l.b16 %v2518
        %v2625 = vunpack.c.l.b16 %v2519
        %v2626 = vunpack.c.l.b16 %v2520
        %v2627 = vunpack.c.l.b16 %v2521
        %v2628 = vunpack.c.l.b16 %v2522
        %v2629 = vunpack.c.l.b16 %v2523
        %v2630 = vunpack.c.l.b16 %v2524
        %v2631 = vunpack.c.l.b16 %v2525
        %v2632 = vunpack.c.l.b16 %v2526
        %v2633 = vunpack.c.l.b16 %v2527
        %v2634 = vunpack.c.l.b16 %v2528
        %v2635 = vunpack.c.l.b16 %v2529
        %v2636 = vunpack.c.l.b16 %v2530
        %v2637 = vunpack.c.l.b16 %v2531
        %v2638 = vunpack.c.l.b16 %v2532
        %v2639 = vunpack.c.l.b16 %v2533
        %v2640 = vunpack.c.l.b16 %v2534
        %v2641 = vunpack.c.l.b16 %v2535
        %v2642 = vunpack.c.l.b16 %v2536
        %v2643 = vunpack.c.l.b16 %v2537
        %v2644 = vunpack.c.l.b16 %v2538
        %v2645 = vunpack.c.l.b16 %v2539
        %v2646 = vunpack.c.l.b16 %v2540
        %v2647 = vunpack.c.l.b16 %v2541
        %v2648 = vunpack.c.l.b16 %v2542
        %v2649 = vunpack.c.l.b16 %v2543
        %v2650 = vunpack.c.l.b16 %v2544
        %v2651 = vunpack.c.l.b16 %v2545
        %v2652 = vunpack.c.l.b16 %v2546
        %v2653 = vunpack.c.l.b16 %v2547
        %v2654 = vunpack.c.l.b16 %v2548
        %v2655 = vunpack.c.l.b16 %v2549
        %v2656 = vunpack.c.l.b16 %v2550
        %v2657 = vunpack.c.l.b16 %v2551
        %v2658 = vunpack.c.l.b16 %v2552
        %v2659 = vunpack.c.l.b16 %v2553
        %v2660 = vunpack.c.l.b16 %v2554
        %v2661 = vunpack.c.l.b16 %v2555
        %v2662 = vunpack.c.l.b16 %v2556
        %v2663 = vunpack.c.l.b16 %v2557
        %v2664 = vunpack.c.l.b16 %v2558
        %v2665 = vpack.c.b16 %v2616, %v2615
        %v2666 = vpack.c.b16 %v2618, %v2617
        %v2667 = vpack.c.b16 %v2620, %v2619
        %v2668 = vpack.c.b16 %v2622, %v2621
        %v2669 = vpack.c.b16 %v2624, %v2623
        %v2670 = vpack.c.b16 %v2626, %v2625
        %v2671 = vpack.c.b16 %v2628, %v2627
        %v2672 = vpack.c.b16 %v2630, %v2629
        %v2673 = vpack.c.b16 %v2632, %v2631
        %v2674 = vpack.c.b16 %v2634, %v2633
        %v2675 = vpack.c.b16 %v2636, %v2635
        %v2676 = vpack.c.b16 %v2638, %v2637
        %v2677 = vpack.c.b16 %v2640, %v2639
        %v2678 = vpack.c.b16 %v2642, %v2641
        %v2679 = vpack.c.b16 %v2644, %v2643
        %v2680 = vpack.c.b16 %v2646, %v2645
        %v2681 = vpack.c.b16 %v2648, %v2647
        %v2682 = vpack.c.b16 %v2650, %v2649
        %v2683 = vpack.c.b16 %v2652, %v2651
        %v2684 = vpack.c.b16 %v2654, %v2653
        %v2685 = vpack.c.b16 %v2656, %v2655
        %v2686 = vpack.c.b16 %v2658, %v2657
        %v2687 = vpack.c.b16 %v2660, %v2659
        %v2688 = vpack.c.b16 %v2662, %v2661
        %v2689 = vpack.c.b16 %v2664, %v2663
        %v2716 = vsel %vm1674, %v2488, 0
        %v2719 = vsel %vm1674, %v2492, 0
        %v2722 = vsel %vm1674, %v2496, 0
        %v2725 = vsel %vm1674, %v2500, 0
        %v2728 = vsel %vm1674, %v2504, 0
        %v2731 = vsel %vm1674, %v2508, 0
        %2733 = vmatprep.subr.bf16.mxu0 0
        %2734 = vmatpush1.bf16.msra.mxu0 %v2665
        %2735 = vmatprep.subr.bf16.mxu0 0
        %2736 = vmatpush1.bf16.msra.mxu0 %v2666
        %2737 = vmatprep.subr.bf16.mxu0 0
        %2738 = vmatpush1.bf16.msra.mxu0 %v2667
        %2739 = vmatprep.subr.bf16.mxu0 0
        %2740 = vmatpush1.bf16.msra.mxu0 %v2668
        %2741 = vmatprep.subr.bf16.mxu0 0
        %2742 = vmatpush1.bf16.msra.mxu0 %v2669
        %2743 = vmatprep.subr.bf16.mxu0 0
        %2744 = vmatpush1.bf16.msra.mxu0 %v2670
        %2745 = vmatprep.subr.bf16.mxu0 0
        %2746 = vmatpush1.bf16.msra.mxu0 %v2671
        %2747 = vmatprep.subr.bf16.mxu0 0
        %2748 = vmatpush1.bf16.msra.mxu0 %v2672
        %2749 = vmatprep.subr.bf16.mxu0 0
        %2750 = vmatpush1.bf16.msra.mxu0 %v2673
        %2751 = vmatprep.subr.bf16.mxu0 0
        %2752 = vmatpush1.bf16.msra.mxu0 %v2674
        %2753 = vmatprep.subr.bf16.mxu0 0
        %2754 = vmatpush1.bf16.msra.mxu0 %v2675
        %2755 = vmatprep.subr.bf16.mxu0 0
        %2756 = vmatpush1.bf16.msra.mxu0 %v2676
        %2757 = vmatprep.subr.bf16.mxu0 0
        %2758 = vmatpush1.bf16.msra.mxu0 %v2677
        %2759 = vmatprep.subr.bf16.mxu0 0
        %2760 = vmatpush1.bf16.msra.mxu0 %v2678
        %2761 = vmatprep.subr.bf16.mxu0 0
        %2762 = vmatpush1.bf16.msra.mxu0 %v2679
        %2763 = vmatprep.subr.bf16.mxu0 0
        %2764 = vmatpush1.bf16.msra.mxu0 %v2680
        %2765 = vmatprep.mubr.bf16.mxu0 %v2486
        %2766 = vmatmul.mubr.bf16.gmra.mrb[0].mxu0 %v2485
        %v2767 = vpop.f32.mrb[0].mxu0
        %v2768 = vadd.f32 %v2563, %v2767
        %v2769 = vpop.f32.mrb[0].mxu0
        %v2770 = vpop.f32.mrb[0].mxu0
        %v2771 = vadd.f32 %v2563, %v2770
        %v2772 = vpop.f32.mrb[0].mxu0
        %2773 = vmatprep.mubr.bf16.mxu0 %v2490
        %2774 = vmatmul.mubr.bf16.gmra.mrb[0].mxu0 %v2489
        %v2775 = vpop.f32.mrb[0].mxu0
        %v2776 = vadd.f32 %v2563, %v2775
        %v2777 = vpop.f32.mrb[0].mxu0
        %v2778 = vpop.f32.mrb[0].mxu0
        %v2779 = vadd.f32 %v2563, %v2778
        %v2780 = vpop.f32.mrb[0].mxu0
        %2781 = vmatprep.mubr.bf16.mxu0 %v2494
        %2782 = vmatmul.mubr.bf16.gmra.mrb[0].mxu0 %v2493
        %v2783 = vpop.f32.mrb[0].mxu0
        %v2784 = vadd.f32 %v2563, %v2783
        %v2785 = vpop.f32.mrb[0].mxu0
        %v2786 = vpop.f32.mrb[0].mxu0
        %v2787 = vadd.f32 %v2563, %v2786
        %v2788 = vpop.f32.mrb[0].mxu0
        %2789 = vmatprep.mubr.bf16.mxu0 %v2498
        %2790 = vmatmul.mubr.bf16.gmra.mrb[0].mxu0 %v2497
        %v2791 = vpop.f32.mrb[0].mxu0
        %v2792 = vadd.f32 %v2563, %v2791
        %v2793 = vpop.f32.mrb[0].mxu0
        %v2794 = vpop.f32.mrb[0].mxu0
        %v2795 = vadd.f32 %v2563, %v2794
        %v2796 = vpop.f32.mrb[0].mxu0
        %2797 = vmatprep.mubr.bf16.mxu0 %v2502
        %2798 = vmatmul.mubr.bf16.gmra.mrb[0].mxu0 %v2501
        %v2799 = vpop.f32.mrb[0].mxu0
        %v2800 = vadd.f32 %v2563, %v2799
        %v2801 = vpop.f32.mrb[0].mxu0
        %v2802 = vpop.f32.mrb[0].mxu0
        %v2803 = vadd.f32 %v2563, %v2802
        %v2804 = vpop.f32.mrb[0].mxu0
        %2805 = vmatprep.mubr.bf16.mxu0 %v2506
        %2806 = vmatmul.mubr.bf16.gmra.mrb[0].mxu0 %v2505
        %v2807 = vpop.f32.mrb[0].mxu0
        %v2808 = vadd.f32 %v2563, %v2807
        %v2809 = vpop.f32.mrb[0].mxu0
        %v2810 = vpop.f32.mrb[0].mxu0
        %v2811 = vadd.f32 %v2563, %v2810
        %v2812 = vpop.f32.mrb[0].mxu0
        %2813 = vdwg.mxu0
        %2814 = vmatprep.subr.bf16.mxu0 0
        %2815 = vmatpush1.bf16.msra.mxu0 %v2681
        %2816 = vmatprep.subr.bf16.mxu0 0
        %2817 = vmatpush1.bf16.msra.mxu0 %v2682
        %2818 = vmatprep.subr.bf16.mxu0 0
        %2819 = vmatpush1.bf16.msra.mxu0 %v2683
        %2820 = vmatprep.subr.bf16.mxu0 0
        %2821 = vmatpush1.bf16.msra.mxu0 %v2684
        %2822 = vmatprep.subr.bf16.mxu0 0
        %2823 = vmatpush1.bf16.msra.mxu0 %v2685
        %2824 = vmatprep.subr.bf16.mxu0 0
        %2825 = vmatpush1.bf16.msra.mxu0 %v2686
        %2826 = vmatprep.subr.bf16.mxu0 0
        %2827 = vmatpush1.bf16.msra.mxu0 %v2687
        %2828 = vmatprep.subr.bf16.mxu0 0
        %2829 = vmatpush1.bf16.msra.mxu0 %v2688
        %2830 = vmatprep.subr.bf16.mxu0 0
        %2831 = vmatpush1.bf16.msra.mxu0 %v2689
        %2832 = vmatprep.subr.bf16.mxu0 0
        %2833 = vmatpush1.bf16.msra.mxu0 0
        %2834 = vmatprep.subr.bf16.mxu0 0
        %2835 = vmatpush1.bf16.msra.mxu0 0
        %2836 = vmatprep.subr.bf16.mxu0 0
        %2837 = vmatpush1.bf16.msra.mxu0 0
        %2838 = vmatprep.subr.bf16.mxu0 0
        %2839 = vmatpush1.bf16.msra.mxu0 0
        %2840 = vmatprep.subr.bf16.mxu0 0
        %2841 = vmatpush1.bf16.msra.mxu0 0
        %2842 = vmatprep.subr.bf16.mxu0 0
        %2843 = vmatpush1.bf16.msra.mxu0 0
        %2844 = vmatprep.subr.bf16.mxu0 0
        %2845 = vmatpush1.bf16.msra.mxu0 0
        %2846 = vmatprep.mubr.bf16.mxu0 %v2716
        %2847 = vmatmul.mubr.bf16.gmra.mrb[0].mxu0 %v2487
        %v2848 = vpop.f32.mrb[0].mxu0
        %v2849 = vadd.f32 %v2768, %v2848
        %v2850 = vpop.f32.mrb[0].mxu0
        %v2851 = vpop.f32.mrb[0].mxu0
        %v2852 = vadd.f32 %v2771, %v2851
        %v2853 = vpop.f32.mrb[0].mxu0
        %2854 = vmatprep.mubr.bf16.mxu0 %v2719
        %2855 = vmatmul.mubr.bf16.gmra.mrb[0].mxu0 %v2491
        %v2856 = vpop.f32.mrb[0].mxu0
        %v2857 = vadd.f32 %v2776, %v2856
        %v2858 = vpop.f32.mrb[0].mxu0
        %v2859 = vpop.f32.mrb[0].mxu0
        %v2860 = vadd.f32 %v2779, %v2859
        %v2861 = vpop.f32.mrb[0].mxu0
        %2862 = vmatprep.mubr.bf16.mxu0 %v2722
        %2863 = vmatmul.mubr.bf16.gmra.mrb[0].mxu0 %v2495
        %v2864 = vpop.f32.mrb[0].mxu0
        %v2865 = vadd.f32 %v2784, %v2864
        %v2866 = vpop.f32.mrb[0].mxu0
        %v2867 = vpop.f32.mrb[0].mxu0
        %v2868 = vadd.f32 %v2787, %v2867
        %v2869 = vpop.f32.mrb[0].mxu0
        %2870 = vmatprep.mubr.bf16.mxu0 %v2725
        %2871 = vmatmul.mubr.bf16.gmra.mrb[0].mxu0 %v2499
        %v2872 = vpop.f32.mrb[0].mxu0
        %v2873 = vadd.f32 %v2792, %v2872
        %v2874 = vpop.f32.mrb[0].mxu0
        %v2875 = vpop.f32.mrb[0].mxu0
        %v2876 = vadd.f32 %v2795, %v2875
        %v2877 = vpop.f32.mrb[0].mxu0
        %2878 = vmatprep.mubr.bf16.mxu0 %v2728
        %2879 = vmatmul.mubr.bf16.gmra.mrb[0].mxu0 %v2503
        %v2880 = vpop.f32.mrb[0].mxu0
        %v2881 = vadd.f32 %v2800, %v2880
        %v2882 = vpop.f32.mrb[0].mxu0
        %v2883 = vpop.f32.mrb[0].mxu0
        %v2884 = vadd.f32 %v2803, %v2883
        %v2885 = vpop.f32.mrb[0].mxu0
        %2886 = vmatprep.mubr.bf16.mxu0 %v2731
        %2887 = vmatmul.mubr.bf16.gmra.mrb[0].mxu0 %v2507
        %v2888 = vpop.f32.mrb[0].mxu0
        %v2889 = vadd.f32 %v2808, %v2888
        %v2890 = vpop.f32.mrb[0].mxu0
        %v2891 = vpop.f32.mrb[0].mxu0
        %v2892 = vadd.f32 %v2811, %v2891
        %v2893 = vpop.f32.mrb[0].mxu0
        %2894 = vdwg.mxu0
        %v2895 = vmul.f32 %v2849, 0.5
        %v2896 = vmul.f32 %v2852, 0.5
        %v2897 = vmul.f32 %v2857, 0.5
        %v2898 = vmul.f32 %v2860, 0.5
        %v2899 = vmul.f32 %v2865, 0.5
        %v2900 = vmul.f32 %v2868, 0.5
        %v2901 = vmul.f32 %v2873, 0.5
        %v2902 = vmul.f32 %v2876, 0.5
        %v2903 = vmul.f32 %v2881, 0.5
        %v2904 = vmul.f32 %v2884, 0.5
        %v2905 = vmul.f32 %v2889, 0.5
        %v2906 = vmul.f32 %v2892, 0.5
        %v2907 = vmul.f32 %v2895, 1.442695
        %v2908 = vpow.pop %v2907
        %v2909 = vmul.f32 %v2896, 1.442695
        %v2910 = vpow.pop %v2909
        %v2911 = vmul.f32 %v2897, 1.442695
        %v2912 = vpow.pop %v2911
        %v2913 = vmul.f32 %v2898, 1.442695
        %v2914 = vpow.pop %v2913
        %v2915 = vmul.f32 %v2899, 1.442695
        %v2916 = vpow.pop %v2915
        %v2917 = vmul.f32 %v2900, 1.442695
        %v2918 = vpow.pop %v2917
        %v2919 = vmul.f32 %v2901, 1.442695
        %v2920 = vpow.pop %v2919
        %v2921 = vmul.f32 %v2902, 1.442695
        %v2922 = vpow.pop %v2921
        %v2923 = vmul.f32 %v2903, 1.442695
        %v2924 = vpow.pop %v2923
        %v2925 = vmul.f32 %v2904, 1.442695
        %v2926 = vpow.pop %v2925
        %v2927 = vmul.f32 %v2905, 1.442695
        %v2928 = vpow.pop %v2927
        %v2929 = vmul.f32 %v2906, 1.442695
        %v2930 = vpow.pop %v2929
        %v2931 = vld [vmem:[%s337] sm:$0xff]
        %v2932 = vld [vmem:[%s337 + $0x8] sm:$0xff]
        %v2933 = vld [vmem:[%s337 + $0x10] sm:$0xff]
        %v2934 = vld [vmem:[%s337 + $0x18] sm:$0xff]
        %v2935 = vld [vmem:[%s337 + $0x20] sm:$0xff]
        %v2936 = vld [vmem:[%s337 + $0x28] sm:$0xff]
        %v2937 = vld [vmem:[%s337 + $0x30] sm:$0xff]
        %v2938 = vld [vmem:[%s337 + $0x38] sm:$0xff]
        %v2939 = vld [vmem:[%s337 + $0x40] sm:$0xff]
        %v2940 = vld [vmem:[%s337 + $0x48] sm:$0xff]
        %v2941 = vld [vmem:[%s337 + $0x50] sm:$0xff]
        %v2942 = vld [vmem:[%s337 + $0x58] sm:$0xff]
        %2955 = vrot.lane.b32.xlu0 %v2908, 108
        %v2956 = vpop.permute.xlu0 %2955
        %2957 = vrot.lane.b32.xlu0 %v2910, 108
        %v2958 = vpop.permute.xlu0 %2957
        %2959 = vrot.lane.b32.xlu0 %v2912, 108
        %v2960 = vpop.permute.xlu0 %2959
        %2961 = vrot.lane.b32.xlu0 %v2914, 108
        %v2962 = vpop.permute.xlu0 %2961
        %2963 = vrot.lane.b32.xlu0 %v2916, 108
        %v2964 = vpop.permute.xlu0 %2963
        %2965 = vrot.lane.b32.xlu0 %v2918, 108
        %v2966 = vpop.permute.xlu0 %2965
        %2967 = vrot.lane.b32.xlu0 %v2920, 108
        %v2968 = vpop.permute.xlu0 %2967
        %2969 = vrot.lane.b32.xlu0 %v2922, 108
        %v2970 = vpop.permute.xlu0 %2969
        %2971 = vrot.lane.b32.xlu0 %v2924, 108
        %v2972 = vpop.permute.xlu0 %2971
        %2973 = vrot.lane.b32.xlu0 %v2926, 108
        %v2974 = vpop.permute.xlu0 %2973
        %2975 = vrot.lane.b32.xlu0 %v2928, 108
        %v2976 = vpop.permute.xlu0 %2975
        %2977 = vrot.lane.b32.xlu0 %v2930, 108
        %v2978 = vpop.permute.xlu0 %2977
        %v2991 = vmul.f32 %v2931, %v2956
        %v2992 = vmul.f32 %v2932, %v2958
        %v2993 = vmul.f32 %v2933, %v2960
        %v2994 = vmul.f32 %v2934, %v2962
        %v2995 = vmul.f32 %v2935, %v2964
        %v2996 = vmul.f32 %v2936, %v2966
        %v2997 = vmul.f32 %v2937, %v2968
        %v2998 = vmul.f32 %v2938, %v2970
        %v2999 = vmul.f32 %v2939, %v2972
        %v3000 = vmul.f32 %v2940, %v2974
        %v3001 = vmul.f32 %v2941, %v2976
        %v3002 = vmul.f32 %v2942, %v2978
        %v3003 = vadd.f32 %v2991, %v2849
        %v3004 = vadd.f32 %v2992, %v2852
        %v3005 = vadd.f32 %v2993, %v2857
        %v3006 = vadd.f32 %v2994, %v2860
        %v3007 = vadd.f32 %v2995, %v2865
        %v3008 = vadd.f32 %v2996, %v2868
        %v3009 = vadd.f32 %v2997, %v2873
        %v3010 = vadd.f32 %v2998, %v2876
        %v3011 = vadd.f32 %v2999, %v2881
        %v3012 = vadd.f32 %v3000, %v2884
        %v3013 = vadd.f32 %v3001, %v2889
        %v3014 = vadd.f32 %v3002, %v2892
        %v3015 = vpack.c.bf16 %v3004, %v3003
        %v3016 = vpack.c.bf16 %v3006, %v3005
        %v3017 = vpack.c.bf16 %v3008, %v3007
        %v3018 = vpack.c.bf16 %v3010, %v3009
        %v3019 = vpack.c.bf16 %v3012, %v3011
        %v3020 = vpack.c.bf16 %v3014, %v3013
        %v3021 = vld [vmem:[%s4] sm:$0xff]
        %v3022 = vld [vmem:[%s4 + $0x8] sm:$0xff]
        %v3023 = vld [vmem:[%s4 + $0x10] sm:$0xff]
        %v3024 = vld [vmem:[%s4 + $0x18] sm:$0xff]
        %v3025 = vld [vmem:[%s4 + $0x20] sm:$0x33]
        %v3026 = vld [vmem:[%s4 + $0x28] sm:$0x33]
        %v3028 = vlaneseq
        %v3029 = vshrl.u32 %v3028, 7
        %v3030 = vsub.s32 0, %v3029
        %v3031 = vrot.slane %v475, %v3030
        %v3032 = vlaneseq
        %v3033 = vshrl.u32 %v3032, 7
        %v3034 = vsub.s32 1, %v3033
        %v3035 = vrot.slane %v475, %v3034
        %v3036 = vlaneseq
        %v3037 = vshrl.u32 %v3036, 7
        %v3038 = vsub.s32 2, %v3037
        %v3039 = vrot.slane %v475, %v3038
        %v3040 = vlaneseq
        %v3041 = vshrl.u32 %v3040, 7
        %v3042 = vsub.s32 3, %v3041
        %v3043 = vrot.slane %v475, %v3042
        %v3054 = vunpack.c.l.b16 %v3021
        %v3055 = vunpack.c.h.b16 %v3021
        %v3056 = vunpack.c.l.b16 %v3022
        %v3057 = vunpack.c.h.b16 %v3022
        %v3058 = vunpack.c.l.b16 %v3023
        %v3059 = vunpack.c.h.b16 %v3023
        %v3060 = vunpack.c.l.b16 %v3024
        %v3061 = vunpack.c.h.b16 %v3024
        %v3062 = vunpack.c.l.b16 %v3025
        %v3063 = vunpack.c.h.b16 %v3025
        %v3064 = vunpack.c.l.b16 %v3026
        %v3065 = vunpack.c.h.b16 %v3026
        %v3066 = vpack.c.b16 %v3058, %v3054
        %v3067 = vpack.c.b16 %v3059, %v3055
        %v3068 = vpack.c.b16 %v3060, %v3056
        %v3069 = vpack.c.b16 %v3061, %v3057
        %v3070 = vpack.c.b16 %v3062, %v3062
        %v3071 = vpack.c.b16 %v3063, %v3063
        %v3072 = vpack.c.b16 %v3064, %v3064
        %v3073 = vpack.c.b16 %v3065, %v3065
        %vm3078 = vcmask 162816
        %v3080 = vsel %vm3078, %v3015, 0
        %v3083 = vsel %vm3078, %v3016, 0
        %v3086 = vsel %vm3078, %v3017, 0
        %v3089 = vsel %vm3078, %v3018, 0
        %v3092 = vsel %vm3078, %v3019, 0
        %v3095 = vsel %vm3078, %v3020, 0
        %vm3097 = vcmask 1041408
        %v3099 = vsel %vm3097, %v3070, 0
        %v3102 = vsel %vm3097, %v3071, 0
        %v3105 = vsel %vm3097, %v3072, 0
        %v3108 = vsel %vm3097, %v3073, 0
        %3110 = vmatprep.subr.bf16.mxu0 %v3067
        %3111 = vmatpush1.bf16.msra.mxu0 %v3066
        %3112 = vmatprep.subr.bf16.mxu0 %v3102
        %3113 = vmatpush1.bf16.msra.mxu0 %v3099
        %3114 = vmatprep.subr.bf16.mxu0 0
        %3115 = vmatpush1.bf16.msra.mxu0 0
        %3116 = vmatprep.subr.bf16.mxu0 0
        %3117 = vmatpush1.bf16.msra.mxu0 0
        %3118 = vmatprep.subr.bf16.mxu0 0
        %3119 = vmatpush1.bf16.msra.mxu0 0
        %3120 = vmatprep.subr.bf16.mxu0 0
        %3121 = vmatpush1.bf16.msra.mxu0 0
        %3122 = vmatprep.subr.bf16.mxu0 0
        %3123 = vmatpush1.bf16.msra.mxu0 0
        %3124 = vmatprep.subr.bf16.mxu0 0
        %3125 = vmatpush1.bf16.msra.mxu0 0
        %3126 = vmatprep.subr.bf16.mxu0 0
        %3127 = vmatpush1.bf16.msra.mxu0 0
        %3128 = vmatprep.subr.bf16.mxu0 0
        %3129 = vmatpush1.bf16.msra.mxu0 0
        %3130 = vmatprep.subr.bf16.mxu0 0
        %3131 = vmatpush1.bf16.msra.mxu0 0
        %3132 = vmatprep.subr.bf16.mxu0 0
        %3133 = vmatpush1.bf16.msra.mxu0 0
        %3134 = vmatprep.subr.bf16.mxu0 0
        %3135 = vmatpush1.bf16.msra.mxu0 0
        %3136 = vmatprep.subr.bf16.mxu0 0
        %3137 = vmatpush1.bf16.msra.mxu0 0
        %3138 = vmatprep.subr.bf16.mxu0 0
        %3139 = vmatpush1.bf16.msra.mxu0 0
        %3140 = vmatprep.subr.bf16.mxu0 0
        %3141 = vmatpush1.bf16.msra.mxu0 0
        %3142 = vmatprep.mubr.bf16.mxu0 0
        %3143 = vmatmul.mubr.bf16.gmra.mrb[0].mxu0 %v3080
        %v3144 = vpop.f32.mrb[0].mxu0
        %v3145 = vadd.f32 %v3031, %v3144
        %v3146 = vpop.f32.mrb[0].mxu0
        %v3147 = vadd.f32 %v3035, %v3146
        %v3148 = vpop.f32.mrb[0].mxu0
        %v3149 = vadd.f32 %v3031, %v3148
        %v3150 = vpop.f32.mrb[0].mxu0
        %v3151 = vadd.f32 %v3035, %v3150
        %3152 = vmatprep.mubr.bf16.mxu0 0
        %3153 = vmatmul.mubr.bf16.gmra.mrb[0].mxu0 %v3083
        %v3154 = vpop.f32.mrb[0].mxu0
        %v3155 = vadd.f32 %v3031, %v3154
        %v3156 = vpop.f32.mrb[0].mxu0
        %v3157 = vadd.f32 %v3035, %v3156
        %v3158 = vpop.f32.mrb[0].mxu0
        %v3159 = vadd.f32 %v3031, %v3158
        %v3160 = vpop.f32.mrb[0].mxu0
        %v3161 = vadd.f32 %v3035, %v3160
        %3162 = vmatprep.mubr.bf16.mxu0 0
        %3163 = vmatmul.mubr.bf16.gmra.mrb[0].mxu0 %v3086
        %v3164 = vpop.f32.mrb[0].mxu0
        %v3165 = vadd.f32 %v3031, %v3164
        %v3166 = vpop.f32.mrb[0].mxu0
        %v3167 = vadd.f32 %v3035, %v3166
        %v3168 = vpop.f32.mrb[0].mxu0
        %v3169 = vadd.f32 %v3031, %v3168
        %v3170 = vpop.f32.mrb[0].mxu0
        %v3171 = vadd.f32 %v3035, %v3170
        %3172 = vmatprep.mubr.bf16.mxu0 0
        %3173 = vmatmul.mubr.bf16.gmra.mrb[0].mxu0 %v3089
        %v3174 = vpop.f32.mrb[0].mxu0
        %v3175 = vadd.f32 %v3031, %v3174
        %v3176 = vpop.f32.mrb[0].mxu0
        %v3177 = vadd.f32 %v3035, %v3176
        %v3178 = vpop.f32.mrb[0].mxu0
        %v3179 = vadd.f32 %v3031, %v3178
        %v3180 = vpop.f32.mrb[0].mxu0
        %v3181 = vadd.f32 %v3035, %v3180
        %3182 = vmatprep.mubr.bf16.mxu0 0
        %3183 = vmatmul.mubr.bf16.gmra.mrb[0].mxu0 %v3092
        %v3184 = vpop.f32.mrb[0].mxu0
        %v3185 = vadd.f32 %v3031, %v3184
        %v3186 = vpop.f32.mrb[0].mxu0
        %v3187 = vadd.f32 %v3035, %v3186
        %v3188 = vpop.f32.mrb[0].mxu0
        %v3189 = vadd.f32 %v3031, %v3188
        %v3190 = vpop.f32.mrb[0].mxu0
        %v3191 = vadd.f32 %v3035, %v3190
        %3192 = vmatprep.mubr.bf16.mxu0 0
        %3193 = vmatmul.mubr.bf16.gmra.mrb[0].mxu0 %v3095
        %v3194 = vpop.f32.mrb[0].mxu0
        %v3195 = vadd.f32 %v3031, %v3194
        %v3196 = vpop.f32.mrb[0].mxu0
        %v3197 = vadd.f32 %v3035, %v3196
        %v3198 = vpop.f32.mrb[0].mxu0
        %v3199 = vadd.f32 %v3031, %v3198
        %v3200 = vpop.f32.mrb[0].mxu0
        %v3201 = vadd.f32 %v3035, %v3200
        %3202 = vdwg.mxu0
        %3203 = vmatprep.subr.bf16.mxu0 %v3069
        %3204 = vmatpush1.bf16.msra.mxu0 %v3068
        %3205 = vmatprep.subr.bf16.mxu0 %v3108
        %3206 = vmatpush1.bf16.msra.mxu0 %v3105
        %3207 = vmatprep.subr.bf16.mxu0 0
        %3208 = vmatpush1.bf16.msra.mxu0 0
        %3209 = vmatprep.subr.bf16.mxu0 0
        %3210 = vmatpush1.bf16.msra.mxu0 0
        %3211 = vmatprep.subr.bf16.mxu0 0
        %3212 = vmatpush1.bf16.msra.mxu0 0
        %3213 = vmatprep.subr.bf16.mxu0 0
        %3214 = vmatpush1.bf16.msra.mxu0 0
        %3215 = vmatprep.subr.bf16.mxu0 0
        %3216 = vmatpush1.bf16.msra.mxu0 0
        %3217 = vmatprep.subr.bf16.mxu0 0
        %3218 = vmatpush1.bf16.msra.mxu0 0
        %3219 = vmatprep.subr.bf16.mxu0 0
        %3220 = vmatpush1.bf16.msra.mxu0 0
        %3221 = vmatprep.subr.bf16.mxu0 0
        %3222 = vmatpush1.bf16.msra.mxu0 0
        %3223 = vmatprep.subr.bf16.mxu0 0
        %3224 = vmatpush1.bf16.msra.mxu0 0
        %3225 = vmatprep.subr.bf16.mxu0 0
        %3226 = vmatpush1.bf16.msra.mxu0 0
        %3227 = vmatprep.subr.bf16.mxu0 0
        %3228 = vmatpush1.bf16.msra.mxu0 0
        %3229 = vmatprep.subr.bf16.mxu0 0
        %3230 = vmatpush1.bf16.msra.mxu0 0
        %3231 = vmatprep.subr.bf16.mxu0 0
        %3232 = vmatpush1.bf16.msra.mxu0 0
        %3233 = vmatprep.subr.bf16.mxu0 0
        %3234 = vmatpush1.bf16.msra.mxu0 0
        %3235 = vmatprep.mubr.bf16.mxu0 0
        %3236 = vmatmul.mubr.bf16.gmra.mrb[0].mxu0 %v3080
        %v3237 = vpop.f32.mrb[0].mxu0
        %v3238 = vadd.f32 %v3039, %v3237
        %v3239 = vpop.f32.mrb[0].mxu0
        %v3240 = vadd.f32 %v3043, %v3239
        %v3241 = vpop.f32.mrb[0].mxu0
        %v3242 = vadd.f32 %v3039, %v3241
        %v3243 = vpop.f32.mrb[0].mxu0
        %v3244 = vadd.f32 %v3043, %v3243
        %3245 = vmatprep.mubr.bf16.mxu0 0
        %3246 = vmatmul.mubr.bf16.gmra.mrb[0].mxu0 %v3083
        %v3247 = vpop.f32.mrb[0].mxu0
        %v3248 = vadd.f32 %v3039, %v3247
        %v3249 = vpop.f32.mrb[0].mxu0
        %v3250 = vadd.f32 %v3043, %v3249
        %v3251 = vpop.f32.mrb[0].mxu0
        %v3252 = vadd.f32 %v3039, %v3251
        %v3253 = vpop.f32.mrb[0].mxu0
        %v3254 = vadd.f32 %v3043, %v3253
        %3255 = vmatprep.mubr.bf16.mxu0 0
        %3256 = vmatmul.mubr.bf16.gmra.mrb[0].mxu0 %v3086
        %v3257 = vpop.f32.mrb[0].mxu0
        %v3258 = vadd.f32 %v3039, %v3257
        %v3259 = vpop.f32.mrb[0].mxu0
        %v3260 = vadd.f32 %v3043, %v3259
        %v3261 = vpop.f32.mrb[0].mxu0
        %v3262 = vadd.f32 %v3039, %v3261
        %v3263 = vpop.f32.mrb[0].mxu0
        %v3264 = vadd.f32 %v3043, %v3263
        %3265 = vmatprep.mubr.bf16.mxu0 0
        %3266 = vmatmul.mubr.bf16.gmra.mrb[0].mxu0 %v3089
        %v3267 = vpop.f32.mrb[0].mxu0
        %v3268 = vadd.f32 %v3039, %v3267
        %v3269 = vpop.f32.mrb[0].mxu0
        %v3270 = vadd.f32 %v3043, %v3269
        %v3271 = vpop.f32.mrb[0].mxu0
        %v3272 = vadd.f32 %v3039, %v3271
        %v3273 = vpop.f32.mrb[0].mxu0
        %v3274 = vadd.f32 %v3043, %v3273
        %3275 = vmatprep.mubr.bf16.mxu0 0
        %3276 = vmatmul.mubr.bf16.gmra.mrb[0].mxu0 %v3092
        %v3277 = vpop.f32.mrb[0].mxu0
        %v3278 = vadd.f32 %v3039, %v3277
        %v3279 = vpop.f32.mrb[0].mxu0
        %v3280 = vadd.f32 %v3043, %v3279
        %v3281 = vpop.f32.mrb[0].mxu0
        %v3282 = vadd.f32 %v3039, %v3281
        %v3283 = vpop.f32.mrb[0].mxu0
        %v3284 = vadd.f32 %v3043, %v3283
        %3285 = vmatprep.mubr.bf16.mxu0 0
        %3286 = vmatmul.mubr.bf16.gmra.mrb[0].mxu0 %v3095
        %v3287 = vpop.f32.mrb[0].mxu0
        %v3288 = vadd.f32 %v3039, %v3287
        %v3289 = vpop.f32.mrb[0].mxu0
        %v3290 = vadd.f32 %v3043, %v3289
        %v3291 = vpop.f32.mrb[0].mxu0
        %v3292 = vadd.f32 %v3039, %v3291
        %v3293 = vpop.f32.mrb[0].mxu0
        %v3294 = vadd.f32 %v3043, %v3293
        %3295 = vdwg.mxu0
        %v3296 = vmax.f32 %v3145, 0.0
        %v3297 = vmax.f32 %v3147, 0.0
        %v3298 = vmax.f32 %v3238, 0.0
        %v3299 = vmax.f32 %v3240, 0.0
        %v3300 = vmax.f32 %v3149, 0.0
        %v3301 = vmax.f32 %v3151, 0.0
        %v3302 = vmax.f32 %v3242, 0.0
        %v3303 = vmax.f32 %v3244, 0.0
        %v3304 = vmax.f32 %v3155, 0.0
        %v3305 = vmax.f32 %v3157, 0.0
        %v3306 = vmax.f32 %v3248, 0.0
        %v3307 = vmax.f32 %v3250, 0.0
        %v3308 = vmax.f32 %v3159, 0.0
        %v3309 = vmax.f32 %v3161, 0.0
        %v3310 = vmax.f32 %v3252, 0.0
        %v3311 = vmax.f32 %v3254, 0.0
        %v3312 = vmax.f32 %v3165, 0.0
        %v3313 = vmax.f32 %v3167, 0.0
        %v3314 = vmax.f32 %v3258, 0.0
        %v3315 = vmax.f32 %v3260, 0.0
        %v3316 = vmax.f32 %v3169, 0.0
        %v3317 = vmax.f32 %v3171, 0.0
        %v3318 = vmax.f32 %v3262, 0.0
        %v3319 = vmax.f32 %v3264, 0.0
        %v3320 = vmax.f32 %v3175, 0.0
        %v3321 = vmax.f32 %v3177, 0.0
        %v3322 = vmax.f32 %v3268, 0.0
        %v3323 = vmax.f32 %v3270, 0.0
        %v3324 = vmax.f32 %v3179, 0.0
        %v3325 = vmax.f32 %v3181, 0.0
        %v3326 = vmax.f32 %v3272, 0.0
        %v3327 = vmax.f32 %v3274, 0.0
        %v3328 = vmax.f32 %v3185, 0.0
        %v3329 = vmax.f32 %v3187, 0.0
        %v3330 = vmax.f32 %v3278, 0.0
        %v3331 = vmax.f32 %v3280, 0.0
        %v3332 = vmax.f32 %v3189, 0.0
        %v3333 = vmax.f32 %v3191, 0.0
        %v3334 = vmax.f32 %v3282, 0.0
        %v3335 = vmax.f32 %v3284, 0.0
        %v3336 = vmax.f32 %v3195, 0.0
        %v3337 = vmax.f32 %v3197, 0.0
        %v3338 = vmax.f32 %v3288, 0.0
        %v3339 = vmax.f32 %v3290, 0.0
        %v3340 = vmax.f32 %v3199, 0.0
        %v3341 = vmax.f32 %v3201, 0.0
        %v3342 = vmax.f32 %v3292, 0.0
        %v3343 = vmax.f32 %v3294, 0.0
        %v3344 = vpack.c.bf16 %v3300, %v3296
        %v3345 = vpack.c.bf16 %v3301, %v3297
        %v3346 = vpack.c.bf16 %v3302, %v3298
        %v3347 = vpack.c.bf16 %v3303, %v3299
        %v3348 = vpack.c.bf16 %v3308, %v3304
        %v3349 = vpack.c.bf16 %v3309, %v3305
        %v3350 = vpack.c.bf16 %v3310, %v3306
        %v3351 = vpack.c.bf16 %v3311, %v3307
        %v3352 = vpack.c.bf16 %v3316, %v3312
        %v3353 = vpack.c.bf16 %v3317, %v3313
        %v3354 = vpack.c.bf16 %v3318, %v3314
        %v3355 = vpack.c.bf16 %v3319, %v3315
        %v3356 = vpack.c.bf16 %v3324, %v3320
        %v3357 = vpack.c.bf16 %v3325, %v3321
        %v3358 = vpack.c.bf16 %v3326, %v3322
        %v3359 = vpack.c.bf16 %v3327, %v3323
        %v3360 = vpack.c.bf16 %v3332, %v3328
        %v3361 = vpack.c.bf16 %v3333, %v3329
        %v3362 = vpack.c.bf16 %v3334, %v3330
        %v3363 = vpack.c.bf16 %v3335, %v3331
        %v3364 = vpack.c.bf16 %v3340, %v3336
        %v3365 = vpack.c.bf16 %v3341, %v3337
        %v3366 = vpack.c.bf16 %v3342, %v3338
        %v3367 = vpack.c.bf16 %v3343, %v3339
        %v3368 = vld [vmem:[%s5] sm:$0xff]
        %v3369 = vld [vmem:[%s5 + $0x8] sm:$0xff]
        %v3370 = vld [vmem:[%s5 + $0x10] sm:$0xff]
        %v3371 = vld [vmem:[%s5 + $0x18] sm:$0xf]
        %v3372 = vld [vmem:[%s5 + $0x1c] sm:$0xff]
        %v3373 = vld [vmem:[%s5 + $0x24] sm:$0xff]
        %v3374 = vld [vmem:[%s5 + $0x2c] sm:$0xff]
        %v3375 = vld [vmem:[%s5 + $0x34] sm:$0xf]
        %v3376 = vld [vmem:[%s5 + $0x38] sm:$0xff]
        %v3377 = vld [vmem:[%s5 + $0x40] sm:$0xff]
        %v3378 = vld [vmem:[%s5 + $0x48] sm:$0xff]
        %v3379 = vld [vmem:[%s5 + $0x50] sm:$0xf]
        %v3380 = vld [vmem:[%s5 + $0x54] sm:$0xff]
        %v3381 = vld [vmem:[%s5 + $0x5c] sm:$0xff]
        %v3382 = vld [vmem:[%s5 + $0x64] sm:$0xff]
        %v3383 = vld [vmem:[%s5 + $0x6c] sm:$0xf]
        %v3384 = vld [vmem:[%s5 + $0x70] sm:$0xff]
        %v3385 = vld [vmem:[%s5 + $0x78] sm:$0xff]
        %v3386 = vld [vmem:[%s5 + $0x80] sm:$0xff]
        %v3387 = vld [vmem:[%s5 + $0x88] sm:$0xf]
        %v3388 = vld [vmem:[%s5 + $0x8c] sm:$0xff]
        %v3389 = vld [vmem:[%s5 + $0x94] sm:$0xff]
        %v3390 = vld [vmem:[%s5 + $0x9c] sm:$0xff]
        %v3391 = vld [vmem:[%s5 + $0xa4] sm:$0xf]
        %v3392 = vld [vmem:[%s5 + $0xa8] sm:$0xff]
        %v3393 = vld [vmem:[%s5 + $0xb0] sm:$0xff]
        %v3394 = vld [vmem:[%s5 + $0xb8] sm:$0xff]
        %v3395 = vld [vmem:[%s5 + $0xc0] sm:$0xf]
        %v3396 = vld [vmem:[%s5 + $0xc4] sm:$0xff]
        %v3397 = vld [vmem:[%s5 + $0xcc] sm:$0xff]
        %v3398 = vld [vmem:[%s5 + $0xd4] sm:$0xff]
        %v3399 = vld [vmem:[%s5 + $0xdc] sm:$0xf]
        %v3400 = vld [vmem:[%s5 + $0xe0] sm:$0xff]
        %v3401 = vld [vmem:[%s5 + $0xe8] sm:$0xff]
        %v3402 = vld [vmem:[%s5 + $0xf0] sm:$0xff]
        %v3403 = vld [vmem:[%s5 + $0xf8] sm:$0xf]
        %v3404 = vld [vmem:[%s5 + $0xfc] sm:$0xff]
        %v3405 = vld [vmem:[%s5 + $0x104] sm:$0xff]
        %v3406 = vld [vmem:[%s5 + $0x10c] sm:$0xff]
        %v3407 = vld [vmem:[%s5 + $0x114] sm:$0xf]
        %v3408 = vld [vmem:[%s5 + $0x118] sm:$0xff]
        %v3409 = vld [vmem:[%s5 + $0x120] sm:$0xff]
        %v3410 = vld [vmem:[%s5 + $0x128] sm:$0xff]
        %v3411 = vld [vmem:[%s5 + $0x130] sm:$0xf]
        %v3412 = vld [vmem:[%s5 + $0x134] sm:$0xff]
        %v3413 = vld [vmem:[%s5 + $0x13c] sm:$0xff]
        %v3414 = vld [vmem:[%s5 + $0x144] sm:$0xff]
        %v3415 = vld [vmem:[%s5 + $0x14c] sm:$0xf]
        %v3416 = vld [vmem:[%s5 + $0x150] sm:$0xff]
        %v3417 = vld [vmem:[%s5 + $0x158] sm:$0xff]
        %v3418 = vld [vmem:[%s5 + $0x160] sm:$0xff]
        %v3419 = vld [vmem:[%s5 + $0x168] sm:$0xf]
        %v3420 = vld [vmem:[%s5 + $0x16c] sm:$0xff]
        %v3421 = vld [vmem:[%s5 + $0x174] sm:$0xff]
        %v3422 = vld [vmem:[%s5 + $0x17c] sm:$0xff]
        %v3423 = vld [vmem:[%s5 + $0x184] sm:$0xf]
        %v3424 = vld [vmem:[%s5 + $0x188] sm:$0xff]
        %v3425 = vld [vmem:[%s5 + $0x190] sm:$0xff]
        %v3426 = vld [vmem:[%s5 + $0x198] sm:$0xff]
        %v3427 = vld [vmem:[%s5 + $0x1a0] sm:$0xf]
        %v3428 = vld [vmem:[%s5 + $0x1a4] sm:$0xff]
        %v3429 = vld [vmem:[%s5 + $0x1ac] sm:$0xff]
        %v3430 = vld [vmem:[%s5 + $0x1b4] sm:$0xff]
        %v3431 = vld [vmem:[%s5 + $0x1bc] sm:$0xf]
        %v3432 = vld [vmem:[%s5 + $0x1c0] sm:$0xff]
        %v3433 = vld [vmem:[%s5 + $0x1c8] sm:$0xff]
        %v3434 = vld [vmem:[%s5 + $0x1d0] sm:$0xff]
        %v3435 = vld [vmem:[%s5 + $0x1d8] sm:$0xf]
        %v3436 = vld [vmem:[%s5 + $0x1dc] sm:$0xff]
        %v3437 = vld [vmem:[%s5 + $0x1e4] sm:$0xff]
        %v3438 = vld [vmem:[%s5 + $0x1ec] sm:$0xff]
        %v3439 = vld [vmem:[%s5 + $0x1f4] sm:$0xf]
        %v3440 = vld [vmem:[%s5 + $0x1f8] sm:$0xff]
        %v3441 = vld [vmem:[%s5 + $0x200] sm:$0xff]
        %v3442 = vld [vmem:[%s5 + $0x208] sm:$0xff]
        %v3443 = vld [vmem:[%s5 + $0x210] sm:$0xf]
        %v3444 = vld [vmem:[%s5 + $0x214] sm:$0xff]
        %v3445 = vld [vmem:[%s5 + $0x21c] sm:$0xff]
        %v3446 = vld [vmem:[%s5 + $0x224] sm:$0xff]
        %v3447 = vld [vmem:[%s5 + $0x22c] sm:$0xf]
        %v3448 = vld [vmem:[%s5 + $0x230] sm:$0xff]
        %v3449 = vld [vmem:[%s5 + $0x238] sm:$0xff]
        %v3450 = vld [vmem:[%s5 + $0x240] sm:$0xff]
        %v3451 = vld [vmem:[%s5 + $0x248] sm:$0xf]
        %v3452 = vld [vmem:[%s5 + $0x24c] sm:$0xff]
        %v3453 = vld [vmem:[%s5 + $0x254] sm:$0xff]
        %v3454 = vld [vmem:[%s5 + $0x25c] sm:$0xff]
        %v3455 = vld [vmem:[%s5 + $0x264] sm:$0xf]
        %v3456 = vld [vmem:[%s5 + $0x268] sm:$0xff]
        %v3457 = vld [vmem:[%s5 + $0x270] sm:$0xff]
        %v3458 = vld [vmem:[%s5 + $0x278] sm:$0xff]
        %v3459 = vld [vmem:[%s5 + $0x280] sm:$0xf]
        %v3460 = vld [vmem:[%s5 + $0x284] sm:$0xff]
        %v3461 = vld [vmem:[%s5 + $0x28c] sm:$0xff]
        %v3462 = vld [vmem:[%s5 + $0x294] sm:$0xff]
        %v3463 = vld [vmem:[%s5 + $0x29c] sm:$0xf]
        %v3464 = vld [vmem:[%s5 + $0x2a0] sm:$0xff]
        %v3465 = vld [vmem:[%s5 + $0x2a8] sm:$0xff]
        %v3466 = vld [vmem:[%s5 + $0x2b0] sm:$0xff]
        %v3467 = vld [vmem:[%s5 + $0x2b8] sm:$0xf]
        %v3468 = vld [vmem:[%s5 + $0x2bc] sm:$0xff]
        %v3469 = vld [vmem:[%s5 + $0x2c4] sm:$0xff]
        %v3470 = vld [vmem:[%s5 + $0x2cc] sm:$0xff]
        %v3471 = vld [vmem:[%s5 + $0x2d4] sm:$0xf]
        %v3472 = vld [vmem:[%s5 + $0x2d8] sm:$0xff]
        %v3473 = vld [vmem:[%s5 + $0x2e0] sm:$0xff]
        %v3474 = vld [vmem:[%s5 + $0x2e8] sm:$0xff]
        %v3475 = vld [vmem:[%s5 + $0x2f0] sm:$0xf]
        %v3476 = vld [vmem:[%s5 + $0x2f4] sm:$0xff]
        %v3477 = vld [vmem:[%s5 + $0x2fc] sm:$0xff]
        %v3478 = vld [vmem:[%s5 + $0x304] sm:$0xff]
        %v3479 = vld [vmem:[%s5 + $0x30c] sm:$0xf]
        %v3480 = vld [vmem:[%s5 + $0x310] sm:$0xff]
        %v3481 = vld [vmem:[%s5 + $0x318] sm:$0xff]
        %v3482 = vld [vmem:[%s5 + $0x320] sm:$0xff]
        %v3483 = vld [vmem:[%s5 + $0x328] sm:$0xf]
        %v3484 = vld [vmem:[%s5 + $0x32c] sm:$0xff]
        %v3485 = vld [vmem:[%s5 + $0x334] sm:$0xff]
        %v3486 = vld [vmem:[%s5 + $0x33c] sm:$0xff]
        %v3487 = vld [vmem:[%s5 + $0x344] sm:$0xf]
        %v3488 = vld [vmem:[%s5 + $0x348] sm:$0xff]
        %v3489 = vld [vmem:[%s5 + $0x350] sm:$0xff]
        %v3490 = vld [vmem:[%s5 + $0x358] sm:$0xff]
        %v3491 = vld [vmem:[%s5 + $0x360] sm:$0xf]
        %v3492 = vld [vmem:[%s5 + $0x364] sm:$0xff]
        %v3493 = vld [vmem:[%s5 + $0x36c] sm:$0xff]
        %v3494 = vld [vmem:[%s5 + $0x374] sm:$0xff]
        %v3495 = vld [vmem:[%s5 + $0x37c] sm:$0xf]
        %v3496 = vld [vmem:[%s5 + $0x380] sm:$0xff]
        %v3497 = vld [vmem:[%s5 + $0x388] sm:$0xff]
        %v3498 = vld [vmem:[%s5 + $0x390] sm:$0xff]
        %v3499 = vld [vmem:[%s5 + $0x398] sm:$0xf]
        %v3500 = vld [vmem:[%s5 + $0x39c] sm:$0xff]
        %v3501 = vld [vmem:[%s5 + $0x3a4] sm:$0xff]
        %v3502 = vld [vmem:[%s5 + $0x3ac] sm:$0xff]
        %v3503 = vld [vmem:[%s5 + $0x3b4] sm:$0xf]
        %v3504 = vld [vmem:[%s5 + $0x3b8] sm:$0xff]
        %v3505 = vld [vmem:[%s5 + $0x3c0] sm:$0xff]
        %v3506 = vld [vmem:[%s5 + $0x3c8] sm:$0xff]
        %v3507 = vld [vmem:[%s5 + $0x3d0] sm:$0xf]
        %v3508 = vld [vmem:[%s5 + $0x3d4] sm:$0xff]
        %v3509 = vld [vmem:[%s5 + $0x3dc] sm:$0xff]
        %v3510 = vld [vmem:[%s5 + $0x3e4] sm:$0xff]
        %v3511 = vld [vmem:[%s5 + $0x3ec] sm:$0xf]
        %v3512 = vld [vmem:[%s5 + $0x3f0] sm:$0xff]
        %v3513 = vld [vmem:[%s5 + $0x3f8] sm:$0xff]
        %v3514 = vld [vmem:[%s5 + $0x400] sm:$0xff]
        %v3515 = vld [vmem:[%s5 + $0x408] sm:$0xf]
        %v3516 = vld [vmem:[%s5 + $0x40c] sm:$0xff]
        %v3517 = vld [vmem:[%s5 + $0x414] sm:$0xff]
        %v3518 = vld [vmem:[%s5 + $0x41c] sm:$0xff]
        %v3519 = vld [vmem:[%s5 + $0x424] sm:$0xf]
        %v3520 = vld [vmem:[%s5 + $0x428] sm:$0xff]
        %v3521 = vld [vmem:[%s5 + $0x430] sm:$0xff]
        %v3522 = vld [vmem:[%s5 + $0x438] sm:$0xff]
        %v3523 = vld [vmem:[%s5 + $0x440] sm:$0xf]
        %v3524 = vld [vmem:[%s5 + $0x444] sm:$0xff]
        %v3525 = vld [vmem:[%s5 + $0x44c] sm:$0xff]
        %v3526 = vld [vmem:[%s5 + $0x454] sm:$0xff]
        %v3527 = vld [vmem:[%s5 + $0x45c] sm:$0xf]
        %v3528 = vld [vmem:[%s5 + $0x460] sm:$0xff]
        %v3529 = vld [vmem:[%s5 + $0x468] sm:$0xff]
        %v3530 = vld [vmem:[%s5 + $0x470] sm:$0xff]
        %v3531 = vld [vmem:[%s5 + $0x478] sm:$0xf]
        %v3532 = vld [vmem:[%s5 + $0x47c] sm:$0xff]
        %v3533 = vld [vmem:[%s5 + $0x484] sm:$0xff]
        %v3534 = vld [vmem:[%s5 + $0x48c] sm:$0xff]
        %v3535 = vld [vmem:[%s5 + $0x494] sm:$0xf]
        %v3536 = vld [vmem:[%s5 + $0x498] sm:$0xff]
        %v3537 = vld [vmem:[%s5 + $0x4a0] sm:$0xff]
        %v3538 = vld [vmem:[%s5 + $0x4a8] sm:$0xff]
        %v3539 = vld [vmem:[%s5 + $0x4b0] sm:$0xf]
        %v3540 = vld [vmem:[%s5 + $0x4b4] sm:$0xff]
        %v3541 = vld [vmem:[%s5 + $0x4bc] sm:$0xff]
        %v3542 = vld [vmem:[%s5 + $0x4c4] sm:$0xff]
        %v3543 = vld [vmem:[%s5 + $0x4cc] sm:$0xf]
        %v3544 = vld [vmem:[%s5 + $0x4d0] sm:$0xff]
        %v3545 = vld [vmem:[%s5 + $0x4d8] sm:$0xff]
        %v3546 = vld [vmem:[%s5 + $0x4e0] sm:$0xff]
        %v3547 = vld [vmem:[%s5 + $0x4e8] sm:$0xf]
        %v3548 = vld [vmem:[%s5 + $0x4ec] sm:$0xff]
        %v3549 = vld [vmem:[%s5 + $0x4f4] sm:$0xff]
        %v3550 = vld [vmem:[%s5 + $0x4fc] sm:$0xff]
        %v3551 = vld [vmem:[%s5 + $0x504] sm:$0xf]
        %v3552 = vld [vmem:[%s5 + $0x508] sm:$0xff]
        %v3553 = vld [vmem:[%s5 + $0x510] sm:$0xff]
        %v3554 = vld [vmem:[%s5 + $0x518] sm:$0xff]
        %v3555 = vld [vmem:[%s5 + $0x520] sm:$0xf]
        %v3556 = vld [vmem:[%s5 + $0x524] sm:$0xff]
        %v3557 = vld [vmem:[%s5 + $0x52c] sm:$0xff]
        %v3558 = vld [vmem:[%s5 + $0x534] sm:$0xff]
        %v3559 = vld [vmem:[%s5 + $0x53c] sm:$0xf]
        %v3560 = vld [vmem:[%s5 + $0x540] sm:$0xff]
        %v3561 = vld [vmem:[%s5 + $0x548] sm:$0xff]
        %v3562 = vld [vmem:[%s5 + $0x550] sm:$0xff]
        %v3563 = vld [vmem:[%s5 + $0x558] sm:$0xf]
        %v3564 = vld [vmem:[%s5 + $0x55c] sm:$0xff]
        %v3565 = vld [vmem:[%s5 + $0x564] sm:$0xff]
        %v3566 = vld [vmem:[%s5 + $0x56c] sm:$0xff]
        %v3567 = vld [vmem:[%s5 + $0x574] sm:$0xf]
        %v3569 = vlaneseq
        %v3570 = vshrl.u32 %v3569, 7
        %v3571 = vsub.s32 0, %v3570
        %v3572 = vrot.slane %v476, %v3571
        %v3573 = vlaneseq
        %v3574 = vshrl.u32 %v3573, 7
        %v3575 = vsub.s32 1, %v3574
        %v3576 = vrot.slane %v476, %v3575
        %v3577 = vlaneseq
        %v3578 = vshrl.u32 %v3577, 7
        %v3579 = vsub.s32 2, %v3578
        %v3580 = vrot.slane %v476, %v3579
        %v3581 = vlaneseq
        %v3582 = vshrl.u32 %v3581, 7
        %v3583 = vsub.s32 3, %v3582
        %v3584 = vrot.slane %v476, %v3583
        %v3585 = vlaneseq
        %v3586 = vshrl.u32 %v3585, 7
        %v3587 = vsub.s32 4, %v3586
        %v3588 = vrot.slane %v476, %v3587
        %v3589 = vlaneseq
        %v3590 = vshrl.u32 %v3589, 7
        %v3591 = vsub.s32 5, %v3590
        %v3592 = vrot.slane %v476, %v3591
        %v3593 = vlaneseq
        %v3594 = vshrl.u32 %v3593, 7
        %v3595 = vsub.s32 6, %v3594
        %v3596 = vrot.slane %v476, %v3595
        %v3804 = vunpack.c.l.b16 %v3368
        %v3805 = vunpack.c.h.b16 %v3368
        %v3806 = vunpack.c.l.b16 %v3369
        %v3807 = vunpack.c.h.b16 %v3369
        %v3808 = vunpack.c.l.b16 %v3370
        %v3809 = vunpack.c.h.b16 %v3370
        %v3810 = vunpack.c.l.b16 %v3371
        %v3811 = vunpack.c.l.b16 %v3372
        %v3812 = vunpack.c.h.b16 %v3372
        %v3813 = vunpack.c.l.b16 %v3373
        %v3814 = vunpack.c.h.b16 %v3373
        %v3815 = vunpack.c.l.b16 %v3374
        %v3816 = vunpack.c.h.b16 %v3374
        %v3817 = vunpack.c.l.b16 %v3375
        %v3818 = vunpack.c.l.b16 %v3376
        %v3819 = vunpack.c.h.b16 %v3376
        %v3820 = vunpack.c.l.b16 %v3377
        %v3821 = vunpack.c.h.b16 %v3377
        %v3822 = vunpack.c.l.b16 %v3378
        %v3823 = vunpack.c.h.b16 %v3378
        %v3824 = vunpack.c.l.b16 %v3379
        %v3825 = vunpack.c.l.b16 %v3380
        %v3826 = vunpack.c.h.b16 %v3380
        %v3827 = vunpack.c.l.b16 %v3381
        %v3828 = vunpack.c.h.b16 %v3381
        %v3829 = vunpack.c.l.b16 %v3382
        %v3830 = vunpack.c.h.b16 %v3382
        %v3831 = vunpack.c.l.b16 %v3383
        %v3832 = vunpack.c.l.b16 %v3384
        %v3833 = vunpack.c.h.b16 %v3384
        %v3834 = vunpack.c.l.b16 %v3385
        %v3835 = vunpack.c.h.b16 %v3385
        %v3836 = vunpack.c.l.b16 %v3386
        %v3837 = vunpack.c.h.b16 %v3386
        %v3838 = vunpack.c.l.b16 %v3387
        %v3839 = vunpack.c.l.b16 %v3388
        %v3840 = vunpack.c.h.b16 %v3388
        %v3841 = vunpack.c.l.b16 %v3389
        %v3842 = vunpack.c.h.b16 %v3389
        %v3843 = vunpack.c.l.b16 %v3390
        %v3844 = vunpack.c.h.b16 %v3390
        %v3845 = vunpack.c.l.b16 %v3391
        %v3846 = vunpack.c.l.b16 %v3392
        %v3847 = vunpack.c.h.b16 %v3392
        %v3848 = vunpack.c.l.b16 %v3393
        %v3849 = vunpack.c.h.b16 %v3393
        %v3850 = vunpack.c.l.b16 %v3394
        %v3851 = vunpack.c.h.b16 %v3394
        %v3852 = vunpack.c.l.b16 %v3395
        %v3853 = vunpack.c.l.b16 %v3396
        %v3854 = vunpack.c.h.b16 %v3396
        %v3855 = vunpack.c.l.b16 %v3397
        %v3856 = vunpack.c.h.b16 %v3397
        %v3857 = vunpack.c.l.b16 %v3398
        %v3858 = vunpack.c.h.b16 %v3398
        %v3859 = vunpack.c.l.b16 %v3399
        %v3860 = vunpack.c.l.b16 %v3400
        %v3861 = vunpack.c.h.b16 %v3400
        %v3862 = vunpack.c.l.b16 %v3401
        %v3863 = vunpack.c.h.b16 %v3401
        %v3864 = vunpack.c.l.b16 %v3402
        %v3865 = vunpack.c.h.b16 %v3402
        %v3866 = vunpack.c.l.b16 %v3403
        %v3867 = vunpack.c.l.b16 %v3404
        %v3868 = vunpack.c.h.b16 %v3404
        %v3869 = vunpack.c.l.b16 %v3405
        %v3870 = vunpack.c.h.b16 %v3405
        %v3871 = vunpack.c.l.b16 %v3406
        %v3872 = vunpack.c.h.b16 %v3406
        %v3873 = vunpack.c.l.b16 %v3407
        %v3874 = vunpack.c.l.b16 %v3408
        %v3875 = vunpack.c.h.b16 %v3408
        %v3876 = vunpack.c.l.b16 %v3409
        %v3877 = vunpack.c.h.b16 %v3409
        %v3878 = vunpack.c.l.b16 %v3410
        %v3879 = vunpack.c.h.b16 %v3410
        %v3880 = vunpack.c.l.b16 %v3411
        %v3881 = vunpack.c.l.b16 %v3412
        %v3882 = vunpack.c.h.b16 %v3412
        %v3883 = vunpack.c.l.b16 %v3413
        %v3884 = vunpack.c.h.b16 %v3413
        %v3885 = vunpack.c.l.b16 %v3414
        %v3886 = vunpack.c.h.b16 %v3414
        %v3887 = vunpack.c.l.b16 %v3415
        %v3888 = vunpack.c.l.b16 %v3416
        %v3889 = vunpack.c.h.b16 %v3416
        %v3890 = vunpack.c.l.b16 %v3417
        %v3891 = vunpack.c.h.b16 %v3417
        %v3892 = vunpack.c.l.b16 %v3418
        %v3893 = vunpack.c.h.b16 %v3418
        %v3894 = vunpack.c.l.b16 %v3419
        %v3895 = vunpack.c.l.b16 %v3420
        %v3896 = vunpack.c.h.b16 %v3420
        %v3897 = vunpack.c.l.b16 %v3421
        %v3898 = vunpack.c.h.b16 %v3421
        %v3899 = vunpack.c.l.b16 %v3422
        %v3900 = vunpack.c.h.b16 %v3422
        %v3901 = vunpack.c.l.b16 %v3423
        %v3902 = vunpack.c.l.b16 %v3424
        %v3903 = vunpack.c.h.b16 %v3424
        %v3904 = vunpack.c.l.b16 %v3425
        %v3905 = vunpack.c.h.b16 %v3425
        %v3906 = vunpack.c.l.b16 %v3426
        %v3907 = vunpack.c.h.b16 %v3426
        %v3908 = vunpack.c.l.b16 %v3427
        %v3909 = vunpack.c.l.b16 %v3428
        %v3910 = vunpack.c.h.b16 %v3428
        %v3911 = vunpack.c.l.b16 %v3429
        %v3912 = vunpack.c.h.b16 %v3429
        %v3913 = vunpack.c.l.b16 %v3430
        %v3914 = vunpack.c.h.b16 %v3430
        %v3915 = vunpack.c.l.b16 %v3431
        %v3916 = vunpack.c.l.b16 %v3432
        %v3917 = vunpack.c.h.b16 %v3432
        %v3918 = vunpack.c.l.b16 %v3433
        %v3919 = vunpack.c.h.b16 %v3433
        %v3920 = vunpack.c.l.b16 %v3434
        %v3921 = vunpack.c.h.b16 %v3434
        %v3922 = vunpack.c.l.b16 %v3435
        %v3923 = vunpack.c.l.b16 %v3436
        %v3924 = vunpack.c.h.b16 %v3436
        %v3925 = vunpack.c.l.b16 %v3437
        %v3926 = vunpack.c.h.b16 %v3437
        %v3927 = vunpack.c.l.b16 %v3438
        %v3928 = vunpack.c.h.b16 %v3438
        %v3929 = vunpack.c.l.b16 %v3439
        %v3930 = vunpack.c.l.b16 %v3440
        %v3931 = vunpack.c.h.b16 %v3440
        %v3932 = vunpack.c.l.b16 %v3441
        %v3933 = vunpack.c.h.b16 %v3441
        %v3934 = vunpack.c.l.b16 %v3442
        %v3935 = vunpack.c.h.b16 %v3442
        %v3936 = vunpack.c.l.b16 %v3443
        %v3937 = vunpack.c.l.b16 %v3444
        %v3938 = vunpack.c.h.b16 %v3444
        %v3939 = vunpack.c.l.b16 %v3445
        %v3940 = vunpack.c.h.b16 %v3445
        %v3941 = vunpack.c.l.b16 %v3446
        %v3942 = vunpack.c.h.b16 %v3446
        %v3943 = vunpack.c.l.b16 %v3447
        %v3944 = vunpack.c.l.b16 %v3448
        %v3945 = vunpack.c.h.b16 %v3448
        %v3946 = vunpack.c.l.b16 %v3449
        %v3947 = vunpack.c.h.b16 %v3449
        %v3948 = vunpack.c.l.b16 %v3450
        %v3949 = vunpack.c.h.b16 %v3450
        %v3950 = vunpack.c.l.b16 %v3451
        %v3951 = vunpack.c.l.b16 %v3452
        %v3952 = vunpack.c.h.b16 %v3452
        %v3953 = vunpack.c.l.b16 %v3453
        %v3954 = vunpack.c.h.b16 %v3453
        %v3955 = vunpack.c.l.b16 %v3454
        %v3956 = vunpack.c.h.b16 %v3454
        %v3957 = vunpack.c.l.b16 %v3455
        %v3958 = vunpack.c.l.b16 %v3456
        %v3959 = vunpack.c.h.b16 %v3456
        %v3960 = vunpack.c.l.b16 %v3457
        %v3961 = vunpack.c.h.b16 %v3457
        %v3962 = vunpack.c.l.b16 %v3458
        %v3963 = vunpack.c.h.b16 %v3458
        %v3964 = vunpack.c.l.b16 %v3459
        %v3965 = vunpack.c.l.b16 %v3460
        %v3966 = vunpack.c.h.b16 %v3460
        %v3967 = vunpack.c.l.b16 %v3461
        %v3968 = vunpack.c.h.b16 %v3461
        %v3969 = vunpack.c.l.b16 %v3462
        %v3970 = vunpack.c.h.b16 %v3462
        %v3971 = vunpack.c.l.b16 %v3463
        %v3972 = vunpack.c.l.b16 %v3464
        %v3973 = vunpack.c.h.b16 %v3464
        %v3974 = vunpack.c.l.b16 %v3465
        %v3975 = vunpack.c.h.b16 %v3465
        %v3976 = vunpack.c.l.b16 %v3466
        %v3977 = vunpack.c.h.b16 %v3466
        %v3978 = vunpack.c.l.b16 %v3467
        %v3979 = vunpack.c.l.b16 %v3468
        %v3980 = vunpack.c.h.b16 %v3468
        %v3981 = vunpack.c.l.b16 %v3469
        %v3982 = vunpack.c.h.b16 %v3469
        %v3983 = vunpack.c.l.b16 %v3470
        %v3984 = vunpack.c.h.b16 %v3470
        %v3985 = vunpack.c.l.b16 %v3471
        %v3986 = vunpack.c.l.b16 %v3472
        %v3987 = vunpack.c.h.b16 %v3472
        %v3988 = vunpack.c.l.b16 %v3473
        %v3989 = vunpack.c.h.b16 %v3473
        %v3990 = vunpack.c.l.b16 %v3474
        %v3991 = vunpack.c.h.b16 %v3474
        %v3992 = vunpack.c.l.b16 %v3475
        %v3993 = vunpack.c.l.b16 %v3476
        %v3994 = vunpack.c.h.b16 %v3476
        %v3995 = vunpack.c.l.b16 %v3477
        %v3996 = vunpack.c.h.b16 %v3477
        %v3997 = vunpack.c.l.b16 %v3478
        %v3998 = vunpack.c.h.b16 %v3478
        %v3999 = vunpack.c.l.b16 %v3479
        %v4000 = vunpack.c.l.b16 %v3480
        %v4001 = vunpack.c.h.b16 %v3480
        %v4002 = vunpack.c.l.b16 %v3481
        %v4003 = vunpack.c.h.b16 %v3481
        %v4004 = vunpack.c.l.b16 %v3482
        %v4005 = vunpack.c.h.b16 %v3482
        %v4006 = vunpack.c.l.b16 %v3483
        %v4007 = vunpack.c.l.b16 %v3484
        %v4008 = vunpack.c.h.b16 %v3484
        %v4009 = vunpack.c.l.b16 %v3485
        %v4010 = vunpack.c.h.b16 %v3485
        %v4011 = vunpack.c.l.b16 %v3486
        %v4012 = vunpack.c.h.b16 %v3486
        %v4013 = vunpack.c.l.b16 %v3487
        %v4014 = vunpack.c.l.b16 %v3488
        %v4015 = vunpack.c.h.b16 %v3488
        %v4016 = vunpack.c.l.b16 %v3489
        %v4017 = vunpack.c.h.b16 %v3489
        %v4018 = vunpack.c.l.b16 %v3490
        %v4019 = vunpack.c.h.b16 %v3490
        %v4020 = vunpack.c.l.b16 %v3491
        %v4021 = vunpack.c.l.b16 %v3492
        %v4022 = vunpack.c.h.b16 %v3492
        %v4023 = vunpack.c.l.b16 %v3493
        %v4024 = vunpack.c.h.b16 %v3493
        %v4025 = vunpack.c.l.b16 %v3494
        %v4026 = vunpack.c.h.b16 %v3494
        %v4027 = vunpack.c.l.b16 %v3495
        %v4028 = vunpack.c.l.b16 %v3496
        %v4029 = vunpack.c.h.b16 %v3496
        %v4030 = vunpack.c.l.b16 %v3497
        %v4031 = vunpack.c.h.b16 %v3497
        %v4032 = vunpack.c.l.b16 %v3498
        %v4033 = vunpack.c.h.b16 %v3498
        %v4034 = vunpack.c.l.b16 %v3499
        %v4035 = vunpack.c.l.b16 %v3500
        %v4036 = vunpack.c.h.b16 %v3500
        %v4037 = vunpack.c.l.b16 %v3501
        %v4038 = vunpack.c.h.b16 %v3501
        %v4039 = vunpack.c.l.b16 %v3502
        %v4040 = vunpack.c.h.b16 %v3502
        %v4041 = vunpack.c.l.b16 %v3503
        %v4042 = vunpack.c.l.b16 %v3504
        %v4043 = vunpack.c.h.b16 %v3504
        %v4044 = vunpack.c.l.b16 %v3505
        %v4045 = vunpack.c.h.b16 %v3505
        %v4046 = vunpack.c.l.b16 %v3506
        %v4047 = vunpack.c.h.b16 %v3506
        %v4048 = vunpack.c.l.b16 %v3507
        %v4049 = vunpack.c.l.b16 %v3508
        %v4050 = vunpack.c.h.b16 %v3508
        %v4051 = vunpack.c.l.b16 %v3509
        %v4052 = vunpack.c.h.b16 %v3509
        %v4053 = vunpack.c.l.b16 %v3510
        %v4054 = vunpack.c.h.b16 %v3510
        %v4055 = vunpack.c.l.b16 %v3511
        %v4056 = vunpack.c.l.b16 %v3512
        %v4057 = vunpack.c.h.b16 %v3512
        %v4058 = vunpack.c.l.b16 %v3513
        %v4059 = vunpack.c.h.b16 %v3513
        %v4060 = vunpack.c.l.b16 %v3514
        %v4061 = vunpack.c.h.b16 %v3514
        %v4062 = vunpack.c.l.b16 %v3515
        %v4063 = vunpack.c.l.b16 %v3516
        %v4064 = vunpack.c.h.b16 %v3516
        %v4065 = vunpack.c.l.b16 %v3517
        %v4066 = vunpack.c.h.b16 %v3517
        %v4067 = vunpack.c.l.b16 %v3518
        %v4068 = vunpack.c.h.b16 %v3518
        %v4069 = vunpack.c.l.b16 %v3519
        %v4070 = vunpack.c.l.b16 %v3520
        %v4071 = vunpack.c.h.b16 %v3520
        %v4072 = vunpack.c.l.b16 %v3521
        %v4073 = vunpack.c.h.b16 %v3521
        %v4074 = vunpack.c.l.b16 %v3522
        %v4075 = vunpack.c.h.b16 %v3522
        %v4076 = vunpack.c.l.b16 %v3523
        %v4077 = vunpack.c.l.b16 %v3524
        %v4078 = vunpack.c.h.b16 %v3524
        %v4079 = vunpack.c.l.b16 %v3525
        %v4080 = vunpack.c.h.b16 %v3525
        %v4081 = vunpack.c.l.b16 %v3526
        %v4082 = vunpack.c.h.b16 %v3526
        %v4083 = vunpack.c.l.b16 %v3527
        %v4084 = vunpack.c.l.b16 %v3528
        %v4085 = vunpack.c.h.b16 %v3528
        %v4086 = vunpack.c.l.b16 %v3529
        %v4087 = vunpack.c.h.b16 %v3529
        %v4088 = vunpack.c.l.b16 %v3530
        %v4089 = vunpack.c.h.b16 %v3530
        %v4090 = vunpack.c.l.b16 %v3531
        %v4091 = vunpack.c.l.b16 %v3532
        %v4092 = vunpack.c.h.b16 %v3532
        %v4093 = vunpack.c.l.b16 %v3533
        %v4094 = vunpack.c.h.b16 %v3533
        %v4095 = vunpack.c.l.b16 %v3534
        %v4096 = vunpack.c.h.b16 %v3534
        %v4097 = vunpack.c.l.b16 %v3535
        %v4098 = vunpack.c.l.b16 %v3536
        %v4099 = vunpack.c.h.b16 %v3536
        %v4100 = vunpack.c.l.b16 %v3537
        %v4101 = vunpack.c.h.b16 %v3537
        %v4102 = vunpack.c.l.b16 %v3538
        %v4103 = vunpack.c.h.b16 %v3538
        %v4104 = vunpack.c.l.b16 %v3539
        %v4105 = vunpack.c.l.b16 %v3540
        %v4106 = vunpack.c.h.b16 %v3540
        %v4107 = vunpack.c.l.b16 %v3541
        %v4108 = vunpack.c.h.b16 %v3541
        %v4109 = vunpack.c.l.b16 %v3542
        %v4110 = vunpack.c.h.b16 %v3542
        %v4111 = vunpack.c.l.b16 %v3543
        %v4112 = vunpack.c.l.b16 %v3544
        %v4113 = vunpack.c.h.b16 %v3544
        %v4114 = vunpack.c.l.b16 %v3545
        %v4115 = vunpack.c.h.b16 %v3545
        %v4116 = vunpack.c.l.b16 %v3546
        %v4117 = vunpack.c.h.b16 %v3546
        %v4118 = vunpack.c.l.b16 %v3547
        %v4119 = vunpack.c.l.b16 %v3548
        %v4120 = vunpack.c.h.b16 %v3548
        %v4121 = vunpack.c.l.b16 %v3549
        %v4122 = vunpack.c.h.b16 %v3549
        %v4123 = vunpack.c.l.b16 %v3550
        %v4124 = vunpack.c.h.b16 %v3550
        %v4125 = vunpack.c.l.b16 %v3551
        %v4126 = vunpack.c.l.b16 %v3552
        %v4127 = vunpack.c.h.b16 %v3552
        %v4128 = vunpack.c.l.b16 %v3553
        %v4129 = vunpack.c.h.b16 %v3553
        %v4130 = vunpack.c.l.b16 %v3554
        %v4131 = vunpack.c.h.b16 %v3554
        %v4132 = vunpack.c.l.b16 %v3555
        %v4133 = vunpack.c.l.b16 %v3556
        %v4134 = vunpack.c.h.b16 %v3556
        %v4135 = vunpack.c.l.b16 %v3557
        %v4136 = vunpack.c.h.b16 %v3557
        %v4137 = vunpack.c.l.b16 %v3558
        %v4138 = vunpack.c.h.b16 %v3558
        %v4139 = vunpack.c.l.b16 %v3559
        %v4140 = vunpack.c.l.b16 %v3560
        %v4141 = vunpack.c.h.b16 %v3560
        %v4142 = vunpack.c.l.b16 %v3561
        %v4143 = vunpack.c.h.b16 %v3561
        %v4144 = vunpack.c.l.b16 %v3562
        %v4145 = vunpack.c.h.b16 %v3562
        %v4146 = vunpack.c.l.b16 %v3563
        %v4147 = vunpack.c.l.b16 %v3564
        %v4148 = vunpack.c.h.b16 %v3564
        %v4149 = vunpack.c.l.b16 %v3565
        %v4150 = vunpack.c.h.b16 %v3565
        %v4151 = vunpack.c.l.b16 %v3566
        %v4152 = vunpack.c.h.b16 %v3566
        %v4153 = vunpack.c.l.b16 %v3567
        %v4154 = vpack.c.b16 %v3811, %v3804
        %v4155 = vpack.c.b16 %v3812, %v3805
        %v4156 = vpack.c.b16 %v3813, %v3806
        %v4157 = vpack.c.b16 %v3814, %v3807
        %v4158 = vpack.c.b16 %v3815, %v3808
        %v4159 = vpack.c.b16 %v3816, %v3809
        %v4160 = vpack.c.b16 %v3817, %v3810
        %v4161 = vpack.c.b16 %v3825, %v3818
        %v4162 = vpack.c.b16 %v3826, %v3819
        %v4163 = vpack.c.b16 %v3827, %v3820
        %v4164 = vpack.c.b16 %v3828, %v3821
        %v4165 = vpack.c.b16 %v3829, %v3822
        %v4166 = vpack.c.b16 %v3830, %v3823
        %v4167 = vpack.c.b16 %v3831, %v3824
        %v4168 = vpack.c.b16 %v3839, %v3832
        %v4169 = vpack.c.b16 %v3840, %v3833
        %v4170 = vpack.c.b16 %v3841, %v3834
        %v4171 = vpack.c.b16 %v3842, %v3835
        %v4172 = vpack.c.b16 %v3843, %v3836
        %v4173 = vpack.c.b16 %v3844, %v3837
        %v4174 = vpack.c.b16 %v3845, %v3838
        %v4175 = vpack.c.b16 %v3853, %v3846
        %v4176 = vpack.c.b16 %v3854, %v3847
        %v4177 = vpack.c.b16 %v3855, %v3848
        %v4178 = vpack.c.b16 %v3856, %v3849
        %v4179 = vpack.c.b16 %v3857, %v3850
        %v4180 = vpack.c.b16 %v3858, %v3851
        %v4181 = vpack.c.b16 %v3859, %v3852
        %v4182 = vpack.c.b16 %v3867, %v3860
        %v4183 = vpack.c.b16 %v3868, %v3861
        %v4184 = vpack.c.b16 %v3869, %v3862
        %v4185 = vpack.c.b16 %v3870, %v3863
        %v4186 = vpack.c.b16 %v3871, %v3864
        %v4187 = vpack.c.b16 %v3872, %v3865
        %v4188 = vpack.c.b16 %v3873, %v3866
        %v4189 = vpack.c.b16 %v3881, %v3874
        %v4190 = vpack.c.b16 %v3882, %v3875
        %v4191 = vpack.c.b16 %v3883, %v3876
        %v4192 = vpack.c.b16 %v3884, %v3877
        %v4193 = vpack.c.b16 %v3885, %v3878
        %v4194 = vpack.c.b16 %v3886, %v3879
        %v4195 = vpack.c.b16 %v3887, %v3880
        %v4196 = vpack.c.b16 %v3895, %v3888
        %v4197 = vpack.c.b16 %v3896, %v3889
        %v4198 = vpack.c.b16 %v3897, %v3890
        %v4199 = vpack.c.b16 %v3898, %v3891
        %v4200 = vpack.c.b16 %v3899, %v3892
        %v4201 = vpack.c.b16 %v3900, %v3893
        %v4202 = vpack.c.b16 %v3901, %v3894
        %v4203 = vpack.c.b16 %v3909, %v3902
        %v4204 = vpack.c.b16 %v3910, %v3903
        %v4205 = vpack.c.b16 %v3911, %v3904
        %v4206 = vpack.c.b16 %v3912, %v3905
        %v4207 = vpack.c.b16 %v3913, %v3906
        %v4208 = vpack.c.b16 %v3914, %v3907
        %v4209 = vpack.c.b16 %v3915, %v3908
        %v4210 = vpack.c.b16 %v3923, %v3916
        %v4211 = vpack.c.b16 %v3924, %v3917
        %v4212 = vpack.c.b16 %v3925, %v3918
        %v4213 = vpack.c.b16 %v3926, %v3919
        %v4214 = vpack.c.b16 %v3927, %v3920
        %v4215 = vpack.c.b16 %v3928, %v3921
        %v4216 = vpack.c.b16 %v3929, %v3922
        %v4217 = vpack.c.b16 %v3937, %v3930
        %v4218 = vpack.c.b16 %v3938, %v3931
        %v4219 = vpack.c.b16 %v3939, %v3932
        %v4220 = vpack.c.b16 %v3940, %v3933
        %v4221 = vpack.c.b16 %v3941, %v3934
        %v4222 = vpack.c.b16 %v3942, %v3935
        %v4223 = vpack.c.b16 %v3943, %v3936
        %v4224 = vpack.c.b16 %v3951, %v3944
        %v4225 = vpack.c.b16 %v3952, %v3945
        %v4226 = vpack.c.b16 %v3953, %v3946
        %v4227 = vpack.c.b16 %v3954, %v3947
        %v4228 = vpack.c.b16 %v3955, %v3948
        %v4229 = vpack.c.b16 %v3956, %v3949
        %v4230 = vpack.c.b16 %v3957, %v3950
        %v4231 = vpack.c.b16 %v3965, %v3958
        %v4232 = vpack.c.b16 %v3966, %v3959
        %v4233 = vpack.c.b16 %v3967, %v3960
        %v4234 = vpack.c.b16 %v3968, %v3961
        %v4235 = vpack.c.b16 %v3969, %v3962
        %v4236 = vpack.c.b16 %v3970, %v3963
        %v4237 = vpack.c.b16 %v3971, %v3964
        %v4238 = vpack.c.b16 %v3979, %v3972
        %v4239 = vpack.c.b16 %v3980, %v3973
        %v4240 = vpack.c.b16 %v3981, %v3974
        %v4241 = vpack.c.b16 %v3982, %v3975
        %v4242 = vpack.c.b16 %v3983, %v3976
        %v4243 = vpack.c.b16 %v3984, %v3977
        %v4244 = vpack.c.b16 %v3985, %v3978
        %v4245 = vpack.c.b16 %v3993, %v3986
        %v4246 = vpack.c.b16 %v3994, %v3987
        %v4247 = vpack.c.b16 %v3995, %v3988
        %v4248 = vpack.c.b16 %v3996, %v3989
        %v4249 = vpack.c.b16 %v3997, %v3990
        %v4250 = vpack.c.b16 %v3998, %v3991
        %v4251 = vpack.c.b16 %v3999, %v3992
        %v4252 = vpack.c.b16 %v4007, %v4000
        %v4253 = vpack.c.b16 %v4008, %v4001
        %v4254 = vpack.c.b16 %v4009, %v4002
        %v4255 = vpack.c.b16 %v4010, %v4003
        %v4256 = vpack.c.b16 %v4011, %v4004
        %v4257 = vpack.c.b16 %v4012, %v4005
        %v4258 = vpack.c.b16 %v4013, %v4006
        %v4259 = vpack.c.b16 %v4021, %v4014
        %v4260 = vpack.c.b16 %v4022, %v4015
        %v4261 = vpack.c.b16 %v4023, %v4016
        %v4262 = vpack.c.b16 %v4024, %v4017
        %v4263 = vpack.c.b16 %v4025, %v4018
        %v4264 = vpack.c.b16 %v4026, %v4019
        %v4265 = vpack.c.b16 %v4027, %v4020
        %v4266 = vpack.c.b16 %v4035, %v4028
        %v4267 = vpack.c.b16 %v4036, %v4029
        %v4268 = vpack.c.b16 %v4037, %v4030
        %v4269 = vpack.c.b16 %v4038, %v4031
        %v4270 = vpack.c.b16 %v4039, %v4032
        %v4271 = vpack.c.b16 %v4040, %v4033
        %v4272 = vpack.c.b16 %v4041, %v4034
        %v4273 = vpack.c.b16 %v4049, %v4042
        %v4274 = vpack.c.b16 %v4050, %v4043
        %v4275 = vpack.c.b16 %v4051, %v4044
        %v4276 = vpack.c.b16 %v4052, %v4045
        %v4277 = vpack.c.b16 %v4053, %v4046
        %v4278 = vpack.c.b16 %v4054, %v4047
        %v4279 = vpack.c.b16 %v4055, %v4048
        %v4280 = vpack.c.b16 %v4063, %v4056
        %v4281 = vpack.c.b16 %v4064, %v4057
        %v4282 = vpack.c.b16 %v4065, %v4058
        %v4283 = vpack.c.b16 %v4066, %v4059
        %v4284 = vpack.c.b16 %v4067, %v4060
        %v4285 = vpack.c.b16 %v4068, %v4061
        %v4286 = vpack.c.b16 %v4069, %v4062
        %v4287 = vpack.c.b16 %v4077, %v4070
        %v4288 = vpack.c.b16 %v4078, %v4071
        %v4289 = vpack.c.b16 %v4079, %v4072
        %v4290 = vpack.c.b16 %v4080, %v4073
        %v4291 = vpack.c.b16 %v4081, %v4074
        %v4292 = vpack.c.b16 %v4082, %v4075
        %v4293 = vpack.c.b16 %v4083, %v4076
        %v4294 = vpack.c.b16 %v4091, %v4084
        %v4295 = vpack.c.b16 %v4092, %v4085
        %v4296 = vpack.c.b16 %v4093, %v4086
        %v4297 = vpack.c.b16 %v4094, %v4087
        %v4298 = vpack.c.b16 %v4095, %v4088
        %v4299 = vpack.c.b16 %v4096, %v4089
        %v4300 = vpack.c.b16 %v4097, %v4090
        %v4301 = vpack.c.b16 %v4105, %v4098
        %v4302 = vpack.c.b16 %v4106, %v4099
        %v4303 = vpack.c.b16 %v4107, %v4100
        %v4304 = vpack.c.b16 %v4108, %v4101
        %v4305 = vpack.c.b16 %v4109, %v4102
        %v4306 = vpack.c.b16 %v4110, %v4103
        %v4307 = vpack.c.b16 %v4111, %v4104
        %v4308 = vpack.c.b16 %v4119, %v4112
        %v4309 = vpack.c.b16 %v4120, %v4113
        %v4310 = vpack.c.b16 %v4121, %v4114
        %v4311 = vpack.c.b16 %v4122, %v4115
        %v4312 = vpack.c.b16 %v4123, %v4116
        %v4313 = vpack.c.b16 %v4124, %v4117
        %v4314 = vpack.c.b16 %v4125, %v4118
        %v4315 = vpack.c.b16 %v4133, %v4126
        %v4316 = vpack.c.b16 %v4134, %v4127
        %v4317 = vpack.c.b16 %v4135, %v4128
        %v4318 = vpack.c.b16 %v4136, %v4129
        %v4319 = vpack.c.b16 %v4137, %v4130
        %v4320 = vpack.c.b16 %v4138, %v4131
        %v4321 = vpack.c.b16 %v4139, %v4132
        %v4322 = vpack.c.b16 %v4147, %v4140
        %v4323 = vpack.c.b16 %v4148, %v4141
        %v4324 = vpack.c.b16 %v4149, %v4142
        %v4325 = vpack.c.b16 %v4150, %v4143
        %v4326 = vpack.c.b16 %v4151, %v4144
        %v4327 = vpack.c.b16 %v4152, %v4145
        %v4328 = vpack.c.b16 %v4153, %v4146
        %v4505 = vsel %vm1674, %v3347, 0
        %v4508 = vsel %vm1674, %v3351, 0
        %v4511 = vsel %vm1674, %v3355, 0
        %v4514 = vsel %vm1674, %v3359, 0
        %v4517 = vsel %vm1674, %v3363, 0
        %v4520 = vsel %vm1674, %v3367, 0
        %4522 = vmatprep.subr.bf16.mxu0 %v4155
        %4523 = vmatpush1.bf16.msra.mxu0 %v4154
        %4524 = vmatprep.subr.bf16.mxu0 %v4162
        %4525 = vmatpush1.bf16.msra.mxu0 %v4161
        %4526 = vmatprep.subr.bf16.mxu0 %v4169
        %4527 = vmatpush1.bf16.msra.mxu0 %v4168
        %4528 = vmatprep.subr.bf16.mxu0 %v4176
        %4529 = vmatpush1.bf16.msra.mxu0 %v4175
        %4530 = vmatprep.subr.bf16.mxu0 %v4183
        %4531 = vmatpush1.bf16.msra.mxu0 %v4182
        %4532 = vmatprep.subr.bf16.mxu0 %v4190
        %4533 = vmatpush1.bf16.msra.mxu0 %v4189
        %4534 = vmatprep.subr.bf16.mxu0 %v4197
        %4535 = vmatpush1.bf16.msra.mxu0 %v4196
        %4536 = vmatprep.subr.bf16.mxu0 %v4204
        %4537 = vmatpush1.bf16.msra.mxu0 %v4203
        %4538 = vmatprep.subr.bf16.mxu0 %v4211
        %4539 = vmatpush1.bf16.msra.mxu0 %v4210
        %4540 = vmatprep.subr.bf16.mxu0 %v4218
        %4541 = vmatpush1.bf16.msra.mxu0 %v4217
        %4542 = vmatprep.subr.bf16.mxu0 %v4225
        %4543 = vmatpush1.bf16.msra.mxu0 %v4224
        %4544 = vmatprep.subr.bf16.mxu0 %v4232
        %4545 = vmatpush1.bf16.msra.mxu0 %v4231
        %4546 = vmatprep.subr.bf16.mxu0 %v4239
        %4547 = vmatpush1.bf16.msra.mxu0 %v4238
        %4548 = vmatprep.subr.bf16.mxu0 %v4246
        %4549 = vmatpush1.bf16.msra.mxu0 %v4245
        %4550 = vmatprep.subr.bf16.mxu0 %v4253
        %4551 = vmatpush1.bf16.msra.mxu0 %v4252
        %4552 = vmatprep.subr.bf16.mxu0 %v4260
        %4553 = vmatpush1.bf16.msra.mxu0 %v4259
        %4554 = vmatprep.mubr.bf16.mxu0 %v3345
        %4555 = vmatmul.mubr.bf16.gmra.mrb[0].mxu0 %v3344
        %v4556 = vpop.f32.mrb[0].mxu0
        %v4557 = vadd.f32 %v3572, %v4556
        %v4558 = vpop.f32.mrb[0].mxu0
        %v4559 = vadd.f32 %v3576, %v4558
        %v4560 = vpop.f32.mrb[0].mxu0
        %v4561 = vadd.f32 %v3572, %v4560
        %v4562 = vpop.f32.mrb[0].mxu0
        %v4563 = vadd.f32 %v3576, %v4562
        %4564 = vmatprep.mubr.bf16.mxu0 %v3349
        %4565 = vmatmul.mubr.bf16.gmra.mrb[0].mxu0 %v3348
        %v4566 = vpop.f32.mrb[0].mxu0
        %v4567 = vadd.f32 %v3572, %v4566
        %v4568 = vpop.f32.mrb[0].mxu0
        %v4569 = vadd.f32 %v3576, %v4568
        %v4570 = vpop.f32.mrb[0].mxu0
        %v4571 = vadd.f32 %v3572, %v4570
        %v4572 = vpop.f32.mrb[0].mxu0
        %v4573 = vadd.f32 %v3576, %v4572
        %4574 = vmatprep.mubr.bf16.mxu0 %v3353
        %4575 = vmatmul.mubr.bf16.gmra.mrb[0].mxu0 %v3352
        %v4576 = vpop.f32.mrb[0].mxu0
        %v4577 = vadd.f32 %v3572, %v4576
        %v4578 = vpop.f32.mrb[0].mxu0
        %v4579 = vadd.f32 %v3576, %v4578
        %v4580 = vpop.f32.mrb[0].mxu0
        %v4581 = vadd.f32 %v3572, %v4580
        %v4582 = vpop.f32.mrb[0].mxu0
        %v4583 = vadd.f32 %v3576, %v4582
        %4584 = vmatprep.mubr.bf16.mxu0 %v3357
        %4585 = vmatmul.mubr.bf16.gmra.mrb[0].mxu0 %v3356
        %v4586 = vpop.f32.mrb[0].mxu0
        %v4587 = vadd.f32 %v3572, %v4586
        %v4588 = vpop.f32.mrb[0].mxu0
        %v4589 = vadd.f32 %v3576, %v4588
        %v4590 = vpop.f32.mrb[0].mxu0
        %v4591 = vadd.f32 %v3572, %v4590
        %v4592 = vpop.f32.mrb[0].mxu0
        %v4593 = vadd.f32 %v3576, %v4592
        %4594 = vmatprep.mubr.bf16.mxu0 %v3361
        %4595 = vmatmul.mubr.bf16.gmra.mrb[0].mxu0 %v3360
        %v4596 = vpop.f32.mrb[0].mxu0
        %v4597 = vadd.f32 %v3572, %v4596
        %v4598 = vpop.f32.mrb[0].mxu0
        %v4599 = vadd.f32 %v3576, %v4598
        %v4600 = vpop.f32.mrb[0].mxu0
        %v4601 = vadd.f32 %v3572, %v4600
        %v4602 = vpop.f32.mrb[0].mxu0
        %v4603 = vadd.f32 %v3576, %v4602
        %4604 = vmatprep.mubr.bf16.mxu0 %v3365
        %4605 = vmatmul.mubr.bf16.gmra.mrb[0].mxu0 %v3364
        %v4606 = vpop.f32.mrb[0].mxu0
        %v4607 = vadd.f32 %v3572, %v4606
        %v4608 = vpop.f32.mrb[0].mxu0
        %v4609 = vadd.f32 %v3576, %v4608
        %v4610 = vpop.f32.mrb[0].mxu0
        %v4611 = vadd.f32 %v3572, %v4610
        %v4612 = vpop.f32.mrb[0].mxu0
        %v4613 = vadd.f32 %v3576, %v4612
        %4614 = vdwg.mxu0
        %4615 = vmatprep.subr.bf16.mxu0 %v4267
        %4616 = vmatpush1.bf16.msra.mxu0 %v4266
        %4617 = vmatprep.subr.bf16.mxu0 %v4274
        %4618 = vmatpush1.bf16.msra.mxu0 %v4273
        %4619 = vmatprep.subr.bf16.mxu0 %v4281
        %4620 = vmatpush1.bf16.msra.mxu0 %v4280
        %4621 = vmatprep.subr.bf16.mxu0 %v4288
        %4622 = vmatpush1.bf16.msra.mxu0 %v4287
        %4623 = vmatprep.subr.bf16.mxu0 %v4295
        %4624 = vmatpush1.bf16.msra.mxu0 %v4294
        %4625 = vmatprep.subr.bf16.mxu0 %v4302
        %4626 = vmatpush1.bf16.msra.mxu0 %v4301
        %4627 = vmatprep.subr.bf16.mxu0 %v4309
        %4628 = vmatpush1.bf16.msra.mxu0 %v4308
        %4629 = vmatprep.subr.bf16.mxu0 %v4316
        %4630 = vmatpush1.bf16.msra.mxu0 %v4315
        %4631 = vmatprep.subr.bf16.mxu0 %v4323
        %4632 = vmatpush1.bf16.msra.mxu0 %v4322
        %4633 = vmatprep.subr.bf16.mxu0 0
        %4634 = vmatpush1.bf16.msra.mxu0 0
        %4635 = vmatprep.subr.bf16.mxu0 0
        %4636 = vmatpush1.bf16.msra.mxu0 0
        %4637 = vmatprep.subr.bf16.mxu0 0
        %4638 = vmatpush1.bf16.msra.mxu0 0
        %4639 = vmatprep.subr.bf16.mxu0 0
        %4640 = vmatpush1.bf16.msra.mxu0 0
        %4641 = vmatprep.subr.bf16.mxu0 0
        %4642 = vmatpush1.bf16.msra.mxu0 0
        %4643 = vmatprep.subr.bf16.mxu0 0
        %4644 = vmatpush1.bf16.msra.mxu0 0
        %4645 = vmatprep.subr.bf16.mxu0 0
        %4646 = vmatpush1.bf16.msra.mxu0 0
        %4647 = vmatprep.mubr.bf16.mxu0 %v4505
        %4648 = vmatmul.mubr.bf16.gmra.mrb[0].mxu0 %v3346
        %v4649 = vpop.f32.mrb[0].mxu0
        %v4650 = vadd.f32 %v4557, %v4649
        %v4651 = vpop.f32.mrb[0].mxu0
        %v4652 = vadd.f32 %v4559, %v4651
        %v4653 = vpop.f32.mrb[0].mxu0
        %v4654 = vadd.f32 %v4561, %v4653
        %v4655 = vpop.f32.mrb[0].mxu0
        %v4656 = vadd.f32 %v4563, %v4655
        %4657 = vmatprep.mubr.bf16.mxu0 %v4508
        %4658 = vmatmul.mubr.bf16.gmra.mrb[0].mxu0 %v3350
        %v4659 = vpop.f32.mrb[0].mxu0
        %v4660 = vadd.f32 %v4567, %v4659
        %v4661 = vpop.f32.mrb[0].mxu0
        %v4662 = vadd.f32 %v4569, %v4661
        %v4663 = vpop.f32.mrb[0].mxu0
        %v4664 = vadd.f32 %v4571, %v4663
        %v4665 = vpop.f32.mrb[0].mxu0
        %v4666 = vadd.f32 %v4573, %v4665
        %4667 = vmatprep.mubr.bf16.mxu0 %v4511
        %4668 = vmatmul.mubr.bf16.gmra.mrb[0].mxu0 %v3354
        %v4669 = vpop.f32.mrb[0].mxu0
        %v4670 = vadd.f32 %v4577, %v4669
        %v4671 = vpop.f32.mrb[0].mxu0
        %v4672 = vadd.f32 %v4579, %v4671
        %v4673 = vpop.f32.mrb[0].mxu0
        %v4674 = vadd.f32 %v4581, %v4673
        %v4675 = vpop.f32.mrb[0].mxu0
        %v4676 = vadd.f32 %v4583, %v4675
        %4677 = vmatprep.mubr.bf16.mxu0 %v4514
        %4678 = vmatmul.mubr.bf16.gmra.mrb[0].mxu0 %v3358
        %v4679 = vpop.f32.mrb[0].mxu0
        %v4680 = vadd.f32 %v4587, %v4679
        %v4681 = vpop.f32.mrb[0].mxu0
        %v4682 = vadd.f32 %v4589, %v4681
        %v4683 = vpop.f32.mrb[0].mxu0
        %v4684 = vadd.f32 %v4591, %v4683
        %v4685 = vpop.f32.mrb[0].mxu0
        %v4686 = vadd.f32 %v4593, %v4685
        %4687 = vmatprep.mubr.bf16.mxu0 %v4517
        %4688 = vmatmul.mubr.bf16.gmra.mrb[0].mxu0 %v3362
        %v4689 = vpop.f32.mrb[0].mxu0
        %v4690 = vadd.f32 %v4597, %v4689
        %v4691 = vpop.f32.mrb[0].mxu0
        %v4692 = vadd.f32 %v4599, %v4691
        %v4693 = vpop.f32.mrb[0].mxu0
        %v4694 = vadd.f32 %v4601, %v4693
        %v4695 = vpop.f32.mrb[0].mxu0
        %v4696 = vadd.f32 %v4603, %v4695
        %4697 = vmatprep.mubr.bf16.mxu0 %v4520
        %4698 = vmatmul.mubr.bf16.gmra.mrb[0].mxu0 %v3366
        %v4699 = vpop.f32.mrb[0].mxu0
        %v4700 = vadd.f32 %v4607, %v4699
        %v4701 = vpop.f32.mrb[0].mxu0
        %v4702 = vadd.f32 %v4609, %v4701
        %v4703 = vpop.f32.mrb[0].mxu0
        %v4704 = vadd.f32 %v4611, %v4703
        %v4705 = vpop.f32.mrb[0].mxu0
        %v4706 = vadd.f32 %v4613, %v4705
        %4707 = vdwg.mxu0
        %4708 = vmatprep.subr.bf16.mxu0 %v4157
        %4709 = vmatpush1.bf16.msra.mxu0 %v4156
        %4710 = vmatprep.subr.bf16.mxu0 %v4164
        %4711 = vmatpush1.bf16.msra.mxu0 %v4163
        %4712 = vmatprep.subr.bf16.mxu0 %v4171
        %4713 = vmatpush1.bf16.msra.mxu0 %v4170
        %4714 = vmatprep.subr.bf16.mxu0 %v4178
        %4715 = vmatpush1.bf16.msra.mxu0 %v4177
        %4716 = vmatprep.subr.bf16.mxu0 %v4185
        %4717 = vmatpush1.bf16.msra.mxu0 %v4184
        %4718 = vmatprep.subr.bf16.mxu0 %v4192
        %4719 = vmatpush1.bf16.msra.mxu0 %v4191
        %4720 = vmatprep.subr.bf16.mxu0 %v4199
        %4721 = vmatpush1.bf16.msra.mxu0 %v4198
        %4722 = vmatprep.subr.bf16.mxu0 %v4206
        %4723 = vmatpush1.bf16.msra.mxu0 %v4205
        %4724 = vmatprep.subr.bf16.mxu0 %v4213
        %4725 = vmatpush1.bf16.msra.mxu0 %v4212
        %4726 = vmatprep.subr.bf16.mxu0 %v4220
        %4727 = vmatpush1.bf16.msra.mxu0 %v4219
        %4728 = vmatprep.subr.bf16.mxu0 %v4227
        %4729 = vmatpush1.bf16.msra.mxu0 %v4226
        %4730 = vmatprep.subr.bf16.mxu0 %v4234
        %4731 = vmatpush1.bf16.msra.mxu0 %v4233
        %4732 = vmatprep.subr.bf16.mxu0 %v4241
        %4733 = vmatpush1.bf16.msra.mxu0 %v4240
        %4734 = vmatprep.subr.bf16.mxu0 %v4248
        %4735 = vmatpush1.bf16.msra.mxu0 %v4247
        %4736 = vmatprep.subr.bf16.mxu0 %v4255
        %4737 = vmatpush1.bf16.msra.mxu0 %v4254
        %4738 = vmatprep.subr.bf16.mxu0 %v4262
        %4739 = vmatpush1.bf16.msra.mxu0 %v4261
        %4740 = vmatprep.mubr.bf16.mxu0 %v3345
        %4741 = vmatmul.mubr.bf16.gmra.mrb[0].mxu0 %v3344
        %v4742 = vpop.f32.mrb[0].mxu0
        %v4743 = vadd.f32 %v3580, %v4742
        %v4744 = vpop.f32.mrb[0].mxu0
        %v4745 = vadd.f32 %v3584, %v4744
        %v4746 = vpop.f32.mrb[0].mxu0
        %v4747 = vadd.f32 %v3580, %v4746
        %v4748 = vpop.f32.mrb[0].mxu0
        %v4749 = vadd.f32 %v3584, %v4748
        %4750 = vmatprep.mubr.bf16.mxu0 %v3349
        %4751 = vmatmul.mubr.bf16.gmra.mrb[0].mxu0 %v3348
        %v4752 = vpop.f32.mrb[0].mxu0
        %v4753 = vadd.f32 %v3580, %v4752
        %v4754 = vpop.f32.mrb[0].mxu0
        %v4755 = vadd.f32 %v3584, %v4754
        %v4756 = vpop.f32.mrb[0].mxu0
        %v4757 = vadd.f32 %v3580, %v4756
        %v4758 = vpop.f32.mrb[0].mxu0
        %v4759 = vadd.f32 %v3584, %v4758
        %4760 = vmatprep.mubr.bf16.mxu0 %v3353
        %4761 = vmatmul.mubr.bf16.gmra.mrb[0].mxu0 %v3352
        %v4762 = vpop.f32.mrb[0].mxu0
        %v4763 = vadd.f32 %v3580, %v4762
        %v4764 = vpop.f32.mrb[0].mxu0
        %v4765 = vadd.f32 %v3584, %v4764
        %v4766 = vpop.f32.mrb[0].mxu0
        %v4767 = vadd.f32 %v3580, %v4766
        %v4768 = vpop.f32.mrb[0].mxu0
        %v4769 = vadd.f32 %v3584, %v4768
        %4770 = vmatprep.mubr.bf16.mxu0 %v3357
        %4771 = vmatmul.mubr.bf16.gmra.mrb[0].mxu0 %v3356
        %v4772 = vpop.f32.mrb[0].mxu0
        %v4773 = vadd.f32 %v3580, %v4772
        %v4774 = vpop.f32.mrb[0].mxu0
        %v4775 = vadd.f32 %v3584, %v4774
        %v4776 = vpop.f32.mrb[0].mxu0
        %v4777 = vadd.f32 %v3580, %v4776
        %v4778 = vpop.f32.mrb[0].mxu0
        %v4779 = vadd.f32 %v3584, %v4778
        %4780 = vmatprep.mubr.bf16.mxu0 %v3361
        %4781 = vmatmul.mubr.bf16.gmra.mrb[0].mxu0 %v3360
        %v4782 = vpop.f32.mrb[0].mxu0
        %v4783 = vadd.f32 %v3580, %v4782
        %v4784 = vpop.f32.mrb[0].mxu0
        %v4785 = vadd.f32 %v3584, %v4784
        %v4786 = vpop.f32.mrb[0].mxu0
        %v4787 = vadd.f32 %v3580, %v4786
        %v4788 = vpop.f32.mrb[0].mxu0
        %v4789 = vadd.f32 %v3584, %v4788
        %4790 = vmatprep.mubr.bf16.mxu0 %v3365
        %4791 = vmatmul.mubr.bf16.gmra.mrb[0].mxu0 %v3364
        %v4792 = vpop.f32.mrb[0].mxu0
        %v4793 = vadd.f32 %v3580, %v4792
        %v4794 = vpop.f32.mrb[0].mxu0
        %v4795 = vadd.f32 %v3584, %v4794
        %v4796 = vpop.f32.mrb[0].mxu0
        %v4797 = vadd.f32 %v3580, %v4796
        %v4798 = vpop.f32.mrb[0].mxu0
        %v4799 = vadd.f32 %v3584, %v4798
        %4800 = vdwg.mxu0
        %4801 = vmatprep.subr.bf16.mxu0 %v4269
        %4802 = vmatpush1.bf16.msra.mxu0 %v4268
        %4803 = vmatprep.subr.bf16.mxu0 %v4276
        %4804 = vmatpush1.bf16.msra.mxu0 %v4275
        %4805 = vmatprep.subr.bf16.mxu0 %v4283
        %4806 = vmatpush1.bf16.msra.mxu0 %v4282
        %4807 = vmatprep.subr.bf16.mxu0 %v4290
        %4808 = vmatpush1.bf16.msra.mxu0 %v4289
        %4809 = vmatprep.subr.bf16.mxu0 %v4297
        %4810 = vmatpush1.bf16.msra.mxu0 %v4296
        %4811 = vmatprep.subr.bf16.mxu0 %v4304
        %4812 = vmatpush1.bf16.msra.mxu0 %v4303
        %4813 = vmatprep.subr.bf16.mxu0 %v4311
        %4814 = vmatpush1.bf16.msra.mxu0 %v4310
        %4815 = vmatprep.subr.bf16.mxu0 %v4318
        %4816 = vmatpush1.bf16.msra.mxu0 %v4317
        %4817 = vmatprep.subr.bf16.mxu0 %v4325
        %4818 = vmatpush1.bf16.msra.mxu0 %v4324
        %4819 = vmatprep.subr.bf16.mxu0 0
        %4820 = vmatpush1.bf16.msra.mxu0 0
        %4821 = vmatprep.subr.bf16.mxu0 0
        %4822 = vmatpush1.bf16.msra.mxu0 0
        %4823 = vmatprep.subr.bf16.mxu0 0
        %4824 = vmatpush1.bf16.msra.mxu0 0
        %4825 = vmatprep.subr.bf16.mxu0 0
        %4826 = vmatpush1.bf16.msra.mxu0 0
        %4827 = vmatprep.subr.bf16.mxu0 0
        %4828 = vmatpush1.bf16.msra.mxu0 0
        %4829 = vmatprep.subr.bf16.mxu0 0
        %4830 = vmatpush1.bf16.msra.mxu0 0
        %4831 = vmatprep.subr.bf16.mxu0 0
        %4832 = vmatpush1.bf16.msra.mxu0 0
        %4833 = vmatprep.mubr.bf16.mxu0 %v4505
        %4834 = vmatmul.mubr.bf16.gmra.mrb[0].mxu0 %v3346
        %v4835 = vpop.f32.mrb[0].mxu0
        %v4836 = vadd.f32 %v4743, %v4835
        %v4837 = vpop.f32.mrb[0].mxu0
        %v4838 = vadd.f32 %v4745, %v4837
        %v4839 = vpop.f32.mrb[0].mxu0
        %v4840 = vadd.f32 %v4747, %v4839
        %v4841 = vpop.f32.mrb[0].mxu0
        %v4842 = vadd.f32 %v4749, %v4841
        %4843 = vmatprep.mubr.bf16.mxu0 %v4508
        %4844 = vmatmul.mubr.bf16.gmra.mrb[0].mxu0 %v3350
        %v4845 = vpop.f32.mrb[0].mxu0
        %v4846 = vadd.f32 %v4753, %v4845
        %v4847 = vpop.f32.mrb[0].mxu0
        %v4848 = vadd.f32 %v4755, %v4847
        %v4849 = vpop.f32.mrb[0].mxu0
        %v4850 = vadd.f32 %v4757, %v4849
        %v4851 = vpop.f32.mrb[0].mxu0
        %v4852 = vadd.f32 %v4759, %v4851
        %4853 = vmatprep.mubr.bf16.mxu0 %v4511
        %4854 = vmatmul.mubr.bf16.gmra.mrb[0].mxu0 %v3354
        %v4855 = vpop.f32.mrb[0].mxu0
        %v4856 = vadd.f32 %v4763, %v4855
        %v4857 = vpop.f32.mrb[0].mxu0
        %v4858 = vadd.f32 %v4765, %v4857
        %v4859 = vpop.f32.mrb[0].mxu0
        %v4860 = vadd.f32 %v4767, %v4859
        %v4861 = vpop.f32.mrb[0].mxu0
        %v4862 = vadd.f32 %v4769, %v4861
        %4863 = vmatprep.mubr.bf16.mxu0 %v4514
        %4864 = vmatmul.mubr.bf16.gmra.mrb[0].mxu0 %v3358
        %v4865 = vpop.f32.mrb[0].mxu0
        %v4866 = vadd.f32 %v4773, %v4865
        %v4867 = vpop.f32.mrb[0].mxu0
        %v4868 = vadd.f32 %v4775, %v4867
        %v4869 = vpop.f32.mrb[0].mxu0
        %v4870 = vadd.f32 %v4777, %v4869
        %v4871 = vpop.f32.mrb[0].mxu0
        %v4872 = vadd.f32 %v4779, %v4871
        %4873 = vmatprep.mubr.bf16.mxu0 %v4517
        %4874 = vmatmul.mubr.bf16.gmra.mrb[0].mxu0 %v3362
        %v4875 = vpop.f32.mrb[0].mxu0
        %v4876 = vadd.f32 %v4783, %v4875
        %v4877 = vpop.f32.mrb[0].mxu0
        %v4878 = vadd.f32 %v4785, %v4877
        %v4879 = vpop.f32.mrb[0].mxu0
        %v4880 = vadd.f32 %v4787, %v4879
        %v4881 = vpop.f32.mrb[0].mxu0
        %v4882 = vadd.f32 %v4789, %v4881
        %4883 = vmatprep.mubr.bf16.mxu0 %v4520
        %4884 = vmatmul.mubr.bf16.gmra.mrb[0].mxu0 %v3366
        %v4885 = vpop.f32.mrb[0].mxu0
        %v4886 = vadd.f32 %v4793, %v4885
        %v4887 = vpop.f32.mrb[0].mxu0
        %v4888 = vadd.f32 %v4795, %v4887
        %v4889 = vpop.f32.mrb[0].mxu0
        %v4890 = vadd.f32 %v4797, %v4889
        %v4891 = vpop.f32.mrb[0].mxu0
        %v4892 = vadd.f32 %v4799, %v4891
        %4893 = vdwg.mxu0
        %4894 = vmatprep.subr.bf16.mxu0 %v4159
        %4895 = vmatpush1.bf16.msra.mxu0 %v4158
        %4896 = vmatprep.subr.bf16.mxu0 %v4166
        %4897 = vmatpush1.bf16.msra.mxu0 %v4165
        %4898 = vmatprep.subr.bf16.mxu0 %v4173
        %4899 = vmatpush1.bf16.msra.mxu0 %v4172
        %4900 = vmatprep.subr.bf16.mxu0 %v4180
        %4901 = vmatpush1.bf16.msra.mxu0 %v4179
        %4902 = vmatprep.subr.bf16.mxu0 %v4187
        %4903 = vmatpush1.bf16.msra.mxu0 %v4186
        %4904 = vmatprep.subr.bf16.mxu0 %v4194
        %4905 = vmatpush1.bf16.msra.mxu0 %v4193
        %4906 = vmatprep.subr.bf16.mxu0 %v4201
        %4907 = vmatpush1.bf16.msra.mxu0 %v4200
        %4908 = vmatprep.subr.bf16.mxu0 %v4208
        %4909 = vmatpush1.bf16.msra.mxu0 %v4207
        %4910 = vmatprep.subr.bf16.mxu0 %v4215
        %4911 = vmatpush1.bf16.msra.mxu0 %v4214
        %4912 = vmatprep.subr.bf16.mxu0 %v4222
        %4913 = vmatpush1.bf16.msra.mxu0 %v4221
        %4914 = vmatprep.subr.bf16.mxu0 %v4229
        %4915 = vmatpush1.bf16.msra.mxu0 %v4228
        %4916 = vmatprep.subr.bf16.mxu0 %v4236
        %4917 = vmatpush1.bf16.msra.mxu0 %v4235
        %4918 = vmatprep.subr.bf16.mxu0 %v4243
        %4919 = vmatpush1.bf16.msra.mxu0 %v4242
        %4920 = vmatprep.subr.bf16.mxu0 %v4250
        %4921 = vmatpush1.bf16.msra.mxu0 %v4249
        %4922 = vmatprep.subr.bf16.mxu0 %v4257
        %4923 = vmatpush1.bf16.msra.mxu0 %v4256
        %4924 = vmatprep.subr.bf16.mxu0 %v4264
        %4925 = vmatpush1.bf16.msra.mxu0 %v4263
        %4926 = vmatprep.mubr.bf16.mxu0 %v3345
        %4927 = vmatmul.mubr.bf16.gmra.mrb[0].mxu0 %v3344
        %v4928 = vpop.f32.mrb[0].mxu0
        %v4929 = vadd.f32 %v3588, %v4928
        %v4930 = vpop.f32.mrb[0].mxu0
        %v4931 = vadd.f32 %v3592, %v4930
        %v4932 = vpop.f32.mrb[0].mxu0
        %v4933 = vadd.f32 %v3588, %v4932
        %v4934 = vpop.f32.mrb[0].mxu0
        %v4935 = vadd.f32 %v3592, %v4934
        %4936 = vmatprep.mubr.bf16.mxu0 %v3349
        %4937 = vmatmul.mubr.bf16.gmra.mrb[0].mxu0 %v3348
        %v4938 = vpop.f32.mrb[0].mxu0
        %v4939 = vadd.f32 %v3588, %v4938
        %v4940 = vpop.f32.mrb[0].mxu0
        %v4941 = vadd.f32 %v3592, %v4940
        %v4942 = vpop.f32.mrb[0].mxu0
        %v4943 = vadd.f32 %v3588, %v4942
        %v4944 = vpop.f32.mrb[0].mxu0
        %v4945 = vadd.f32 %v3592, %v4944
        %4946 = vmatprep.mubr.bf16.mxu0 %v3353
        %4947 = vmatmul.mubr.bf16.gmra.mrb[0].mxu0 %v3352
        %v4948 = vpop.f32.mrb[0].mxu0
        %v4949 = vadd.f32 %v3588, %v4948
        %v4950 = vpop.f32.mrb[0].mxu0
        %v4951 = vadd.f32 %v3592, %v4950
        %v4952 = vpop.f32.mrb[0].mxu0
        %v4953 = vadd.f32 %v3588, %v4952
        %v4954 = vpop.f32.mrb[0].mxu0
        %v4955 = vadd.f32 %v3592, %v4954
        %4956 = vmatprep.mubr.bf16.mxu0 %v3357
        %4957 = vmatmul.mubr.bf16.gmra.mrb[0].mxu0 %v3356
        %v4958 = vpop.f32.mrb[0].mxu0
        %v4959 = vadd.f32 %v3588, %v4958
        %v4960 = vpop.f32.mrb[0].mxu0
        %v4961 = vadd.f32 %v3592, %v4960
        %v4962 = vpop.f32.mrb[0].mxu0
        %v4963 = vadd.f32 %v3588, %v4962
        %v4964 = vpop.f32.mrb[0].mxu0
        %v4965 = vadd.f32 %v3592, %v4964
        %4966 = vmatprep.mubr.bf16.mxu0 %v3361
        %4967 = vmatmul.mubr.bf16.gmra.mrb[0].mxu0 %v3360
        %v4968 = vpop.f32.mrb[0].mxu0
        %v4969 = vadd.f32 %v3588, %v4968
        %v4970 = vpop.f32.mrb[0].mxu0
        %v4971 = vadd.f32 %v3592, %v4970
        %v4972 = vpop.f32.mrb[0].mxu0
        %v4973 = vadd.f32 %v3588, %v4972
        %v4974 = vpop.f32.mrb[0].mxu0
        %v4975 = vadd.f32 %v3592, %v4974
        %4976 = vmatprep.mubr.bf16.mxu0 %v3365
        %4977 = vmatmul.mubr.bf16.gmra.mrb[0].mxu0 %v3364
        %v4978 = vpop.f32.mrb[0].mxu0
        %v4979 = vadd.f32 %v3588, %v4978
        %v4980 = vpop.f32.mrb[0].mxu0
        %v4981 = vadd.f32 %v3592, %v4980
        %v4982 = vpop.f32.mrb[0].mxu0
        %v4983 = vadd.f32 %v3588, %v4982
        %v4984 = vpop.f32.mrb[0].mxu0
        %v4985 = vadd.f32 %v3592, %v4984
        %4986 = vdwg.mxu0
        %4987 = vmatprep.subr.bf16.mxu0 %v4271
        %4988 = vmatpush1.bf16.msra.mxu0 %v4270
        %4989 = vmatprep.subr.bf16.mxu0 %v4278
        %4990 = vmatpush1.bf16.msra.mxu0 %v4277
        %4991 = vmatprep.subr.bf16.mxu0 %v4285
        %4992 = vmatpush1.bf16.msra.mxu0 %v4284
        %4993 = vmatprep.subr.bf16.mxu0 %v4292
        %4994 = vmatpush1.bf16.msra.mxu0 %v4291
        %4995 = vmatprep.subr.bf16.mxu0 %v4299
        %4996 = vmatpush1.bf16.msra.mxu0 %v4298
        %4997 = vmatprep.subr.bf16.mxu0 %v4306
        %4998 = vmatpush1.bf16.msra.mxu0 %v4305
        %4999 = vmatprep.subr.bf16.mxu0 %v4313
        %5000 = vmatpush1.bf16.msra.mxu0 %v4312
        %5001 = vmatprep.subr.bf16.mxu0 %v4320
        %5002 = vmatpush1.bf16.msra.mxu0 %v4319
        %5003 = vmatprep.subr.bf16.mxu0 %v4327
        %5004 = vmatpush1.bf16.msra.mxu0 %v4326
        %5005 = vmatprep.subr.bf16.mxu0 0
        %5006 = vmatpush1.bf16.msra.mxu0 0
        %5007 = vmatprep.subr.bf16.mxu0 0
        %5008 = vmatpush1.bf16.msra.mxu0 0
        %5009 = vmatprep.subr.bf16.mxu0 0
        %5010 = vmatpush1.bf16.msra.mxu0 0
        %5011 = vmatprep.subr.bf16.mxu0 0
        %5012 = vmatpush1.bf16.msra.mxu0 0
        %5013 = vmatprep.subr.bf16.mxu0 0
        %5014 = vmatpush1.bf16.msra.mxu0 0
        %5015 = vmatprep.subr.bf16.mxu0 0
        %5016 = vmatpush1.bf16.msra.mxu0 0
        %5017 = vmatprep.subr.bf16.mxu0 0
        %5018 = vmatpush1.bf16.msra.mxu0 0
        %5019 = vmatprep.mubr.bf16.mxu0 %v4505
        %5020 = vmatmul.mubr.bf16.gmra.mrb[0].mxu0 %v3346
        %v5021 = vpop.f32.mrb[0].mxu0
        %v5022 = vadd.f32 %v4929, %v5021
        %v5023 = vpop.f32.mrb[0].mxu0
        %v5024 = vadd.f32 %v4931, %v5023
        %v5025 = vpop.f32.mrb[0].mxu0
        %v5026 = vadd.f32 %v4933, %v5025
        %v5027 = vpop.f32.mrb[0].mxu0
        %v5028 = vadd.f32 %v4935, %v5027
        %5029 = vmatprep.mubr.bf16.mxu0 %v4508
        %5030 = vmatmul.mubr.bf16.gmra.mrb[0].mxu0 %v3350
        %v5031 = vpop.f32.mrb[0].mxu0
        %v5032 = vadd.f32 %v4939, %v5031
        %v5033 = vpop.f32.mrb[0].mxu0
        %v5034 = vadd.f32 %v4941, %v5033
        %v5035 = vpop.f32.mrb[0].mxu0
        %v5036 = vadd.f32 %v4943, %v5035
        %v5037 = vpop.f32.mrb[0].mxu0
        %v5038 = vadd.f32 %v4945, %v5037
        %5039 = vmatprep.mubr.bf16.mxu0 %v4511
        %5040 = vmatmul.mubr.bf16.gmra.mrb[0].mxu0 %v3354
        %v5041 = vpop.f32.mrb[0].mxu0
        %v5042 = vadd.f32 %v4949, %v5041
        %v5043 = vpop.f32.mrb[0].mxu0
        %v5044 = vadd.f32 %v4951, %v5043
        %v5045 = vpop.f32.mrb[0].mxu0
        %v5046 = vadd.f32 %v4953, %v5045
        %v5047 = vpop.f32.mrb[0].mxu0
        %v5048 = vadd.f32 %v4955, %v5047
        %5049 = vmatprep.mubr.bf16.mxu0 %v4514
        %5050 = vmatmul.mubr.bf16.gmra.mrb[0].mxu0 %v3358
        %v5051 = vpop.f32.mrb[0].mxu0
        %v5052 = vadd.f32 %v4959, %v5051
        %v5053 = vpop.f32.mrb[0].mxu0
        %v5054 = vadd.f32 %v4961, %v5053
        %v5055 = vpop.f32.mrb[0].mxu0
        %v5056 = vadd.f32 %v4963, %v5055
        %v5057 = vpop.f32.mrb[0].mxu0
        %v5058 = vadd.f32 %v4965, %v5057
        %5059 = vmatprep.mubr.bf16.mxu0 %v4517
        %5060 = vmatmul.mubr.bf16.gmra.mrb[0].mxu0 %v3362
        %v5061 = vpop.f32.mrb[0].mxu0
        %v5062 = vadd.f32 %v4969, %v5061
        %v5063 = vpop.f32.mrb[0].mxu0
        %v5064 = vadd.f32 %v4971, %v5063
        %v5065 = vpop.f32.mrb[0].mxu0
        %v5066 = vadd.f32 %v4973, %v5065
        %v5067 = vpop.f32.mrb[0].mxu0
        %v5068 = vadd.f32 %v4975, %v5067
        %5069 = vmatprep.mubr.bf16.mxu0 %v4520
        %5070 = vmatmul.mubr.bf16.gmra.mrb[0].mxu0 %v3366
        %v5071 = vpop.f32.mrb[0].mxu0
        %v5072 = vadd.f32 %v4979, %v5071
        %v5073 = vpop.f32.mrb[0].mxu0
        %v5074 = vadd.f32 %v4981, %v5073
        %v5075 = vpop.f32.mrb[0].mxu0
        %v5076 = vadd.f32 %v4983, %v5075
        %v5077 = vpop.f32.mrb[0].mxu0
        %v5078 = vadd.f32 %v4985, %v5077
        %5079 = vdwg.mxu0
        %5080 = vmatprep.subr.bf16.mxu0 0
        %5081 = vmatpush1.bf16.msra.mxu0 %v4160
        %5082 = vmatprep.subr.bf16.mxu0 0
        %5083 = vmatpush1.bf16.msra.mxu0 %v4167
        %5084 = vmatprep.subr.bf16.mxu0 0
        %5085 = vmatpush1.bf16.msra.mxu0 %v4174
        %5086 = vmatprep.subr.bf16.mxu0 0
        %5087 = vmatpush1.bf16.msra.mxu0 %v4181
        %5088 = vmatprep.subr.bf16.mxu0 0
        %5089 = vmatpush1.bf16.msra.mxu0 %v4188
        %5090 = vmatprep.subr.bf16.mxu0 0
        %5091 = vmatpush1.bf16.msra.mxu0 %v4195
        %5092 = vmatprep.subr.bf16.mxu0 0
        %5093 = vmatpush1.bf16.msra.mxu0 %v4202
        %5094 = vmatprep.subr.bf16.mxu0 0
        %5095 = vmatpush1.bf16.msra.mxu0 %v4209
        %5096 = vmatprep.subr.bf16.mxu0 0
        %5097 = vmatpush1.bf16.msra.mxu0 %v4216
        %5098 = vmatprep.subr.bf16.mxu0 0
        %5099 = vmatpush1.bf16.msra.mxu0 %v4223
        %5100 = vmatprep.subr.bf16.mxu0 0
        %5101 = vmatpush1.bf16.msra.mxu0 %v4230
        %5102 = vmatprep.subr.bf16.mxu0 0
        %5103 = vmatpush1.bf16.msra.mxu0 %v4237
        %5104 = vmatprep.subr.bf16.mxu0 0
        %5105 = vmatpush1.bf16.msra.mxu0 %v4244
        %5106 = vmatprep.subr.bf16.mxu0 0
        %5107 = vmatpush1.bf16.msra.mxu0 %v4251
        %5108 = vmatprep.subr.bf16.mxu0 0
        %5109 = vmatpush1.bf16.msra.mxu0 %v4258
        %5110 = vmatprep.subr.bf16.mxu0 0
        %5111 = vmatpush1.bf16.msra.mxu0 %v4265
        %5112 = vmatprep.mubr.bf16.mxu0 %v3345
        %5113 = vmatmul.mubr.bf16.gmra.mrb[0].mxu0 %v3344
        %v5114 = vpop.f32.mrb[0].mxu0
        %v5115 = vadd.f32 %v3596, %v5114
        %v5116 = vpop.f32.mrb[0].mxu0
        %v5117 = vpop.f32.mrb[0].mxu0
        %v5118 = vadd.f32 %v3596, %v5117
        %v5119 = vpop.f32.mrb[0].mxu0
        %5120 = vmatprep.mubr.bf16.mxu0 %v3349
        %5121 = vmatmul.mubr.bf16.gmra.mrb[0].mxu0 %v3348
        %v5122 = vpop.f32.mrb[0].mxu0
        %v5123 = vadd.f32 %v3596, %v5122
        %v5124 = vpop.f32.mrb[0].mxu0
        %v5125 = vpop.f32.mrb[0].mxu0
        %v5126 = vadd.f32 %v3596, %v5125
        %v5127 = vpop.f32.mrb[0].mxu0
        %5128 = vmatprep.mubr.bf16.mxu0 %v3353
        %5129 = vmatmul.mubr.bf16.gmra.mrb[0].mxu0 %v3352
        %v5130 = vpop.f32.mrb[0].mxu0
        %v5131 = vadd.f32 %v3596, %v5130
        %v5132 = vpop.f32.mrb[0].mxu0
        %v5133 = vpop.f32.mrb[0].mxu0
        %v5134 = vadd.f32 %v3596, %v5133
        %v5135 = vpop.f32.mrb[0].mxu0
        %5136 = vmatprep.mubr.bf16.mxu0 %v3357
        %5137 = vmatmul.mubr.bf16.gmra.mrb[0].mxu0 %v3356
        %v5138 = vpop.f32.mrb[0].mxu0
        %v5139 = vadd.f32 %v3596, %v5138
        %v5140 = vpop.f32.mrb[0].mxu0
        %v5141 = vpop.f32.mrb[0].mxu0
        %v5142 = vadd.f32 %v3596, %v5141
        %v5143 = vpop.f32.mrb[0].mxu0
        %5144 = vmatprep.mubr.bf16.mxu0 %v3361
        %5145 = vmatmul.mubr.bf16.gmra.mrb[0].mxu0 %v3360
        %v5146 = vpop.f32.mrb[0].mxu0
        %v5147 = vadd.f32 %v3596, %v5146
        %v5148 = vpop.f32.mrb[0].mxu0
        %v5149 = vpop.f32.mrb[0].mxu0
        %v5150 = vadd.f32 %v3596, %v5149
        %v5151 = vpop.f32.mrb[0].mxu0
        %5152 = vmatprep.mubr.bf16.mxu0 %v3365
        %5153 = vmatmul.mubr.bf16.gmra.mrb[0].mxu0 %v3364
        %v5154 = vpop.f32.mrb[0].mxu0
        %v5155 = vadd.f32 %v3596, %v5154
        %v5156 = vpop.f32.mrb[0].mxu0
        %v5157 = vpop.f32.mrb[0].mxu0
        %v5158 = vadd.f32 %v3596, %v5157
        %v5159 = vpop.f32.mrb[0].mxu0
        %5160 = vdwg.mxu0
        %5161 = vmatprep.subr.bf16.mxu0 0
        %5162 = vmatpush1.bf16.msra.mxu0 %v4272
        %5163 = vmatprep.subr.bf16.mxu0 0
        %5164 = vmatpush1.bf16.msra.mxu0 %v4279
        %5165 = vmatprep.subr.bf16.mxu0 0
        %5166 = vmatpush1.bf16.msra.mxu0 %v4286
        %5167 = vmatprep.subr.bf16.mxu0 0
        %5168 = vmatpush1.bf16.msra.mxu0 %v4293
        %5169 = vmatprep.subr.bf16.mxu0 0
        %5170 = vmatpush1.bf16.msra.mxu0 %v4300
        %5171 = vmatprep.subr.bf16.mxu0 0
        %5172 = vmatpush1.bf16.msra.mxu0 %v4307
        %5173 = vmatprep.subr.bf16.mxu0 0
        %5174 = vmatpush1.bf16.msra.mxu0 %v4314
        %5175 = vmatprep.subr.bf16.mxu0 0
        %5176 = vmatpush1.bf16.msra.mxu0 %v4321
        %5177 = vmatprep.subr.bf16.mxu0 0
        %5178 = vmatpush1.bf16.msra.mxu0 %v4328
        %5179 = vmatprep.subr.bf16.mxu0 0
        %5180 = vmatpush1.bf16.msra.mxu0 0
        %5181 = vmatprep.subr.bf16.mxu0 0
        %5182 = vmatpush1.bf16.msra.mxu0 0
        %5183 = vmatprep.subr.bf16.mxu0 0
        %5184 = vmatpush1.bf16.msra.mxu0 0
        %5185 = vmatprep.subr.bf16.mxu0 0
        %5186 = vmatpush1.bf16.msra.mxu0 0
        %5187 = vmatprep.subr.bf16.mxu0 0
        %5188 = vmatpush1.bf16.msra.mxu0 0
        %5189 = vmatprep.subr.bf16.mxu0 0
        %5190 = vmatpush1.bf16.msra.mxu0 0
        %5191 = vmatprep.subr.bf16.mxu0 0
        %5192 = vmatpush1.bf16.msra.mxu0 0
        %5193 = vmatprep.mubr.bf16.mxu0 %v4505
        %5194 = vmatmul.mubr.bf16.gmra.mrb[0].mxu0 %v3346
        %v5195 = vpop.f32.mrb[0].mxu0
        %v5196 = vadd.f32 %v5115, %v5195
        %v5197 = vpop.f32.mrb[0].mxu0
        %v5198 = vpop.f32.mrb[0].mxu0
        %v5199 = vadd.f32 %v5118, %v5198
        %v5200 = vpop.f32.mrb[0].mxu0
        %5201 = vmatprep.mubr.bf16.mxu0 %v4508
        %5202 = vmatmul.mubr.bf16.gmra.mrb[0].mxu0 %v3350
        %v5203 = vpop.f32.mrb[0].mxu0
        %v5204 = vadd.f32 %v5123, %v5203
        %v5205 = vpop.f32.mrb[0].mxu0
        %v5206 = vpop.f32.mrb[0].mxu0
        %v5207 = vadd.f32 %v5126, %v5206
        %v5208 = vpop.f32.mrb[0].mxu0
        %5209 = vmatprep.mubr.bf16.mxu0 %v4511
        %5210 = vmatmul.mubr.bf16.gmra.mrb[0].mxu0 %v3354
        %v5211 = vpop.f32.mrb[0].mxu0
        %v5212 = vadd.f32 %v5131, %v5211
        %v5213 = vpop.f32.mrb[0].mxu0
        %v5214 = vpop.f32.mrb[0].mxu0
        %v5215 = vadd.f32 %v5134, %v5214
        %v5216 = vpop.f32.mrb[0].mxu0
        %5217 = vmatprep.mubr.bf16.mxu0 %v4514
        %5218 = vmatmul.mubr.bf16.gmra.mrb[0].mxu0 %v3358
        %v5219 = vpop.f32.mrb[0].mxu0
        %v5220 = vadd.f32 %v5139, %v5219
        %v5221 = vpop.f32.mrb[0].mxu0
        %v5222 = vpop.f32.mrb[0].mxu0
        %v5223 = vadd.f32 %v5142, %v5222
        %v5224 = vpop.f32.mrb[0].mxu0
        %5225 = vmatprep.mubr.bf16.mxu0 %v4517
        %5226 = vmatmul.mubr.bf16.gmra.mrb[0].mxu0 %v3362
        %v5227 = vpop.f32.mrb[0].mxu0
        %v5228 = vadd.f32 %v5147, %v5227
        %v5229 = vpop.f32.mrb[0].mxu0
        %v5230 = vpop.f32.mrb[0].mxu0
        %v5231 = vadd.f32 %v5150, %v5230
        %v5232 = vpop.f32.mrb[0].mxu0
        %5233 = vmatprep.mubr.bf16.mxu0 %v4520
        %5234 = vmatmul.mubr.bf16.gmra.mrb[0].mxu0 %v3366
        %v5235 = vpop.f32.mrb[0].mxu0
        %v5236 = vadd.f32 %v5155, %v5235
        %v5237 = vpop.f32.mrb[0].mxu0
        %v5238 = vpop.f32.mrb[0].mxu0
        %v5239 = vadd.f32 %v5158, %v5238
        %v5240 = vpop.f32.mrb[0].mxu0
        %5241 = vdwg.mxu0
        %v5242 = vsub.f32 0.0, %v4650
        %v5243 = vsub.f32 0.0, %v4652
        %v5244 = vsub.f32 0.0, %v4836
        %v5245 = vsub.f32 0.0, %v4838
        %v5246 = vsub.f32 0.0, %v5022
        %v5247 = vsub.f32 0.0, %v5024
        %v5248 = vsub.f32 0.0, %v5196
        %v5249 = vsub.f32 0.0, %v4654
        %v5250 = vsub.f32 0.0, %v4656
        %v5251 = vsub.f32 0.0, %v4840
        %v5252 = vsub.f32 0.0, %v4842
        %v5253 = vsub.f32 0.0, %v5026
        %v5254 = vsub.f32 0.0, %v5028
        %v5255 = vsub.f32 0.0, %v5199
        %v5256 = vsub.f32 0.0, %v4660
        %v5257 = vsub.f32 0.0, %v4662
        %v5258 = vsub.f32 0.0, %v4846
        %v5259 = vsub.f32 0.0, %v4848
        %v5260 = vsub.f32 0.0, %v5032
        %v5261 = vsub.f32 0.0, %v5034
        %v5262 = vsub.f32 0.0, %v5204
        %v5263 = vsub.f32 0.0, %v4664
        %v5264 = vsub.f32 0.0, %v4666
        %v5265 = vsub.f32 0.0, %v4850
        %v5266 = vsub.f32 0.0, %v4852
        %v5267 = vsub.f32 0.0, %v5036
        %v5268 = vsub.f32 0.0, %v5038
        %v5269 = vsub.f32 0.0, %v5207
        %v5270 = vsub.f32 0.0, %v4670
        %v5271 = vsub.f32 0.0, %v4672
        %v5272 = vsub.f32 0.0, %v4856
        %v5273 = vsub.f32 0.0, %v4858
        %v5274 = vsub.f32 0.0, %v5042
        %v5275 = vsub.f32 0.0, %v5044
        %v5276 = vsub.f32 0.0, %v5212
        %v5277 = vsub.f32 0.0, %v4674
        %v5278 = vsub.f32 0.0, %v4676
        %v5279 = vsub.f32 0.0, %v4860
        %v5280 = vsub.f32 0.0, %v4862
        %v5281 = vsub.f32 0.0, %v5046
        %v5282 = vsub.f32 0.0, %v5048
        %v5283 = vsub.f32 0.0, %v5215
        %v5284 = vsub.f32 0.0, %v4680
        %v5285 = vsub.f32 0.0, %v4682
        %v5286 = vsub.f32 0.0, %v4866
        %v5287 = vsub.f32 0.0, %v4868
        %v5288 = vsub.f32 0.0, %v5052
        %v5289 = vsub.f32 0.0, %v5054
        %v5290 = vsub.f32 0.0, %v5220
        %v5291 = vsub.f32 0.0, %v4684
        %v5292 = vsub.f32 0.0, %v4686
        %v5293 = vsub.f32 0.0, %v4870
        %v5294 = vsub.f32 0.0, %v4872
        %v5295 = vsub.f32 0.0, %v5056
        %v5296 = vsub.f32 0.0, %v5058
        %v5297 = vsub.f32 0.0, %v5223
        %v5298 = vsub.f32 0.0, %v4690
        %v5299 = vsub.f32 0.0, %v4692
        %v5300 = vsub.f32 0.0, %v4876
        %v5301 = vsub.f32 0.0, %v4878
        %v5302 = vsub.f32 0.0, %v5062
        %v5303 = vsub.f32 0.0, %v5064
        %v5304 = vsub.f32 0.0, %v5228
        %v5305 = vsub.f32 0.0, %v4694
        %v5306 = vsub.f32 0.0, %v4696
        %v5307 = vsub.f32 0.0, %v4880
        %v5308 = vsub.f32 0.0, %v4882
        %v5309 = vsub.f32 0.0, %v5066
        %v5310 = vsub.f32 0.0, %v5068
        %v5311 = vsub.f32 0.0, %v5231
        %v5312 = vsub.f32 0.0, %v4700
        %v5313 = vsub.f32 0.0, %v4702
        %v5314 = vsub.f32 0.0, %v4886
        %v5315 = vsub.f32 0.0, %v4888
        %v5316 = vsub.f32 0.0, %v5072
        %v5317 = vsub.f32 0.0, %v5074
        %v5318 = vsub.f32 0.0, %v5236
        %v5319 = vsub.f32 0.0, %v4704
        %v5320 = vsub.f32 0.0, %v4706
        %v5321 = vsub.f32 0.0, %v4890
        %v5322 = vsub.f32 0.0, %v4892
        %v5323 = vsub.f32 0.0, %v5076
        %v5324 = vsub.f32 0.0, %v5078
        %v5325 = vsub.f32 0.0, %v5239
        %v5326 = vmul.f32 %v5242, 1.442695
        %v5327 = vpow.pop %v5326
        %v5328 = vmul.f32 %v5243, 1.442695
        %v5329 = vpow.pop %v5328
        %v5330 = vmul.f32 %v5244, 1.442695
        %v5331 = vpow.pop %v5330
        %v5332 = vmul.f32 %v5245, 1.442695
        %v5333 = vpow.pop %v5332
        %v5334 = vmul.f32 %v5246, 1.442695
        %v5335 = vpow.pop %v5334
        %v5336 = vmul.f32 %v5247, 1.442695
        %v5337 = vpow.pop %v5336
        %v5338 = vmul.f32 %v5248, 1.442695
        %v5339 = vpow.pop %v5338
        %v5340 = vmul.f32 %v5249, 1.442695
        %v5341 = vpow.pop %v5340
        %v5342 = vmul.f32 %v5250, 1.442695
        %v5343 = vpow.pop %v5342
        %v5344 = vmul.f32 %v5251, 1.442695
        %v5345 = vpow.pop %v5344
        %v5346 = vmul.f32 %v5252, 1.442695
        %v5347 = vpow.pop %v5346
        %v5348 = vmul.f32 %v5253, 1.442695
        %v5349 = vpow.pop %v5348
        %v5350 = vmul.f32 %v5254, 1.442695
        %v5351 = vpow.pop %v5350
        %v5352 = vmul.f32 %v5255, 1.442695
        %v5353 = vpow.pop %v5352
        %v5354 = vmul.f32 %v5256, 1.442695
        %v5355 = vpow.pop %v5354
        %v5356 = vmul.f32 %v5257, 1.442695
        %v5357 = vpow.pop %v5356
        %v5358 = vmul.f32 %v5258, 1.442695
        %v5359 = vpow.pop %v5358
        %v5360 = vmul.f32 %v5259, 1.442695
        %v5361 = vpow.pop %v5360
        %v5362 = vmul.f32 %v5260, 1.442695
        %v5363 = vpow.pop %v5362
        %v5364 = vmul.f32 %v5261, 1.442695
        %v5365 = vpow.pop %v5364
        %v5366 = vmul.f32 %v5262, 1.442695
        %v5367 = vpow.pop %v5366
        %v5368 = vmul.f32 %v5263, 1.442695
        %v5369 = vpow.pop %v5368
        %v5370 = vmul.f32 %v5264, 1.442695
        %v5371 = vpow.pop %v5370
        %v5372 = vmul.f32 %v5265, 1.442695
        %v5373 = vpow.pop %v5372
        %v5374 = vmul.f32 %v5266, 1.442695
        %v5375 = vpow.pop %v5374
        %v5376 = vmul.f32 %v5267, 1.442695
        %v5377 = vpow.pop %v5376
        %v5378 = vmul.f32 %v5268, 1.442695
        %v5379 = vpow.pop %v5378
        %v5380 = vmul.f32 %v5269, 1.442695
        %v5381 = vpow.pop %v5380
        %v5382 = vmul.f32 %v5270, 1.442695
        %v5383 = vpow.pop %v5382
        %v5384 = vmul.f32 %v5271, 1.442695
        %v5385 = vpow.pop %v5384
        %v5386 = vmul.f32 %v5272, 1.442695
        %v5387 = vpow.pop %v5386
        %v5388 = vmul.f32 %v5273, 1.442695
        %v5389 = vpow.pop %v5388
        %v5390 = vmul.f32 %v5274, 1.442695
        %v5391 = vpow.pop %v5390
        %v5392 = vmul.f32 %v5275, 1.442695
        %v5393 = vpow.pop %v5392
        %v5394 = vmul.f32 %v5276, 1.442695
        %v5395 = vpow.pop %v5394
        %v5396 = vmul.f32 %v5277, 1.442695
        %v5397 = vpow.pop %v5396
        %v5398 = vmul.f32 %v5278, 1.442695
        %v5399 = vpow.pop %v5398
        %v5400 = vmul.f32 %v5279, 1.442695
        %v5401 = vpow.pop %v5400
        %v5402 = vmul.f32 %v5280, 1.442695
        %v5403 = vpow.pop %v5402
        %v5404 = vmul.f32 %v5281, 1.442695
        %v5405 = vpow.pop %v5404
        %v5406 = vmul.f32 %v5282, 1.442695
        %v5407 = vpow.pop %v5406
        %v5408 = vmul.f32 %v5283, 1.442695
        %v5409 = vpow.pop %v5408
        %v5410 = vmul.f32 %v5284, 1.442695
        %v5411 = vpow.pop %v5410
        %v5412 = vmul.f32 %v5285, 1.442695
        %v5413 = vpow.pop %v5412
        %v5414 = vmul.f32 %v5286, 1.442695
        %v5415 = vpow.pop %v5414
        %v5416 = vmul.f32 %v5287, 1.442695
        %v5417 = vpow.pop %v5416
        %v5418 = vmul.f32 %v5288, 1.442695
        %v5419 = vpow.pop %v5418
        %v5420 = vmul.f32 %v5289, 1.442695
        %v5421 = vpow.pop %v5420
        %v5422 = vmul.f32 %v5290, 1.442695
        %v5423 = vpow.pop %v5422
        %v5424 = vmul.f32 %v5291, 1.442695
        %v5425 = vpow.pop %v5424
        %v5426 = vmul.f32 %v5292, 1.442695
        %v5427 = vpow.pop %v5426
        %v5428 = vmul.f32 %v5293, 1.442695
        %v5429 = vpow.pop %v5428
        %v5430 = vmul.f32 %v5294, 1.442695
        %v5431 = vpow.pop %v5430
        %v5432 = vmul.f32 %v5295, 1.442695
        %v5433 = vpow.pop %v5432
        %v5434 = vmul.f32 %v5296, 1.442695
        %v5435 = vpow.pop %v5434
        %v5436 = vmul.f32 %v5297, 1.442695
        %v5437 = vpow.pop %v5436
        %v5438 = vmul.f32 %v5298, 1.442695
        %v5439 = vpow.pop %v5438
        %v5440 = vmul.f32 %v5299, 1.442695
        %v5441 = vpow.pop %v5440
        %v5442 = vmul.f32 %v5300, 1.442695
        %v5443 = vpow.pop %v5442
        %v5444 = vmul.f32 %v5301, 1.442695
        %v5445 = vpow.pop %v5444
        %v5446 = vmul.f32 %v5302, 1.442695
        %v5447 = vpow.pop %v5446
        %v5448 = vmul.f32 %v5303, 1.442695
        %v5449 = vpow.pop %v5448
        %v5450 = vmul.f32 %v5304, 1.442695
        %v5451 = vpow.pop %v5450
        %v5452 = vmul.f32 %v5305, 1.442695
        %v5453 = vpow.pop %v5452
        %v5454 = vmul.f32 %v5306, 1.442695
        %v5455 = vpow.pop %v5454
        %v5456 = vmul.f32 %v5307, 1.442695
        %v5457 = vpow.pop %v5456
        %v5458 = vmul.f32 %v5308, 1.442695
        %v5459 = vpow.pop %v5458
        %v5460 = vmul.f32 %v5309, 1.442695
        %v5461 = vpow.pop %v5460
        %v5462 = vmul.f32 %v5310, 1.442695
        %v5463 = vpow.pop %v5462
        %v5464 = vmul.f32 %v5311, 1.442695
        %v5465 = vpow.pop %v5464
        %v5466 = vmul.f32 %v5312, 1.442695
        %v5467 = vpow.pop %v5466
        %v5468 = vmul.f32 %v5313, 1.442695
        %v5469 = vpow.pop %v5468
        %v5470 = vmul.f32 %v5314, 1.442695
        %v5471 = vpow.pop %v5470
        %v5472 = vmul.f32 %v5315, 1.442695
        %v5473 = vpow.pop %v5472
        %v5474 = vmul.f32 %v5316, 1.442695
        %v5475 = vpow.pop %v5474
        %v5476 = vmul.f32 %v5317, 1.442695
        %v5477 = vpow.pop %v5476
        %v5478 = vmul.f32 %v5318, 1.442695
        %v5479 = vpow.pop %v5478
        %v5480 = vmul.f32 %v5319, 1.442695
        %v5481 = vpow.pop %v5480
        %v5482 = vmul.f32 %v5320, 1.442695
        %v5483 = vpow.pop %v5482
        %v5484 = vmul.f32 %v5321, 1.442695
        %v5485 = vpow.pop %v5484
        %v5486 = vmul.f32 %v5322, 1.442695
        %v5487 = vpow.pop %v5486
        %v5488 = vmul.f32 %v5323, 1.442695
        %v5489 = vpow.pop %v5488
        %v5490 = vmul.f32 %v5324, 1.442695
        %v5491 = vpow.pop %v5490
        %v5492 = vmul.f32 %v5325, 1.442695
        %v5493 = vpow.pop %v5492
        %v5494 = vadd.f32 %v5327, 1.0
        %v5495 = vadd.f32 %v5329, 1.0
        %v5496 = vadd.f32 %v5331, 1.0
        %v5497 = vadd.f32 %v5333, 1.0
        %v5498 = vadd.f32 %v5335, 1.0
        %v5499 = vadd.f32 %v5337, 1.0
        %v5500 = vadd.f32 %v5339, 1.0
        %v5501 = vadd.f32 %v5341, 1.0
        %v5502 = vadd.f32 %v5343, 1.0
        %v5503 = vadd.f32 %v5345, 1.0
        %v5504 = vadd.f32 %v5347, 1.0
        %v5505 = vadd.f32 %v5349, 1.0
        %v5506 = vadd.f32 %v5351, 1.0
        %v5507 = vadd.f32 %v5353, 1.0
        %v5508 = vadd.f32 %v5355, 1.0
        %v5509 = vadd.f32 %v5357, 1.0
        %v5510 = vadd.f32 %v5359, 1.0
        %v5511 = vadd.f32 %v5361, 1.0
        %v5512 = vadd.f32 %v5363, 1.0
        %v5513 = vadd.f32 %v5365, 1.0
        %v5514 = vadd.f32 %v5367, 1.0
        %v5515 = vadd.f32 %v5369, 1.0
        %v5516 = vadd.f32 %v5371, 1.0
        %v5517 = vadd.f32 %v5373, 1.0
        %v5518 = vadd.f32 %v5375, 1.0
        %v5519 = vadd.f32 %v5377, 1.0
        %v5520 = vadd.f32 %v5379, 1.0
        %v5521 = vadd.f32 %v5381, 1.0
        %v5522 = vadd.f32 %v5383, 1.0
        %v5523 = vadd.f32 %v5385, 1.0
        %v5524 = vadd.f32 %v5387, 1.0
        %v5525 = vadd.f32 %v5389, 1.0
        %v5526 = vadd.f32 %v5391, 1.0
        %v5527 = vadd.f32 %v5393, 1.0
        %v5528 = vadd.f32 %v5395, 1.0
        %v5529 = vadd.f32 %v5397, 1.0
        %v5530 = vadd.f32 %v5399, 1.0
        %v5531 = vadd.f32 %v5401, 1.0
        %v5532 = vadd.f32 %v5403, 1.0
        %v5533 = vadd.f32 %v5405, 1.0
        %v5534 = vadd.f32 %v5407, 1.0
        %v5535 = vadd.f32 %v5409, 1.0
        %v5536 = vadd.f32 %v5411, 1.0
        %v5537 = vadd.f32 %v5413, 1.0
        %v5538 = vadd.f32 %v5415, 1.0
        %v5539 = vadd.f32 %v5417, 1.0
        %v5540 = vadd.f32 %v5419, 1.0
        %v5541 = vadd.f32 %v5421, 1.0
        %v5542 = vadd.f32 %v5423, 1.0
        %v5543 = vadd.f32 %v5425, 1.0
        %v5544 = vadd.f32 %v5427, 1.0
        %v5545 = vadd.f32 %v5429, 1.0
        %v5546 = vadd.f32 %v5431, 1.0
        %v5547 = vadd.f32 %v5433, 1.0
        %v5548 = vadd.f32 %v5435, 1.0
        %v5549 = vadd.f32 %v5437, 1.0
        %v5550 = vadd.f32 %v5439, 1.0
        %v5551 = vadd.f32 %v5441, 1.0
        %v5552 = vadd.f32 %v5443, 1.0
        %v5553 = vadd.f32 %v5445, 1.0
        %v5554 = vadd.f32 %v5447, 1.0
        %v5555 = vadd.f32 %v5449, 1.0
        %v5556 = vadd.f32 %v5451, 1.0
        %v5557 = vadd.f32 %v5453, 1.0
        %v5558 = vadd.f32 %v5455, 1.0
        %v5559 = vadd.f32 %v5457, 1.0
        %v5560 = vadd.f32 %v5459, 1.0
        %v5561 = vadd.f32 %v5461, 1.0
        %v5562 = vadd.f32 %v5463, 1.0
        %v5563 = vadd.f32 %v5465, 1.0
        %v5564 = vadd.f32 %v5467, 1.0
        %v5565 = vadd.f32 %v5469, 1.0
        %v5566 = vadd.f32 %v5471, 1.0
        %v5567 = vadd.f32 %v5473, 1.0
        %v5568 = vadd.f32 %v5475, 1.0
        %v5569 = vadd.f32 %v5477, 1.0
        %v5570 = vadd.f32 %v5479, 1.0
        %v5571 = vadd.f32 %v5481, 1.0
        %v5572 = vadd.f32 %v5483, 1.0
        %v5573 = vadd.f32 %v5485, 1.0
        %v5574 = vadd.f32 %v5487, 1.0
        %v5575 = vadd.f32 %v5489, 1.0
        %v5576 = vadd.f32 %v5491, 1.0
        %v5577 = vadd.f32 %v5493, 1.0
        %v5578 = vrcp.pop %v5494
        %v5579 = vrcp.pop %v5495
        %v5580 = vrcp.pop %v5496
        %v5581 = vrcp.pop %v5497
        %v5582 = vrcp.pop %v5498
        %v5583 = vrcp.pop %v5499
        %v5584 = vrcp.pop %v5500
        %v5585 = vrcp.pop %v5501
        %v5586 = vrcp.pop %v5502
        %v5587 = vrcp.pop %v5503
        %v5588 = vrcp.pop %v5504
        %v5589 = vrcp.pop %v5505
        %v5590 = vrcp.pop %v5506
        %v5591 = vrcp.pop %v5507
        %v5592 = vrcp.pop %v5508
        %v5593 = vrcp.pop %v5509
        %v5594 = vrcp.pop %v5510
        %v5595 = vrcp.pop %v5511
        %v5596 = vrcp.pop %v5512
        %v5597 = vrcp.pop %v5513
        %v5598 = vrcp.pop %v5514
        %v5599 = vrcp.pop %v5515
        %v5600 = vrcp.pop %v5516
        %v5601 = vrcp.pop %v5517
        %v5602 = vrcp.pop %v5518
        %v5603 = vrcp.pop %v5519
        %v5604 = vrcp.pop %v5520
        %v5605 = vrcp.pop %v5521
        %v5606 = vrcp.pop %v5522
        %v5607 = vrcp.pop %v5523
        %v5608 = vrcp.pop %v5524
        %v5609 = vrcp.pop %v5525
        %v5610 = vrcp.pop %v5526
        %v5611 = vrcp.pop %v5527
        %v5612 = vrcp.pop %v5528
        %v5613 = vrcp.pop %v5529
        %v5614 = vrcp.pop %v5530
        %v5615 = vrcp.pop %v5531
        %v5616 = vrcp.pop %v5532
        %v5617 = vrcp.pop %v5533
        %v5618 = vrcp.pop %v5534
        %v5619 = vrcp.pop %v5535
        %v5620 = vrcp.pop %v5536
        %v5621 = vrcp.pop %v5537
        %v5622 = vrcp.pop %v5538
        %v5623 = vrcp.pop %v5539
        %v5624 = vrcp.pop %v5540
        %v5625 = vrcp.pop %v5541
        %v5626 = vrcp.pop %v5542
        %v5627 = vrcp.pop %v5543
        %v5628 = vrcp.pop %v5544
        %v5629 = vrcp.pop %v5545
        %v5630 = vrcp.pop %v5546
        %v5631 = vrcp.pop %v5547
        %v5632 = vrcp.pop %v5548
        %v5633 = vrcp.pop %v5549
        %v5634 = vrcp.pop %v5550
        %v5635 = vrcp.pop %v5551
        %v5636 = vrcp.pop %v5552
        %v5637 = vrcp.pop %v5553
        %v5638 = vrcp.pop %v5554
        %v5639 = vrcp.pop %v5555
        %v5640 = vrcp.pop %v5556
        %v5641 = vrcp.pop %v5557
        %v5642 = vrcp.pop %v5558
        %v5643 = vrcp.pop %v5559
        %v5644 = vrcp.pop %v5560
        %v5645 = vrcp.pop %v5561
        %v5646 = vrcp.pop %v5562
        %v5647 = vrcp.pop %v5563
        %v5648 = vrcp.pop %v5564
        %v5649 = vrcp.pop %v5565
        %v5650 = vrcp.pop %v5566
        %v5651 = vrcp.pop %v5567
        %v5652 = vrcp.pop %v5568
        %v5653 = vrcp.pop %v5569
        %v5654 = vrcp.pop %v5570
        %v5655 = vrcp.pop %v5571
        %v5656 = vrcp.pop %v5572
        %v5657 = vrcp.pop %v5573
        %v5658 = vrcp.pop %v5574
        %v5659 = vrcp.pop %v5575
        %v5660 = vrcp.pop %v5576
        %v5661 = vrcp.pop %v5577
        %v5662 = vpack.c.bf16 %v5585, %v5578
        %v5663 = vpack.c.bf16 %v5586, %v5579
        %v5664 = vpack.c.bf16 %v5587, %v5580
        %v5665 = vpack.c.bf16 %v5588, %v5581
        %v5666 = vpack.c.bf16 %v5589, %v5582
        %v5667 = vpack.c.bf16 %v5590, %v5583
        %v5668 = vpack.c.bf16 %v5591, %v5584
        %v5669 = vpack.c.bf16 %v5599, %v5592
        %v5670 = vpack.c.bf16 %v5600, %v5593
        %v5671 = vpack.c.bf16 %v5601, %v5594
        %v5672 = vpack.c.bf16 %v5602, %v5595
        %v5673 = vpack.c.bf16 %v5603, %v5596
        %v5674 = vpack.c.bf16 %v5604, %v5597
        %v5675 = vpack.c.bf16 %v5605, %v5598
        %v5676 = vpack.c.bf16 %v5613, %v5606
        %v5677 = vpack.c.bf16 %v5614, %v5607
        %v5678 = vpack.c.bf16 %v5615, %v5608
        %v5679 = vpack.c.bf16 %v5616, %v5609
        %v5680 = vpack.c.bf16 %v5617, %v5610
        %v5681 = vpack.c.bf16 %v5618, %v5611
        %v5682 = vpack.c.bf16 %v5619, %v5612
        %v5683 = vpack.c.bf16 %v5627, %v5620
        %v5684 = vpack.c.bf16 %v5628, %v5621
        %v5685 = vpack.c.bf16 %v5629, %v5622
        %v5686 = vpack.c.bf16 %v5630, %v5623
        %v5687 = vpack.c.bf16 %v5631, %v5624
        %v5688 = vpack.c.bf16 %v5632, %v5625
        %v5689 = vpack.c.bf16 %v5633, %v5626
        %v5690 = vpack.c.bf16 %v5641, %v5634
        %v5691 = vpack.c.bf16 %v5642, %v5635
        %v5692 = vpack.c.bf16 %v5643, %v5636
        %v5693 = vpack.c.bf16 %v5644, %v5637
        %v5694 = vpack.c.bf16 %v5645, %v5638
        %v5695 = vpack.c.bf16 %v5646, %v5639
        %v5696 = vpack.c.bf16 %v5647, %v5640
        %v5697 = vpack.c.bf16 %v5655, %v5648
        %v5698 = vpack.c.bf16 %v5656, %v5649
        %v5699 = vpack.c.bf16 %v5657, %v5650
        %v5700 = vpack.c.bf16 %v5658, %v5651
        %v5701 = vpack.c.bf16 %v5659, %v5652
        %v5702 = vpack.c.bf16 %v5660, %v5653
        %v5703 = vpack.c.bf16 %v5661, %v5654
        %v5746 = vunpack.c.l.b16 %v5662
        %v5747 = vunpack.c.l.b16 %v5663
        %v5748 = vunpack.c.l.b16 %v5664
        %v5749 = vunpack.c.l.b16 %v5665
        %v5750 = vunpack.c.l.b16 %v5666
        %v5751 = vunpack.c.l.b16 %v5667
        %v5752 = vunpack.c.l.b16 %v5668
        %v5753 = vunpack.c.h.b16 %v5662
        %v5754 = vunpack.c.h.b16 %v5663
        %v5755 = vunpack.c.h.b16 %v5664
        %v5756 = vunpack.c.h.b16 %v5665
        %v5757 = vunpack.c.h.b16 %v5666
        %v5758 = vunpack.c.h.b16 %v5667
        %v5759 = vunpack.c.h.b16 %v5668
        %v5760 = vunpack.c.l.b16 %v5669
        %v5761 = vunpack.c.l.b16 %v5670
        %v5762 = vunpack.c.l.b16 %v5671
        %v5763 = vunpack.c.l.b16 %v5672
        %v5764 = vunpack.c.l.b16 %v5673
        %v5765 = vunpack.c.l.b16 %v5674
        %v5766 = vunpack.c.l.b16 %v5675
        %v5767 = vunpack.c.h.b16 %v5669
        %v5768 = vunpack.c.h.b16 %v5670
        %v5769 = vunpack.c.h.b16 %v5671
        %v5770 = vunpack.c.h.b16 %v5672
        %v5771 = vunpack.c.h.b16 %v5673
        %v5772 = vunpack.c.h.b16 %v5674
        %v5773 = vunpack.c.h.b16 %v5675
        %v5774 = vunpack.c.l.b16 %v5676
        %v5775 = vunpack.c.l.b16 %v5677
        %v5776 = vunpack.c.l.b16 %v5678
        %v5777 = vunpack.c.l.b16 %v5679
        %v5778 = vunpack.c.l.b16 %v5680
        %v5779 = vunpack.c.l.b16 %v5681
        %v5780 = vunpack.c.l.b16 %v5682
        %v5781 = vunpack.c.h.b16 %v5676
        %v5782 = vunpack.c.h.b16 %v5677
        %v5783 = vunpack.c.h.b16 %v5678
        %v5784 = vunpack.c.h.b16 %v5679
        %v5785 = vunpack.c.h.b16 %v5680
        %v5786 = vunpack.c.h.b16 %v5681
        %v5787 = vunpack.c.h.b16 %v5682
        %v5788 = vunpack.c.l.b16 %v5683
        %v5789 = vunpack.c.l.b16 %v5684
        %v5790 = vunpack.c.l.b16 %v5685
        %v5791 = vunpack.c.l.b16 %v5686
        %v5792 = vunpack.c.l.b16 %v5687
        %v5793 = vunpack.c.l.b16 %v5688
        %v5794 = vunpack.c.l.b16 %v5689
        %v5795 = vunpack.c.h.b16 %v5683
        %v5796 = vunpack.c.h.b16 %v5684
        %v5797 = vunpack.c.h.b16 %v5685
        %v5798 = vunpack.c.h.b16 %v5686
        %v5799 = vunpack.c.h.b16 %v5687
        %v5800 = vunpack.c.h.b16 %v5688
        %v5801 = vunpack.c.h.b16 %v5689
        %v5802 = vunpack.c.l.b16 %v5690
        %v5803 = vunpack.c.l.b16 %v5691
        %v5804 = vunpack.c.l.b16 %v5692
        %v5805 = vunpack.c.l.b16 %v5693
        %v5806 = vunpack.c.l.b16 %v5694
        %v5807 = vunpack.c.l.b16 %v5695
        %v5808 = vunpack.c.l.b16 %v5696
        %v5809 = vunpack.c.h.b16 %v5690
        %v5810 = vunpack.c.h.b16 %v5691
        %v5811 = vunpack.c.h.b16 %v5692
        %v5812 = vunpack.c.h.b16 %v5693
        %v5813 = vunpack.c.h.b16 %v5694
        %v5814 = vunpack.c.h.b16 %v5695
        %v5815 = vunpack.c.h.b16 %v5696
        %v5816 = vunpack.c.l.b16 %v5697
        %v5817 = vunpack.c.l.b16 %v5698
        %v5818 = vunpack.c.l.b16 %v5699
        %v5819 = vunpack.c.l.b16 %v5700
        %v5820 = vunpack.c.l.b16 %v5701
        %v5821 = vunpack.c.l.b16 %v5702
        %v5822 = vunpack.c.l.b16 %v5703
        %v5823 = vunpack.c.h.b16 %v5697
        %v5824 = vunpack.c.h.b16 %v5698
        %v5825 = vunpack.c.h.b16 %v5699
        %v5826 = vunpack.c.h.b16 %v5700
        %v5827 = vunpack.c.h.b16 %v5701
        %v5828 = vunpack.c.h.b16 %v5702
        %v5829 = vunpack.c.h.b16 %v5703
        %v5830 = vpack.c.b16 %v5747, %v5746
        %v5831 = vpack.c.b16 %v5749, %v5748
        %v5832 = vpack.c.b16 %v5751, %v5750
        %v5833 = vpack.c.b16 %v5752, %v5752
        %v5834 = vpack.c.b16 %v5754, %v5753
        %v5835 = vpack.c.b16 %v5756, %v5755
        %v5836 = vpack.c.b16 %v5758, %v5757
        %v5837 = vpack.c.b16 %v5759, %v5759
        %v5838 = vpack.c.b16 %v5761, %v5760
        %v5839 = vpack.c.b16 %v5763, %v5762
        %v5840 = vpack.c.b16 %v5765, %v5764
        %v5841 = vpack.c.b16 %v5766, %v5766
        %v5842 = vpack.c.b16 %v5768, %v5767
        %v5843 = vpack.c.b16 %v5770, %v5769
        %v5844 = vpack.c.b16 %v5772, %v5771
        %v5845 = vpack.c.b16 %v5773, %v5773
        %v5846 = vpack.c.b16 %v5775, %v5774
        %v5847 = vpack.c.b16 %v5777, %v5776
        %v5848 = vpack.c.b16 %v5779, %v5778
        %v5849 = vpack.c.b16 %v5780, %v5780
        %v5850 = vpack.c.b16 %v5782, %v5781
        %v5851 = vpack.c.b16 %v5784, %v5783
        %v5852 = vpack.c.b16 %v5786, %v5785
        %v5853 = vpack.c.b16 %v5787, %v5787
        %v5854 = vpack.c.b16 %v5789, %v5788
        %v5855 = vpack.c.b16 %v5791, %v5790
        %v5856 = vpack.c.b16 %v5793, %v5792
        %v5857 = vpack.c.b16 %v5794, %v5794
        %v5858 = vpack.c.b16 %v5796, %v5795
        %v5859 = vpack.c.b16 %v5798, %v5797
        %v5860 = vpack.c.b16 %v5800, %v5799
        %v5861 = vpack.c.b16 %v5801, %v5801
        %v5862 = vpack.c.b16 %v5803, %v5802
        %v5863 = vpack.c.b16 %v5805, %v5804
        %v5864 = vpack.c.b16 %v5807, %v5806
        %v5865 = vpack.c.b16 %v5808, %v5808
        %v5866 = vpack.c.b16 %v5810, %v5809
        %v5867 = vpack.c.b16 %v5812, %v5811
        %v5868 = vpack.c.b16 %v5814, %v5813
        %v5869 = vpack.c.b16 %v5815, %v5815
        %v5870 = vpack.c.b16 %v5817, %v5816
        %v5871 = vpack.c.b16 %v5819, %v5818
        %v5872 = vpack.c.b16 %v5821, %v5820
        %v5873 = vpack.c.b16 %v5822, %v5822
        %v5874 = vpack.c.b16 %v5824, %v5823
        %v5875 = vpack.c.b16 %v5826, %v5825
        %v5876 = vpack.c.b16 %v5828, %v5827
        %v5877 = vpack.c.b16 %v5829, %v5829
        %5926 = vst [vmem:[%s318] sm:$0xff] %v5830
        %5927 = vst [vmem:[%s318 + $0x8] sm:$0xff] %v5831
        %5928 = vst [vmem:[%s318 + $0x10] sm:$0xff] %v5832
        %5929 = vst [vmem:[%s318 + $0x18] sm:$0xf] %v5833
        %5930 = vst [vmem:[%s318 + $0x1c] sm:$0xff] %v5834
        %5931 = vst [vmem:[%s318 + $0x24] sm:$0xff] %v5835
        %5932 = vst [vmem:[%s318 + $0x2c] sm:$0xff] %v5836
        %5933 = vst [vmem:[%s318 + $0x34] sm:$0xf] %v5837
        %5934 = vst [vmem:[%s318 + $0x38] sm:$0xff] %v5838
        %5935 = vst [vmem:[%s318 + $0x40] sm:$0xff] %v5839
        %5936 = vst [vmem:[%s318 + $0x48] sm:$0xff] %v5840
        %5937 = vst [vmem:[%s318 + $0x50] sm:$0xf] %v5841
        %5938 = vst [vmem:[%s318 + $0x54] sm:$0xff] %v5842
        %5939 = vst [vmem:[%s318 + $0x5c] sm:$0xff] %v5843
        %5940 = vst [vmem:[%s318 + $0x64] sm:$0xff] %v5844
        %5941 = vst [vmem:[%s318 + $0x6c] sm:$0xf] %v5845
        %5942 = vst [vmem:[%s318 + $0x70] sm:$0xff] %v5846
        %5943 = vst [vmem:[%s318 + $0x78] sm:$0xff] %v5847
        %5944 = vst [vmem:[%s318 + $0x80] sm:$0xff] %v5848
        %5945 = vst [vmem:[%s318 + $0x88] sm:$0xf] %v5849
        %5946 = vst [vmem:[%s318 + $0x8c] sm:$0xff] %v5850
        %5947 = vst [vmem:[%s318 + $0x94] sm:$0xff] %v5851
        %5948 = vst [vmem:[%s318 + $0x9c] sm:$0xff] %v5852
        %5949 = vst [vmem:[%s318 + $0xa4] sm:$0xf] %v5853
        %5950 = vst [vmem:[%s318 + $0xa8] sm:$0xff] %v5854
        %5951 = vst [vmem:[%s318 + $0xb0] sm:$0xff] %v5855
        %5952 = vst [vmem:[%s318 + $0xb8] sm:$0xff] %v5856
        %5953 = vst [vmem:[%s318 + $0xc0] sm:$0xf] %v5857
        %5954 = vst [vmem:[%s318 + $0xc4] sm:$0xff] %v5858
        %5955 = vst [vmem:[%s318 + $0xcc] sm:$0xff] %v5859
        %5956 = vst [vmem:[%s318 + $0xd4] sm:$0xff] %v5860
        %5957 = vst [vmem:[%s318 + $0xdc] sm:$0xf] %v5861
        %5958 = vst [vmem:[%s318 + $0xe0] sm:$0xff] %v5862
        %5959 = vst [vmem:[%s318 + $0xe8] sm:$0xff] %v5863
        %5960 = vst [vmem:[%s318 + $0xf0] sm:$0xff] %v5864
        %5961 = vst [vmem:[%s318 + $0xf8] sm:$0xf] %v5865
        %5962 = vst [vmem:[%s318 + $0xfc] sm:$0xff] %v5866
        %5963 = vst [vmem:[%s318 + $0x104] sm:$0xff] %v5867
        %5964 = vst [vmem:[%s318 + $0x10c] sm:$0xff] %v5868
        %5965 = vst [vmem:[%s318 + $0x114] sm:$0xf] %v5869
        %5966 = vst [vmem:[%s318 + $0x118] sm:$0xff] %v5870
        %5967 = vst [vmem:[%s318 + $0x120] sm:$0xff] %v5871
        %5968 = vst [vmem:[%s318 + $0x128] sm:$0xff] %v5872
        %5969 = vst [vmem:[%s318 + $0x130] sm:$0xf] %v5873
        %5970 = vst [vmem:[%s318 + $0x134] sm:$0xff] %v5874
        %5971 = vst [vmem:[%s318 + $0x13c] sm:$0xff] %v5875
        %5972 = vst [vmem:[%s318 + $0x144] sm:$0xff] %v5876
        %5973 = vst [vmem:[%s318 + $0x14c] sm:$0xf] %v5877
        %vm5974 = vcmask 326656
        %5975 = vst.msk [vmem:[%s344] sm:$0xff] %vm5974, %v2849
        %5976 = vst.msk [vmem:[%s344 + $0x8] sm:$0xff] %vm5974, %v2852
        %5977 = vst.msk [vmem:[%s344 + $0x10] sm:$0xff] %vm5974, %v2857
        %5978 = vst.msk [vmem:[%s344 + $0x18] sm:$0xff] %vm5974, %v2860
        %5979 = vst.msk [vmem:[%s344 + $0x20] sm:$0xff] %vm5974, %v2865
        %5980 = vst.msk [vmem:[%s344 + $0x28] sm:$0xff] %vm5974, %v2868
        %5981 = vst.msk [vmem:[%s344 + $0x30] sm:$0xff] %vm5974, %v2873
        %5982 = vst.msk [vmem:[%s344 + $0x38] sm:$0xff] %vm5974, %v2876
        %5983 = vst.msk [vmem:[%s344 + $0x40] sm:$0xff] %vm5974, %v2881
        %5984 = vst.msk [vmem:[%s344 + $0x48] sm:$0xff] %vm5974, %v2884
        %5985 = vst.msk [vmem:[%s344 + $0x50] sm:$0xff] %vm5974, %v2889
        %5986 = vst.msk [vmem:[%s344 + $0x58] sm:$0xff] %vm5974, %v2892
        %s5987 = sand.u32 %s188, 1
        %s5988 = scalar_lea.sflag [#allocation3], %s5987
        %s5989 = sand.u32 %s188, 1
        %s5990 = smul.addr %s5989, 336
        %s5991 = scalar_lea.vmem [#allocation2], %s5990
        %s5992 = smul.u32 12, %s23
        %p5993 = scmp.lt.s32.totalorder %s5992, 23
        %s5994 = scalar_select %p5993, %s5992, 23
        %s5995 = smul.addr %s5994, 8
        %s5996 = scalar_lea.vmem %s8, %s5995
        // Predicated region
        $region49: #{vae_forward.1} parent=47 // pred_check
          %p5997 = pneg %p198
        $region50: #{vae_forward.1} parent=47 // pred_check_branch
          %5999 = sbr.rel (%p5997) target = $region52
        $region51: #{vae_forward.1} parent=47 // pred_region
          %s6000 = smul.u32 12, %s23
          %s6002 = ssub.s32 5376, 5376
          %6003 = vsyncadd %s5988, %s6002
          %s6004 = smul.addr %s6000, 7
          %s6005 = smul.addr %s6004, 64
          %s6006 = scalar_lea.hbm %s7, %s6005
          %s6007 = sshll.u32 %s5991, 4
          %s6008 = int_to_ptr.vmem [resolvable:$true] %s6007
          %6013 = dma.vmem_to_hbm [thread:$0]  %s6008, 5376, %s6006, %s5988, 448, 448, 28
        $region52: #{vae_forward.1} parent=47 // pred_fallthru
          _
        // Predicated region
        $region53: #{vae_forward.1} parent=47 // pred_check
          %p6014 = pneg %p224
        $region54: #{vae_forward.1} parent=47 // pred_check_branch
          %6016 = sbr.rel (%p6014) target = $region56
        $region55: #{vae_forward.1} parent=47 // pred_region
          %s6017 = smul.u32 12, %s23
        $region56: #{vae_forward.1} parent=47 // pred_fallthru
          _
      $region48: #{vae_forward.1} parent=5 // pred_fallthru
        _
      %p6018 = scmp.le.s32.totalorder 2, %s18
      // Predicated region
      $region57: #{vae_forward.1} parent=5 // pred_check
        %p6019 = pneg %p6018
      $region58: #{vae_forward.1} parent=5 // pred_check_branch
        %6021 = sbr.rel (%p6019) target = $region60
      $region59: #{vae_forward.1} parent=5 // pred_region
        %s6022 = ssub.s32 %s18, 2
        // Predicated region
        $region61: #{vae_forward.1} parent=59 // pred_check
          %p6023 = pneg %p204
        $region62: #{vae_forward.1} parent=59 // pred_check_branch
          %6025 = sbr.rel (%p6023) target = $region64
        $region63: #{vae_forward.1} parent=59 // pred_region
          %s6026 = sand.u32 %s189, 1
          %s6027 = scalar_lea.sflag [#allocation3], %s6026
          %s6028 = sand.u32 %s189, 1
          %s6029 = smul.addr %s6028, 336
          %s6030 = scalar_lea.vmem [#allocation2], %s6029
          %6031 = dma.done %s6027, 5376
        $region64: #{vae_forward.1} parent=59 // pred_fallthru
          _
        // Predicated region
        $region65: #{vae_forward.1} parent=59 // pred_check
          %p6032 = pneg %p230
        $region66: #{vae_forward.1} parent=59 // pred_check_branch
          %6034 = sbr.rel (%p6032) target = $region68
        $region67: #{vae_forward.1} parent=59 // pred_region
          %s6035 = smul.u32 12, %s24
          %p6036 = scmp.lt.s32.totalorder %s6035, 23
          %s6037 = scalar_select %p6036, %s6035, 23
          %s6038 = smul.addr %s6037, 8
          %s6039 = scalar_lea.vmem %s8, %s6038
        $region68: #{vae_forward.1} parent=59 // pred_fallthru
          _
      $region60: #{vae_forward.1} parent=5 // pred_fallthru
        _
    $region6: #{vae_forward.1} parent=1 // loop_footer
      %s22 = sadd.s32 1, %s18
    $region7: #{vae_forward.1} parent=1 // loop_footer_branch
      %17 = sbr.rel target = $region3
    $region8: #{vae_forward.1} parent=1 // loop_exit
      _
    %6040 = vsyncpa [#allocation3], 1
    %s6041 = scalar_lea.sflag [#allocation3], 1
    %6042 = vsyncpa %s6041, 1

</llo_original>
